<compile_context>
chip_gen: v7x
topology: tpu7x:2x2x1
jax: 0.10.0
libtpu: 0.0.40
codegen_flags: <defaults>
</compile_context>

<pallas_src>
import functools

import jax
import jax.numpy as jnp
from jax.experimental import pallas as pl
from jax.experimental.pallas import tpu as pltpu


# ---------------------------------------------------------------------------
# Pallas kernel: one (batch, query-tile) step of a full encoder layer.
# ---------------------------------------------------------------------------
def encoder_layer_kernel(
    x_ref,                       # (S, D)  full sequence of this batch element
    ln1_g_ref, ln1_b_ref,        # (1, D)  norm1 gamma / beta (f32)
    wq_ref, wk_ref, wv_ref,      # (D, D)  bf16 projection weights
    bq_ref, bk_ref, bv_ref,      # (1, D)  f32 projection biases
    wo_ref, bo_ref,              # (D, D) bf16 / (1, D) f32   out_proj
    ln2_g_ref, ln2_b_ref,        # (1, D)  norm2 gamma / beta (f32)
    w1_ref, b1_ref, w2_ref,      # (n_ff, D, C) bf16 / (n_ff, 1, C) f32 / (n_ff, C, D) bf16
    b2_ref,                      # (1, D)  f32
    out_ref,                     # (TS, D)
    xn_s, k_s, v_s,              # VMEM scratch: (S, D) bf16 each
    *, nhead: int, eps: float, kv_tile: int,
):
    f32 = jnp.float32
    bf16 = jnp.bfloat16

    S, D = x_ref.shape
    TS = out_ref.shape[0]
    H = nhead
    dh = D // H
    scale = 1.0 / (dh ** 0.5)
    n_kv = S // kv_tile

    def layer_norm(v, g, b):
        mu = jnp.mean(v, axis=-1, keepdims=True)
        c = v - mu
        var = jnp.mean(c * c, axis=-1, keepdims=True)
        return c * jax.lax.rsqrt(var + eps) * g + b

    s_idx = pl.program_id(1)

    # ---- once per batch element: LayerNorm(x) and the K / V projections ----
    @pl.when(s_idx == 0)
    def _():
        x_all = x_ref[...].astype(f32)
        xn = layer_norm(x_all, ln1_g_ref[...], ln1_b_ref[...])
        xn_b = xn.astype(bf16)
        xn_s[...] = xn_b
        k = jnp.dot(xn_b, wk_ref[...], preferred_element_type=f32) + bk_ref[...]
        v = jnp.dot(xn_b, wv_ref[...], preferred_element_type=f32) + bv_ref[...]
        k_s[...] = k.astype(bf16)
        v_s[...] = v.astype(bf16)

    # ---- query tile ---------------------------------------------------------
    q0 = pl.multiple_of(s_idx * TS, TS)
    xq = x_ref[pl.ds(q0, TS), :].astype(f32)        # raw rows (residual)
    xnq = xn_s[pl.ds(q0, TS), :]                    # bf16, already normalized

    q = jnp.dot(xnq, wq_ref[...], preferred_element_type=f32) + bq_ref[...]
    q = q * scale                                   # fold 1/sqrt(dh) into q
    q3 = q.reshape(TS, H, dh).transpose(1, 0, 2).astype(bf16)     # (H, TS, dh)

    # ---- flash-style attention over KV tiles (online softmax) --------------
    def kv_step(c, carry):
        m, l, acc = carry
        k0 = pl.multiple_of(c * kv_tile, kv_tile)
        kc = k_s[pl.ds(k0, kv_tile), :]             # (TK, D) bf16
        vc = v_s[pl.ds(k0, kv_tile), :]
        k3 = kc.reshape(kv_tile, H, dh).transpose(1, 0, 2)        # (H, TK, dh)
        v3 = vc.reshape(kv_tile, H, dh).transpose(1, 0, 2)
        sc = jnp.einsum("hqd,hkd->hqk", q3, k3,
                        preferred_element_type=f32)               # (H, TS, TK)
        m_new = jnp.maximum(m, jnp.max(sc, axis=-1, keepdims=True))
        alpha = jnp.exp(m - m_new)
        p = jnp.exp(sc - m_new)                                   # unnormalized
        l_new = alpha * l + jnp.sum(p, axis=-1, keepdims=True)
        acc_new = alpha * acc + jnp.einsum(
            "hqk,hkd->hqd", p.astype(bf16), v3, preferred_element_type=f32)
        return m_new, l_new, acc_new

    m0 = jnp.full((H, TS, 1), -jnp.inf, f32)
    l0 = jnp.zeros((H, TS, 1), f32)
    a0 = jnp.zeros((H, TS, dh), f32)
    _, l_f, acc = jax.lax.fori_loop(0, n_kv, kv_step, (m0, l0, a0),
                                    unroll=(n_kv <= 2))

    # Normalize AFTER the PV matmul: divide the (H, TS, dh) accumulator, not
    # the (H, TS, TK) probabilities.
    o = acc * pl.reciprocal(l_f, approx=True)
    attn = o.transpose(1, 0, 2).reshape(TS, D)
    attn = jnp.dot(attn.astype(bf16), wo_ref[...],
                   preferred_element_type=f32) + bo_ref[...]
    x1 = xq + attn                                   # dropout1 == identity (eval)

    # ---- feed-forward block (pre-norm), chunked over the hidden dim --------
    xn2 = layer_norm(x1, ln2_g_ref[...], ln2_b_ref[...]).astype(bf16)
    n_ff = w1_ref.shape[0]

    def ff_step(c, ffacc):
        h = jnp.dot(xn2, w1_ref[c], preferred_element_type=f32) + b1_ref[c]
        h = jnp.maximum(h, 0.0).astype(bf16)         # ReLU; inner dropout == id
        return ffacc + jnp.dot(h, w2_ref[c], preferred_element_type=f32)

    ff = jax.lax.fori_loop(0, n_ff, ff_step, jnp.zeros((TS, D), f32),
                           unroll=(n_ff <= 4))
    ff = ff + b2_ref[...]
    out_ref[...] = (x1 + ff).astype(out_ref.dtype)   # dropout2 == identity (eval)


# ---------------------------------------------------------------------------
# Tiling / budgeting helpers (generation-aware).
# ---------------------------------------------------------------------------
def _vmem_capacity_bytes():
    try:
        return int(pltpu.get_tpu_info().vmem_capacity_bytes)
    except Exception:
        return 64 * 1024 * 1024            # conservative (v7x per-core VMEM)


def _pick_tiles(S, D, H, F, vmem_bytes):
    """Largest (query_tile, kv_tile) whose working set fits ~75% of VMEM."""
    dh = D // H
    cands = [t for t in (512, 256, 128, 64, 32, 16, 8) if S % t == 0] or [S]
    # TODO(synk): for large S not divisible by 8, pad the sequence host-side.
    budget = int(0.75 * vmem_bytes)
    const = ((4 * D * D + 2 * D * F) * 2      # bf16 weights (single-buffered intent)
             + 3 * S * D * 2                  # xn / K / V scratch (bf16)
             + 2 * S * D * 4                  # x input block (double-buffered f32)
             + 2 * (1 << 20))                 # headroom
    for ts in cands:
        for tk in cands:
            live = (const
                    + 3 * H * ts * tk * 4     # scores / probs per KV tile
                    + 3 * H * ts * dh * 4     # running accumulators
                    + 4 * ts * D * 4          # q / x1 / ff / out tiles
                    + 3 * ts * min(F, 512) * 4)
            if live <= budget:
                return ts, tk
    return cands[-1], cands[-1]


def _pick_ff_chunk(F):
    if F <= 512:
        return F
    for c in (512, 256, 128):
        if F % c == 0:
            return c
    return 512      # F will be zero-padded up (exact: padded cols give ReLU(0)=0)


def _const_index_map(ndim):
    if ndim == 2:
        return lambda b, s: (0, 0)
    return lambda b, s: (0, 0, 0)


def _param_specs(param_list, single_buffer):
    specs = []
    for p in param_list:
        idx = _const_index_map(p.ndim)
        if single_buffer:
            # Constant blocks: single buffer (halves resident weight footprint).
            specs.append(pl.BlockSpec(p.shape, idx, pipeline_mode=pl.Buffered(1)))
        else:
            specs.append(pl.BlockSpec(p.shape, idx))
    return specs


# ---------------------------------------------------------------------------
# Wrapper: grid over (batch, query tiles).
# ---------------------------------------------------------------------------
def transformer_encoder_layer_bsd(x_bsd, params, *, nhead, eps=1e-5):
    """Batch-major entry point: x_bsd is (B, S, D)."""
    B, S, D = x_bsd.shape
    F = params["w1"].shape[1]
    bf16, f32 = jnp.bfloat16, jnp.float32

    vmem_cap = _vmem_capacity_bytes()
    TS, TK = _pick_tiles(S, D, nhead, F, vmem_cap)
    ff_chunk = _pick_ff_chunk(F)
    n_ff = int(pl.cdiv(F, ff_chunk))
    F_pad = n_ff * ff_chunk

    # Split the fused in_proj host-side (no non-aligned lane slicing in-kernel).
    wqkv, bqkv = params["wqkv"], params["bqkv"]
    wq, wk, wv = wqkv[:, :D], wqkv[:, D:2 * D], wqkv[:, 2 * D:]
    bq, bk, bv = bqkv[:, :D], bqkv[:, D:2 * D], bqkv[:, 2 * D:]

    # FFN weights: zero-pad F to a multiple of ff_chunk (exact) and expose the
    # chunk index as a leading axis so the kernel indexes w1_ref[c] directly.
    w1 = jnp.pad(params["w1"], ((0, 0), (0, F_pad - F)))
    b1 = jnp.pad(params["b1"], ((0, 0), (0, F_pad - F)))
    w2 = jnp.pad(params["w2"], ((0, F_pad - F), (0, 0)))
    w1r = w1.reshape(D, n_ff, ff_chunk).transpose(1, 0, 2).astype(bf16)  # (n_ff,D,C)
    b1r = b1.reshape(1, n_ff, ff_chunk).transpose(1, 0, 2).astype(f32)   # (n_ff,1,C)
    w2r = w2.reshape(n_ff, ff_chunk, D).astype(bf16)                     # (n_ff,C,D)

    param_list = [
        params["ln1_g"].astype(f32), params["ln1_b"].astype(f32),
        wq.astype(bf16), wk.astype(bf16), wv.astype(bf16),
        bq.astype(f32), bk.astype(f32), bv.astype(f32),
        params["wo"].astype(bf16), params["bo"].astype(f32),
        params["ln2_g"].astype(f32), params["ln2_b"].astype(f32),
        w1r, b1r, w2r, params["b2"].astype(f32),
    ]

    x_spec = pl.BlockSpec((None, S, D), lambda b, s: (b, 0, 0))      # full seq
    out_spec = pl.BlockSpec((None, TS, D), lambda b, s: (b, s, 0))   # query tile
    scratch = [pltpu.VMEM((S, D), bf16)] * 3                         # xn, K, V

    flops = int(2 * B * S * (4 * D * D + 2 * S * D + 2 * D * F))
    transc = int(B * nhead * S * S)
    bytes_acc = int(sum(int(p.size) * p.dtype.itemsize for p in param_list)
                    + 2 * int(x_bsd.size) * x_bsd.dtype.itemsize)

    kern = functools.partial(encoder_layer_kernel, nhead=nhead, eps=eps,
                             kv_tile=TK)

    def run(single_buffer_params):
        in_specs = [x_spec] + _param_specs(param_list, single_buffer_params)
        return pl.pallas_call(
            kern,
            out_shape=jax.ShapeDtypeStruct((B, S, D), x_bsd.dtype),
            grid=(B, S // TS),
            in_specs=in_specs,
            out_specs=out_spec,
            scratch_shapes=scratch,
            compiler_params=pltpu.CompilerParams(
                dimension_semantics=("parallel", "arbitrary"),
                vmem_limit_bytes=int(0.9 * vmem_cap)),
            cost_estimate=pl.CostEstimate(
                flops=flops, transcendentals=transc, bytes_accessed=bytes_acc),
        )(x_bsd, *param_list)

    try:
        return run(True)
    except Exception:
        # pipeline_mode=pl.Buffered(1) unsupported on this jax build -> default.
        return run(False)


def transformer_encoder_layer(src_sbd, params, *, nhead, eps=1e-5):
    """PyTorch batch_first=False interface: src_sbd is (S, B, D)."""
    x_bsd = jnp.transpose(src_sbd, (1, 0, 2))
    out = transformer_encoder_layer_bsd(x_bsd, params, nhead=nhead, eps=eps)
    return jnp.transpose(out, (1, 0, 2))


# ---------------------------------------------------------------------------
# Pure-JAX f32 reference (PyTorch semantics) for correctness checking.
# ---------------------------------------------------------------------------
def reference_forward(src_sbd, p, *, nhead, eps=1e-5):
    xb = jnp.transpose(src_sbd, (1, 0, 2)).astype(jnp.float32)
    B, S, D = xb.shape
    dh = D // nhead

    def ln(v, g, b):
        mu = v.mean(-1, keepdims=True)
        var = ((v - mu) ** 2).mean(-1, keepdims=True)
        return (v - mu) / jnp.sqrt(var + eps) * g + b

    xn = ln(xb, p["ln1_g"], p["ln1_b"])
    qkv = xn @ p["wqkv"] + p["bqkv"]
    q, k, v = qkv[..., :D], qkv[..., D:2 * D], qkv[..., 2 * D:]
    qh = q.reshape(B, S, nhead, dh)
    kh = k.reshape(B, S, nhead, dh)
    vh = v.reshape(B, S, nhead, dh)
    s = jnp.einsum("bqhd,bkhd->bhqk", qh, kh) / jnp.sqrt(dh)
    a = jax.nn.softmax(s, axis=-1)
    o = jnp.einsum("bhqk,bkhd->bqhd", a, vh).reshape(B, S, D)
    o = o @ p["wo"] + p["bo"]
    x1 = xb + o
    xn2 = ln(x1, p["ln2_g"], p["ln2_b"])
    ff = jnp.maximum(xn2 @ p["w1"] + p["b1"], 0.0) @ p["w2"] + p["b2"]
    out = x1 + ff
    return jnp.transpose(out, (1, 0, 2))


# ---------------------------------------------------------------------------
def init_params(key, d_model, nhead, dim_feedforward):
    ks = jax.random.split(key, 8)
    s = 0.02
    return {
        "ln1_g": jnp.ones((1, d_model), jnp.float32),
        "ln1_b": jnp.zeros((1, d_model), jnp.float32),
        # in_proj: PyTorch stores (3D, D); we pass the transpose (D, 3D).
        "wqkv": (s * jax.random.normal(ks[0], (d_model, 3 * d_model))).astype(jnp.float32),
        "bqkv": (s * jax.random.normal(ks[1], (1, 3 * d_model))).astype(jnp.float32),
        "wo": (s * jax.random.normal(ks[2], (d_model, d_model))).astype(jnp.float32),
        "bo": (s * jax.random.normal(ks[3], (1, d_model))).astype(jnp.float32),
        "ln2_g": jnp.ones((1, d_model), jnp.float32),
        "ln2_b": jnp.zeros((1, d_model), jnp.float32),
        # linear1: PyTorch (F, D) -> pass (D, F); linear2: (D, F) -> pass (F, D).
        "w1": (s * jax.random.normal(ks[4], (d_model, dim_feedforward))).astype(jnp.float32),
        "b1": (s * jax.random.normal(ks[5], (1, dim_feedforward))).astype(jnp.float32),
        "w2": (s * jax.random.normal(ks[6], (dim_feedforward, d_model))).astype(jnp.float32),
        "b2": (s * jax.random.normal(ks[7], (1, d_model))).astype(jnp.float32),
    }


if __name__ == "__main__":
    # Small shapes consistent with the module: seq=8, batch=2, d_model=32,
    # nhead=4, dim_feedforward=64.
    S, B, D, H, FF = 8, 2, 32, 4, 64
    key = jax.random.PRNGKey(0)
    k_x, k_p = jax.random.split(key)

    src = jax.random.normal(k_x, (S, B, D), dtype=jnp.float32)   # (seq, batch, d_model)
    params = init_params(k_p, D, H, FF)

    out = transformer_encoder_layer(src, params, nhead=H, eps=1e-5)
    out = jax.block_until_ready(out)

    ref = reference_forward(src, params, nhead=H, eps=1e-5)
    assert out.shape == (S, B, D)
    # Kernel runs matmuls with bf16 operands (f32 accumulation) and an approx
    # reciprocal in softmax; compare to the f32 reference at bf16 tolerance.
    err = jnp.max(jnp.abs(out - ref))
    assert jnp.allclose(out, ref, atol=2e-2, rtol=2e-2), f"max abs err = {err}"

    # TODO(synk): dropout layers treated as identity (inference mode); no
    # attn_mask / key_padding_mask / rotary path (all None in this config).
    print("KERNEL_OK")
</pallas_src>

<mosaic_0001>
module attributes {stable_mosaic.version = 11 : i64} {
  func.func @encoder_layer_kernel(%arg0: i32, %arg1: i32, %arg2: memref<1x8x32xf32, #tpu.memory_space<vmem>>, %arg3: memref<1x32xf32, #tpu.memory_space<vmem>>, %arg4: memref<1x32xf32, #tpu.memory_space<vmem>>, %arg5: memref<32x32xbf16, #tpu.memory_space<vmem>>, %arg6: memref<32x32xbf16, #tpu.memory_space<vmem>>, %arg7: memref<32x32xbf16, #tpu.memory_space<vmem>>, %arg8: memref<1x32xf32, #tpu.memory_space<vmem>>, %arg9: memref<1x32xf32, #tpu.memory_space<vmem>>, %arg10: memref<1x32xf32, #tpu.memory_space<vmem>>, %arg11: memref<32x32xbf16, #tpu.memory_space<vmem>>, %arg12: memref<1x32xf32, #tpu.memory_space<vmem>>, %arg13: memref<1x32xf32, #tpu.memory_space<vmem>>, %arg14: memref<1x32xf32, #tpu.memory_space<vmem>>, %arg15: memref<1x32x64xbf16, #tpu.memory_space<vmem>>, %arg16: memref<1x1x64xf32, #tpu.memory_space<vmem>>, %arg17: memref<1x64x32xbf16, #tpu.memory_space<vmem>>, %arg18: memref<1x32xf32, #tpu.memory_space<vmem>>, %arg19: memref<1x8x32xf32, #tpu.memory_space<vmem>>, %arg20: memref<8x32xbf16, #tpu.memory_space<vmem>>, %arg21: memref<8x32xbf16, #tpu.memory_space<vmem>>, %arg22: memref<8x32xbf16, #tpu.memory_space<vmem>>) attributes {dimension_semantics = [#tpu.dimension_semantics<parallel>, #tpu.dimension_semantics<arbitrary>], iteration_bounds = array<i64: 2, 1>, scalar_prefetch = 0 : i64, scratch_operands = 3 : i64, tpu.core_type = #tpu.core_type<tc>, window_params = [{transform_indices = @transform_0, window_bounds = array<i64: 1, 8, 32>}, {pipeline_mode = #tpu.pipeline_mode<synchronous>, transform_indices = @transform_1, window_bounds = array<i64: 1, 32>}, {pipeline_mode = #tpu.pipeline_mode<synchronous>, transform_indices = @transform_2, window_bounds = array<i64: 1, 32>}, {pipeline_mode = #tpu.pipeline_mode<synchronous>, transform_indices = @transform_3, window_bounds = array<i64: 32, 32>}, {pipeline_mode = #tpu.pipeline_mode<synchronous>, transform_indices = @transform_4, window_bounds = array<i64: 32, 32>}, {pipeline_mode = #tpu.pipeline_mode<synchronous>, transform_indices = @transform_5, window_bounds = array<i64: 32, 32>}, {pipeline_mode = #tpu.pipeline_mode<synchronous>, transform_indices = @transform_6, window_bounds = array<i64: 1, 32>}, {pipeline_mode = #tpu.pipeline_mode<synchronous>, transform_indices = @transform_7, window_bounds = array<i64: 1, 32>}, {pipeline_mode = #tpu.pipeline_mode<synchronous>, transform_indices = @transform_8, window_bounds = array<i64: 1, 32>}, {pipeline_mode = #tpu.pipeline_mode<synchronous>, transform_indices = @transform_9, window_bounds = array<i64: 32, 32>}, {pipeline_mode = #tpu.pipeline_mode<synchronous>, transform_indices = @transform_10, window_bounds = array<i64: 1, 32>}, {pipeline_mode = #tpu.pipeline_mode<synchronous>, transform_indices = @transform_11, window_bounds = array<i64: 1, 32>}, {pipeline_mode = #tpu.pipeline_mode<synchronous>, transform_indices = @transform_12, window_bounds = array<i64: 1, 32>}, {pipeline_mode = #tpu.pipeline_mode<synchronous>, transform_indices = @transform_13, window_bounds = array<i64: 1, 32, 64>}, {pipeline_mode = #tpu.pipeline_mode<synchronous>, transform_indices = @transform_14, window_bounds = array<i64: 1, 1, 64>}, {pipeline_mode = #tpu.pipeline_mode<synchronous>, transform_indices = @transform_15, window_bounds = array<i64: 1, 64, 32>}, {pipeline_mode = #tpu.pipeline_mode<synchronous>, transform_indices = @transform_16, window_bounds = array<i64: 1, 32>}, {transform_indices = @transform_17, window_bounds = array<i64: 1, 8, 32>}]} {
    %c0_i32 = arith.constant 0 : i32
    %0 = arith.cmpi eq, %arg1, %c0_i32 : i32
    %1 = arith.extui %0 : i1 to i32
    %c0_i32_0 = arith.constant 0 : i32
    %2 = arith.cmpi ne, %1, %c0_i32_0 : i32
    scf.if %2 {
      %c0_50 = arith.constant 0 : index
      %c0_51 = arith.constant 0 : index
      %c0_52 = arith.constant 0 : index
      %111 = vector.load %arg2[%c0_50, %c0_51, %c0_52] : memref<1x8x32xf32, #tpu.memory_space<vmem>>, vector<1x8x32xf32>
      %112 = vector.shape_cast %111 : vector<1x8x32xf32> to vector<8x32xf32>
      %c0_53 = arith.constant 0 : index
      %c0_54 = arith.constant 0 : index
      %113 = vector.load %arg3[%c0_53, %c0_54] : memref<1x32xf32, #tpu.memory_space<vmem>>, vector<1x32xf32>
      %c0_55 = arith.constant 0 : index
      %c0_56 = arith.constant 0 : index
      %114 = vector.load %arg4[%c0_55, %c0_56] : memref<1x32xf32, #tpu.memory_space<vmem>>, vector<1x32xf32>
      %cst_57 = arith.constant dense<0.000000e+00> : vector<8xf32>
      %115 = vector.multi_reduction <add>, %112, %cst_57 [1] : vector<8x32xf32> to vector<8xf32>
      %116 = vector.shape_cast %115 : vector<8xf32> to vector<8x1xf32>
      %cst_58 = arith.constant 3.200000e+01 : f32
      %117 = vector.broadcast %cst_58 : f32 to vector<8x1xf32>
      %118 = arith.divf %116, %117 : vector<8x1xf32>
      %119 = vector.broadcast %118 : vector<8x1xf32> to vector<8x32xf32>
      %120 = arith.subf %112, %119 : vector<8x32xf32>
      %121 = arith.mulf %120, %120 : vector<8x32xf32>
      %cst_59 = arith.constant dense<0.000000e+00> : vector<8xf32>
      %122 = vector.multi_reduction <add>, %121, %cst_59 [1] : vector<8x32xf32> to vector<8xf32>
      %123 = vector.shape_cast %122 : vector<8xf32> to vector<8x1xf32>
      %cst_60 = arith.constant 3.200000e+01 : f32
      %124 = vector.broadcast %cst_60 : f32 to vector<8x1xf32>
      %125 = arith.divf %123, %124 : vector<8x1xf32>
      %cst_61 = arith.constant 9.99999974E-6 : f32
      %126 = vector.broadcast %cst_61 : f32 to vector<8x1xf32>
      %127 = arith.addf %125, %126 : vector<8x1xf32>
      %128 = math.rsqrt %127 : vector<8x1xf32>
      %129 = vector.broadcast %128 : vector<8x1xf32> to vector<8x32xf32>
      %130 = arith.mulf %120, %129 : vector<8x32xf32>
      %131 = vector.broadcast %113 : vector<1x32xf32> to vector<8x32xf32>
      %132 = arith.mulf %130, %131 : vector<8x32xf32>
      %133 = vector.broadcast %114 : vector<1x32xf32> to vector<8x32xf32>
      %134 = arith.addf %132, %133 : vector<8x32xf32>
      %135 = arith.truncf %134 : vector<8x32xf32> to vector<8x32xbf16>
      %c0_62 = arith.constant 0 : index
      %c0_63 = arith.constant 0 : index
      %136 = vector.load %arg20[%c0_62, %c0_63] : memref<8x32xbf16, #tpu.memory_space<vmem>>, vector<8x32xbf16>
      tpu.vector_store %arg20[%c0_62, %c0_63], %135 {strides = array<i32>} : memref<8x32xbf16, #tpu.memory_space<vmem>>, vector<8x32xbf16>,
      %c0_64 = arith.constant 0 : index
      %c0_65 = arith.constant 0 : index
      %137 = vector.load %arg6[%c0_64, %c0_65] : memref<32x32xbf16, #tpu.memory_space<vmem>>, vector<32x32xbf16>
      %cst_66 = arith.constant dense<0.000000e+00> : vector<8x32xf32>
      %138 = tpu.matmul %135, %137, %cst_66 {dimension_numbers = #tpu.dot_dimension_numbers<[1], [0], [0], [1], [0, 0, 1, 1], [], []>} : vector<8x32xbf16>, vector<32x32xbf16>, vector<8x32xf32> -> vector<8x32xf32>
      %c0_67 = arith.constant 0 : index
      %c0_68 = arith.constant 0 : index
      %139 = vector.load %arg9[%c0_67, %c0_68] : memref<1x32xf32, #tpu.memory_space<vmem>>, vector<1x32xf32>
      %140 = vector.broadcast %139 : vector<1x32xf32> to vector<8x32xf32>
      %141 = arith.addf %138, %140 : vector<8x32xf32>
      %c0_69 = arith.constant 0 : index
      %c0_70 = arith.constant 0 : index
      %142 = vector.load %arg7[%c0_69, %c0_70] : memref<32x32xbf16, #tpu.memory_space<vmem>>, vector<32x32xbf16>
      %cst_71 = arith.constant dense<0.000000e+00> : vector<8x32xf32>
      %143 = tpu.matmul %135, %142, %cst_71 {dimension_numbers = #tpu.dot_dimension_numbers<[1], [0], [0], [1], [0, 0, 1, 1], [], []>} : vector<8x32xbf16>, vector<32x32xbf16>, vector<8x32xf32> -> vector<8x32xf32>
      %c0_72 = arith.constant 0 : index
      %c0_73 = arith.constant 0 : index
      %144 = vector.load %arg10[%c0_72, %c0_73] : memref<1x32xf32, #tpu.memory_space<vmem>>, vector<1x32xf32>
      %145 = vector.broadcast %144 : vector<1x32xf32> to vector<8x32xf32>
      %146 = arith.addf %143, %145 : vector<8x32xf32>
      %147 = arith.truncf %141 : vector<8x32xf32> to vector<8x32xbf16>
      %c0_74 = arith.constant 0 : index
      %c0_75 = arith.constant 0 : index
      %148 = vector.load %arg21[%c0_74, %c0_75] : memref<8x32xbf16, #tpu.memory_space<vmem>>, vector<8x32xbf16>
      tpu.vector_store %arg21[%c0_74, %c0_75], %147 {strides = array<i32>} : memref<8x32xbf16, #tpu.memory_space<vmem>>, vector<8x32xbf16>,
      %149 = arith.truncf %146 : vector<8x32xf32> to vector<8x32xbf16>
      %c0_76 = arith.constant 0 : index
      %c0_77 = arith.constant 0 : index
      %150 = vector.load %arg22[%c0_76, %c0_77] : memref<8x32xbf16, #tpu.memory_space<vmem>>, vector<8x32xbf16>
      tpu.vector_store %arg22[%c0_76, %c0_77], %149 {strides = array<i32>} : memref<8x32xbf16, #tpu.memory_space<vmem>>, vector<8x32xbf16>,
    } else {
    }
    %c8_i32 = arith.constant 8 : i32
    %3 = arith.muli %arg1, %c8_i32 : i32
    %4 = tpu.assume_multiple %3, 8 : i32
    %c0 = arith.constant 0 : index
    %5 = arith.index_cast %4 : i32 to index
    %c0_1 = arith.constant 0 : index
    %6 = vector.load %arg2[%c0, %5, %c0_1] : memref<1x8x32xf32, #tpu.memory_space<vmem>>, vector<1x8x32xf32>
    %7 = vector.shape_cast %6 : vector<1x8x32xf32> to vector<8x32xf32>
    %8 = arith.index_cast %4 : i32 to index
    %c0_2 = arith.constant 0 : index
    %9 = vector.load %arg20[%8, %c0_2] : memref<8x32xbf16, #tpu.memory_space<vmem>>, vector<8x32xbf16>
    %c0_3 = arith.constant 0 : index
    %c0_4 = arith.constant 0 : index
    %10 = vector.load %arg5[%c0_3, %c0_4] : memref<32x32xbf16, #tpu.memory_space<vmem>>, vector<32x32xbf16>
    %cst = arith.constant dense<0.000000e+00> : vector<8x32xf32>
    %11 = tpu.matmul %9, %10, %cst {dimension_numbers = #tpu.dot_dimension_numbers<[1], [0], [0], [1], [0, 0, 1, 1], [], []>} : vector<8x32xbf16>, vector<32x32xbf16>, vector<8x32xf32> -> vector<8x32xf32>
    %c0_5 = arith.constant 0 : index
    %c0_6 = arith.constant 0 : index
    %12 = vector.load %arg8[%c0_5, %c0_6] : memref<1x32xf32, #tpu.memory_space<vmem>>, vector<1x32xf32>
    %13 = vector.broadcast %12 : vector<1x32xf32> to vector<8x32xf32>
    %14 = arith.addf %11, %13 : vector<8x32xf32>
    %cst_7 = arith.constant 0.353553385 : f32
    %15 = vector.broadcast %cst_7 : f32 to vector<8x32xf32>
    %16 = arith.mulf %14, %15 : vector<8x32xf32>
    %17 = vector.shape_cast %16 : vector<8x32xf32> to vector<8x4x8xf32>
    %18 = tpu.transpose %17, [1, 0, 2] : vector<8x4x8xf32> -> vector<4x8x8xf32>
    %19 = arith.truncf %18 : vector<4x8x8xf32> to vector<4x8x8xbf16>
    %cst_8 = arith.constant 0xFF800000 : f32
    %20 = vector.broadcast %cst_8 : f32 to vector<4x8x1xf32>
    %cst_9 = arith.constant 0.000000e+00 : f32
    %21 = vector.broadcast %cst_9 : f32 to vector<4x8x1xf32>
    %cst_10 = arith.constant 0.000000e+00 : f32
    %22 = vector.broadcast %cst_10 : f32 to vector<4x8x8xf32>
    %c0_i32_11 = arith.constant 0 : i32
    %c8_i32_12 = arith.constant 8 : i32
    %23 = arith.muli %c0_i32_11, %c8_i32_12 : i32
    %24 = tpu.assume_multiple %23, 8 : i32
    %25 = arith.index_cast %24 : i32 to index
    %c0_13 = arith.constant 0 : index
    %26 = vector.load %arg21[%25, %c0_13] : memref<8x32xbf16, #tpu.memory_space<vmem>>, vector<8x32xbf16>
    %27 = arith.index_cast %24 : i32 to index
    %c0_14 = arith.constant 0 : index
    %28 = vector.load %arg22[%27, %c0_14] : memref<8x32xbf16, #tpu.memory_space<vmem>>, vector<8x32xbf16>
    %29 = vector.shape_cast %26 : vector<8x32xbf16> to vector<8x4x8xbf16>
    %30 = tpu.transpose %29, [1, 0, 2] : vector<8x4x8xbf16> -> vector<4x8x8xbf16>
    %31 = vector.shape_cast %28 : vector<8x32xbf16> to vector<8x4x8xbf16>
    %32 = tpu.transpose %31, [1, 0, 2] : vector<8x4x8xbf16> -> vector<4x8x8xbf16>
    "tpu.trace_start"() <{level = 10 : i32, message = "hqd,hkd->hqk"}> : () -> ()
    %cst_15 = arith.constant dense<0.000000e+00> : vector<4x8x8xf32>
    %33 = tpu.matmul %19, %30, %cst_15 {dimension_numbers = #tpu.dot_dimension_numbers<[2], [2], [1], [1], [0, 0, 0, 1, 1, 1], [0], [0]>} : vector<4x8x8xbf16>, vector<4x8x8xbf16>, vector<4x8x8xf32> -> vector<4x8x8xf32>
    "tpu.trace_stop"() : () -> ()
    %cst_16 = arith.constant dense<0xFF800000> : vector<4x8xf32>
    %34 = vector.multi_reduction <maximumf>, %33, %cst_16 [2] : vector<4x8x8xf32> to vector<4x8xf32>
    %35 = vector.shape_cast %34 : vector<4x8xf32> to vector<4x8x1xf32>
    %36 = arith.maximumf %20, %35 : vector<4x8x1xf32>
    %37 = arith.subf %20, %36 : vector<4x8x1xf32>
    %38 = math.exp %37 : vector<4x8x1xf32>
    %39 = vector.broadcast %36 : vector<4x8x1xf32> to vector<4x8x8xf32>
    %40 = arith.subf %33, %39 : vector<4x8x8xf32>
    %41 = math.exp %40 : vector<4x8x8xf32>
    %42 = arith.mulf %38, %21 : vector<4x8x1xf32>
    %cst_17 = arith.constant dense<0.000000e+00> : vector<4x8xf32>
    %43 = vector.multi_reduction <add>, %41, %cst_17 [2] : vector<4x8x8xf32> to vector<4x8xf32>
    %44 = vector.shape_cast %43 : vector<4x8xf32> to vector<4x8x1xf32>
    %45 = arith.addf %42, %44 : vector<4x8x1xf32>
    %46 = vector.broadcast %38 : vector<4x8x1xf32> to vector<4x8x8xf32>
    %47 = arith.mulf %46, %22 : vector<4x8x8xf32>
    %48 = arith.truncf %41 : vector<4x8x8xf32> to vector<4x8x8xbf16>
    "tpu.trace_start"() <{level = 10 : i32, message = "hqk,hkd->hqd"}> : () -> ()
    %cst_18 = arith.constant dense<0.000000e+00> : vector<4x8x8xf32>
    %49 = tpu.matmul %48, %32, %cst_18 {dimension_numbers = #tpu.dot_dimension_numbers<[2], [1], [1], [2], [0, 0, 0, 1, 1, 2], [0], [0]>} : vector<4x8x8xbf16>, vector<4x8x8xbf16>, vector<4x8x8xf32> -> vector<4x8x8xf32>
    "tpu.trace_stop"() : () -> ()
    %50 = arith.addf %47, %49 : vector<4x8x8xf32>
    %c1_i32 = arith.constant 1 : i32
    %51 = tpu.reciprocal %45 {approx = true} : vector<4x8x1xf32> -> vector<4x8x1xf32>
    %52 = vector.broadcast %51 : vector<4x8x1xf32> to vector<4x8x8xf32>
    %53 = arith.mulf %50, %52 : vector<4x8x8xf32>
    %54 = tpu.transpose %53, [1, 0, 2] : vector<4x8x8xf32> -> vector<8x4x8xf32>
    %55 = vector.shape_cast %54 : vector<8x4x8xf32> to vector<8x32xf32>
    %56 = arith.truncf %55 : vector<8x32xf32> to vector<8x32xbf16>
    %c0_19 = arith.constant 0 : index
    %c0_20 = arith.constant 0 : index
    %57 = vector.load %arg11[%c0_19, %c0_20] : memref<32x32xbf16, #tpu.memory_space<vmem>>, vector<32x32xbf16>
    %cst_21 = arith.constant dense<0.000000e+00> : vector<8x32xf32>
    %58 = tpu.matmul %56, %57, %cst_21 {dimension_numbers = #tpu.dot_dimension_numbers<[1], [0], [0], [1], [0, 0, 1, 1], [], []>} : vector<8x32xbf16>, vector<32x32xbf16>, vector<8x32xf32> -> vector<8x32xf32>
    %c0_22 = arith.constant 0 : index
    %c0_23 = arith.constant 0 : index
    %59 = vector.load %arg12[%c0_22, %c0_23] : memref<1x32xf32, #tpu.memory_space<vmem>>, vector<1x32xf32>
    %60 = vector.broadcast %59 : vector<1x32xf32> to vector<8x32xf32>
    %61 = arith.addf %58, %60 : vector<8x32xf32>
    %62 = arith.addf %7, %61 : vector<8x32xf32>
    %c0_24 = arith.constant 0 : index
    %c0_25 = arith.constant 0 : index
    %63 = vector.load %arg13[%c0_24, %c0_25] : memref<1x32xf32, #tpu.memory_space<vmem>>, vector<1x32xf32>
    %c0_26 = arith.constant 0 : index
    %c0_27 = arith.constant 0 : index
    %64 = vector.load %arg14[%c0_26, %c0_27] : memref<1x32xf32, #tpu.memory_space<vmem>>, vector<1x32xf32>
    %cst_28 = arith.constant dense<0.000000e+00> : vector<8xf32>
    %65 = vector.multi_reduction <add>, %62, %cst_28 [1] : vector<8x32xf32> to vector<8xf32>
    %66 = vector.shape_cast %65 : vector<8xf32> to vector<8x1xf32>
    %cst_29 = arith.constant 3.200000e+01 : f32
    %67 = vector.broadcast %cst_29 : f32 to vector<8x1xf32>
    %68 = arith.divf %66, %67 : vector<8x1xf32>
    %69 = vector.broadcast %68 : vector<8x1xf32> to vector<8x32xf32>
    %70 = arith.subf %62, %69 : vector<8x32xf32>
    %71 = arith.mulf %70, %70 : vector<8x32xf32>
    %cst_30 = arith.constant dense<0.000000e+00> : vector<8xf32>
    %72 = vector.multi_reduction <add>, %71, %cst_30 [1] : vector<8x32xf32> to vector<8xf32>
    %73 = vector.shape_cast %72 : vector<8xf32> to vector<8x1xf32>
    %cst_31 = arith.constant 3.200000e+01 : f32
    %74 = vector.broadcast %cst_31 : f32 to vector<8x1xf32>
    %75 = arith.divf %73, %74 : vector<8x1xf32>
    %cst_32 = arith.constant 9.99999974E-6 : f32
    %76 = vector.broadcast %cst_32 : f32 to vector<8x1xf32>
    %77 = arith.addf %75, %76 : vector<8x1xf32>
    %78 = math.rsqrt %77 : vector<8x1xf32>
    %79 = vector.broadcast %78 : vector<8x1xf32> to vector<8x32xf32>
    %80 = arith.mulf %70, %79 : vector<8x32xf32>
    %81 = vector.broadcast %63 : vector<1x32xf32> to vector<8x32xf32>
    %82 = arith.mulf %80, %81 : vector<8x32xf32>
    %83 = vector.broadcast %64 : vector<1x32xf32> to vector<8x32xf32>
    %84 = arith.addf %82, %83 : vector<8x32xf32>
    %85 = arith.truncf %84 : vector<8x32xf32> to vector<8x32xbf16>
    %cst_33 = arith.constant 0.000000e+00 : f32
    %86 = vector.broadcast %cst_33 : f32 to vector<8x32xf32>
    %c0_i32_34 = arith.constant 0 : i32
    %87 = arith.index_cast %c0_i32_34 : i32 to index
    %c0_35 = arith.constant 0 : index
    %c0_36 = arith.constant 0 : index
    %88 = vector.load %arg15[%87, %c0_35, %c0_36] : memref<1x32x64xbf16, #tpu.memory_space<vmem>>, vector<1x32x64xbf16>
    %89 = vector.shape_cast %88 : vector<1x32x64xbf16> to vector<32x64xbf16>
    %cst_37 = arith.constant dense<0.000000e+00> : vector<8x64xf32>
    %90 = tpu.matmul %85, %89, %cst_37 {dimension_numbers = #tpu.dot_dimension_numbers<[1], [0], [0], [1], [0, 0, 1, 1], [], []>} : vector<8x32xbf16>, vector<32x64xbf16>, vector<8x64xf32> -> vector<8x64xf32>
    %91 = arith.index_cast %c0_i32_34 : i32 to index
    %c0_38 = arith.constant 0 : index
    %c0_39 = arith.constant 0 : index
    %92 = vector.load %arg16[%91, %c0_38, %c0_39] : memref<1x1x64xf32, #tpu.memory_space<vmem>>, vector<1x1x64xf32>
    %93 = vector.shape_cast %92 : vector<1x1x64xf32> to vector<1x64xf32>
    %94 = vector.broadcast %93 : vector<1x64xf32> to vector<8x64xf32>
    %95 = arith.addf %90, %94 : vector<8x64xf32>
    %cst_40 = arith.constant 0.000000e+00 : f32
    %96 = vector.broadcast %cst_40 : f32 to vector<8x64xf32>
    %97 = arith.maximumf %95, %96 : vector<8x64xf32>
    %98 = arith.truncf %97 : vector<8x64xf32> to vector<8x64xbf16>
    %99 = arith.index_cast %c0_i32_34 : i32 to index
    %c0_41 = arith.constant 0 : index
    %c0_42 = arith.constant 0 : index
    %100 = vector.load %arg17[%99, %c0_41, %c0_42] : memref<1x64x32xbf16, #tpu.memory_space<vmem>>, vector<1x64x32xbf16>
    %101 = vector.shape_cast %100 : vector<1x64x32xbf16> to vector<64x32xbf16>
    %cst_43 = arith.constant dense<0.000000e+00> : vector<8x32xf32>
    %102 = tpu.matmul %98, %101, %cst_43 {dimension_numbers = #tpu.dot_dimension_numbers<[1], [0], [0], [1], [0, 0, 1, 1], [], []>} : vector<8x64xbf16>, vector<64x32xbf16>, vector<8x32xf32> -> vector<8x32xf32>
    %103 = arith.addf %86, %102 : vector<8x32xf32>
    %c1_i32_44 = arith.constant 1 : i32
    %c0_45 = arith.constant 0 : index
    %c0_46 = arith.constant 0 : index
    %104 = vector.load %arg18[%c0_45, %c0_46] : memref<1x32xf32, #tpu.memory_space<vmem>>, vector<1x32xf32>
    %105 = vector.broadcast %104 : vector<1x32xf32> to vector<8x32xf32>
    %106 = arith.addf %103, %105 : vector<8x32xf32>
    %107 = arith.addf %62, %106 : vector<8x32xf32>
    %c0_47 = arith.constant 0 : index
    %c0_48 = arith.constant 0 : index
    %c0_49 = arith.constant 0 : index
    %108 = vector.load %arg19[%c0_47, %c0_48, %c0_49] : memref<1x8x32xf32, #tpu.memory_space<vmem>>, vector<1x8x32xf32>
    %109 = vector.shape_cast %108 : vector<1x8x32xf32> to vector<8x32xf32>
    %110 = vector.shape_cast %107 : vector<8x32xf32> to vector<1x8x32xf32>
    tpu.vector_store %arg19[%c0_47, %c0_48, %c0_49], %110 {strides = array<i32>} : memref<1x8x32xf32, #tpu.memory_space<vmem>>, vector<1x8x32xf32>,
    return
  }
  func.func @transform_0(%arg0: i32, %arg1: i32) -> (i32, i32, i32) {
    %c0_i32 = arith.constant 0 : i32
    %c0_i32_0 = arith.constant 0 : i32
    %c0_i32_1 = arith.constant 0 : i32
    return %arg0, %c0_i32, %c0_i32_0 : i32, i32, i32
  }
  func.func @transform_1(%arg0: i32, %arg1: i32) -> (i32, i32) {
    %c0_i32 = arith.constant 0 : i32
    %c0_i32_0 = arith.constant 0 : i32
    %c0_i32_1 = arith.constant 0 : i32
    return %c0_i32, %c0_i32_0 : i32, i32
  }
  func.func @transform_2(%arg0: i32, %arg1: i32) -> (i32, i32) {
    %c0_i32 = arith.constant 0 : i32
    %c0_i32_0 = arith.constant 0 : i32
    %c0_i32_1 = arith.constant 0 : i32
    return %c0_i32, %c0_i32_0 : i32, i32
  }
  func.func @transform_3(%arg0: i32, %arg1: i32) -> (i32, i32) {
    %c0_i32 = arith.constant 0 : i32
    %c0_i32_0 = arith.constant 0 : i32
    %c0_i32_1 = arith.constant 0 : i32
    return %c0_i32, %c0_i32_0 : i32, i32
  }
  func.func @transform_4(%arg0: i32, %arg1: i32) -> (i32, i32) {
    %c0_i32 = arith.constant 0 : i32
    %c0_i32_0 = arith.constant 0 : i32
    %c0_i32_1 = arith.constant 0 : i32
    return %c0_i32, %c0_i32_0 : i32, i32
  }
  func.func @transform_5(%arg0: i32, %arg1: i32) -> (i32, i32) {
    %c0_i32 = arith.constant 0 : i32
    %c0_i32_0 = arith.constant 0 : i32
    %c0_i32_1 = arith.constant 0 : i32
    return %c0_i32, %c0_i32_0 : i32, i32
  }
  func.func @transform_6(%arg0: i32, %arg1: i32) -> (i32, i32) {
    %c0_i32 = arith.constant 0 : i32
    %c0_i32_0 = arith.constant 0 : i32
    %c0_i32_1 = arith.constant 0 : i32
    return %c0_i32, %c0_i32_0 : i32, i32
  }
  func.func @transform_7(%arg0: i32, %arg1: i32) -> (i32, i32) {
    %c0_i32 = arith.constant 0 : i32
    %c0_i32_0 = arith.constant 0 : i32
    %c0_i32_1 = arith.constant 0 : i32
    return %c0_i32, %c0_i32_0 : i32, i32
  }
  func.func @transform_8(%arg0: i32, %arg1: i32) -> (i32, i32) {
    %c0_i32 = arith.constant 0 : i32
    %c0_i32_0 = arith.constant 0 : i32
    %c0_i32_1 = arith.constant 0 : i32
    return %c0_i32, %c0_i32_0 : i32, i32
  }
  func.func @transform_9(%arg0: i32, %arg1: i32) -> (i32, i32) {
    %c0_i32 = arith.constant 0 : i32
    %c0_i32_0 = arith.constant 0 : i32
    %c0_i32_1 = arith.constant 0 : i32
    return %c0_i32, %c0_i32_0 : i32, i32
  }
  func.func @transform_10(%arg0: i32, %arg1: i32) -> (i32, i32) {
    %c0_i32 = arith.constant 0 : i32
    %c0_i32_0 = arith.constant 0 : i32
    %c0_i32_1 = arith.constant 0 : i32
    return %c0_i32, %c0_i32_0 : i32, i32
  }
  func.func @transform_11(%arg0: i32, %arg1: i32) -> (i32, i32) {
    %c0_i32 = arith.constant 0 : i32
    %c0_i32_0 = arith.constant 0 : i32
    %c0_i32_1 = arith.constant 0 : i32
    return %c0_i32, %c0_i32_0 : i32, i32
  }
  func.func @transform_12(%arg0: i32, %arg1: i32) -> (i32, i32) {
    %c0_i32 = arith.constant 0 : i32
    %c0_i32_0 = arith.constant 0 : i32
    %c0_i32_1 = arith.constant 0 : i32
    return %c0_i32, %c0_i32_0 : i32, i32
  }
  func.func @transform_13(%arg0: i32, %arg1: i32) -> (i32, i32, i32) {
    %c0_i32 = arith.constant 0 : i32
    %c0_i32_0 = arith.constant 0 : i32
    %c0_i32_1 = arith.constant 0 : i32
    %c0_i32_2 = arith.constant 0 : i32
    return %c0_i32, %c0_i32_0, %c0_i32_1 : i32, i32, i32
  }
  func.func @transform_14(%arg0: i32, %arg1: i32) -> (i32, i32, i32) {
    %c0_i32 = arith.constant 0 : i32
    %c0_i32_0 = arith.constant 0 : i32
    %c0_i32_1 = arith.constant 0 : i32
    %c0_i32_2 = arith.constant 0 : i32
    return %c0_i32, %c0_i32_0, %c0_i32_1 : i32, i32, i32
  }
  func.func @transform_15(%arg0: i32, %arg1: i32) -> (i32, i32, i32) {
    %c0_i32 = arith.constant 0 : i32
    %c0_i32_0 = arith.constant 0 : i32
    %c0_i32_1 = arith.constant 0 : i32
    %c0_i32_2 = arith.constant 0 : i32
    return %c0_i32, %c0_i32_0, %c0_i32_1 : i32, i32, i32
  }
  func.func @transform_16(%arg0: i32, %arg1: i32) -> (i32, i32) {
    %c0_i32 = arith.constant 0 : i32
    %c0_i32_0 = arith.constant 0 : i32
    %c0_i32_1 = arith.constant 0 : i32
    return %c0_i32, %c0_i32_0 : i32, i32
  }
  func.func @transform_17(%arg0: i32, %arg1: i32) -> (i32, i32, i32) {
    %c0_i32 = arith.constant 0 : i32
    %c0_i32_0 = arith.constant 0 : i32
    return %arg0, %arg1, %c0_i32 : i32, i32, i32
  }
}

module attributes {stable_mosaic.version = 11 : i64} {
  func.func @encoder_layer_kernel(%arg0: i32, %arg1: i32, %arg2: memref<1x8x32xf32, #tpu.memory_space<vmem>>, %arg3: memref<1x32xf32, #tpu.memory_space<vmem>>, %arg4: memref<1x32xf32, #tpu.memory_space<vmem>>, %arg5: memref<32x32xbf16, #tpu.memory_space<vmem>>, %arg6: memref<32x32xbf16, #tpu.memory_space<vmem>>, %arg7: memref<32x32xbf16, #tpu.memory_space<vmem>>, %arg8: memref<1x32xf32, #tpu.memory_space<vmem>>, %arg9: memref<1x32xf32, #tpu.memory_space<vmem>>, %arg10: memref<1x32xf32, #tpu.memory_space<vmem>>, %arg11: memref<32x32xbf16, #tpu.memory_space<vmem>>, %arg12: memref<1x32xf32, #tpu.memory_space<vmem>>, %arg13: memref<1x32xf32, #tpu.memory_space<vmem>>, %arg14: memref<1x32xf32, #tpu.memory_space<vmem>>, %arg15: memref<1x32x64xbf16, #tpu.memory_space<vmem>>, %arg16: memref<1x1x64xf32, #tpu.memory_space<vmem>>, %arg17: memref<1x64x32xbf16, #tpu.memory_space<vmem>>, %arg18: memref<1x32xf32, #tpu.memory_space<vmem>>, %arg19: memref<1x8x32xf32, #tpu.memory_space<vmem>>, %arg20: memref<8x32xbf16, #tpu.memory_space<vmem>>, %arg21: memref<8x32xbf16, #tpu.memory_space<vmem>>, %arg22: memref<8x32xbf16, #tpu.memory_space<vmem>>) attributes {dimension_semantics = [#tpu.dimension_semantics<parallel>, #tpu.dimension_semantics<arbitrary>], iteration_bounds = array<i64: 2, 1>, scalar_prefetch = 0 : i64, scratch_operands = 3 : i64, tpu.core_type = #tpu.core_type<tc>, window_params = [{transform_indices = @transform_0, window_bounds = array<i64: 1, 8, 32>}, {pipeline_mode = #tpu.pipeline_mode<synchronous>, transform_indices = @transform_1, window_bounds = array<i64: 1, 32>}, {pipeline_mode = #tpu.pipeline_mode<synchronous>, transform_indices = @transform_2, window_bounds = array<i64: 1, 32>}, {pipeline_mode = #tpu.pipeline_mode<synchronous>, transform_indices = @transform_3, window_bounds = array<i64: 32, 32>}, {pipeline_mode = #tpu.pipeline_mode<synchronous>, transform_indices = @transform_4, window_bounds = array<i64: 32, 32>}, {pipeline_mode = #tpu.pipeline_mode<synchronous>, transform_indices = @transform_5, window_bounds = array<i64: 32, 32>}, {pipeline_mode = #tpu.pipeline_mode<synchronous>, transform_indices = @transform_6, window_bounds = array<i64: 1, 32>}, {pipeline_mode = #tpu.pipeline_mode<synchronous>, transform_indices = @transform_7, window_bounds = array<i64: 1, 32>}, {pipeline_mode = #tpu.pipeline_mode<synchronous>, transform_indices = @transform_8, window_bounds = array<i64: 1, 32>}, {pipeline_mode = #tpu.pipeline_mode<synchronous>, transform_indices = @transform_9, window_bounds = array<i64: 32, 32>}, {pipeline_mode = #tpu.pipeline_mode<synchronous>, transform_indices = @transform_10, window_bounds = array<i64: 1, 32>}, {pipeline_mode = #tpu.pipeline_mode<synchronous>, transform_indices = @transform_11, window_bounds = array<i64: 1, 32>}, {pipeline_mode = #tpu.pipeline_mode<synchronous>, transform_indices = @transform_12, window_bounds = array<i64: 1, 32>}, {pipeline_mode = #tpu.pipeline_mode<synchronous>, transform_indices = @transform_13, window_bounds = array<i64: 1, 32, 64>}, {pipeline_mode = #tpu.pipeline_mode<synchronous>, transform_indices = @transform_14, window_bounds = array<i64: 1, 1, 64>}, {pipeline_mode = #tpu.pipeline_mode<synchronous>, transform_indices = @transform_15, window_bounds = array<i64: 1, 64, 32>}, {pipeline_mode = #tpu.pipeline_mode<synchronous>, transform_indices = @transform_16, window_bounds = array<i64: 1, 32>}, {transform_indices = @transform_17, window_bounds = array<i64: 1, 8, 32>}]} {
    %c0_i32 = arith.constant 0 : i32
    %0 = arith.cmpi eq, %arg1, %c0_i32 : i32
    %1 = arith.extui %0 : i1 to i32
    %c0_i32_0 = arith.constant 0 : i32
    %2 = arith.cmpi ne, %1, %c0_i32_0 : i32
    scf.if %2 {
      %c0_50 = arith.constant 0 : index
      %c0_51 = arith.constant 0 : index
      %c0_52 = arith.constant 0 : index
      %111 = vector.load %arg2[%c0_50, %c0_51, %c0_52] : memref<1x8x32xf32, #tpu.memory_space<vmem>>, vector<1x8x32xf32>
      %112 = vector.shape_cast %111 : vector<1x8x32xf32> to vector<8x32xf32>
      %c0_53 = arith.constant 0 : index
      %c0_54 = arith.constant 0 : index
      %113 = vector.load %arg3[%c0_53, %c0_54] : memref<1x32xf32, #tpu.memory_space<vmem>>, vector<1x32xf32>
      %c0_55 = arith.constant 0 : index
      %c0_56 = arith.constant 0 : index
      %114 = vector.load %arg4[%c0_55, %c0_56] : memref<1x32xf32, #tpu.memory_space<vmem>>, vector<1x32xf32>
      %cst_57 = arith.constant dense<0.000000e+00> : vector<8xf32>
      %115 = vector.multi_reduction <add>, %112, %cst_57 [1] : vector<8x32xf32> to vector<8xf32>
      %116 = vector.shape_cast %115 : vector<8xf32> to vector<8x1xf32>
      %cst_58 = arith.constant 3.200000e+01 : f32
      %117 = vector.broadcast %cst_58 : f32 to vector<8x1xf32>
      %118 = arith.divf %116, %117 : vector<8x1xf32>
      %119 = vector.broadcast %118 : vector<8x1xf32> to vector<8x32xf32>
      %120 = arith.subf %112, %119 : vector<8x32xf32>
      %121 = arith.mulf %120, %120 : vector<8x32xf32>
      %cst_59 = arith.constant dense<0.000000e+00> : vector<8xf32>
      %122 = vector.multi_reduction <add>, %121, %cst_59 [1] : vector<8x32xf32> to vector<8xf32>
      %123 = vector.shape_cast %122 : vector<8xf32> to vector<8x1xf32>
      %cst_60 = arith.constant 3.200000e+01 : f32
      %124 = vector.broadcast %cst_60 : f32 to vector<8x1xf32>
      %125 = arith.divf %123, %124 : vector<8x1xf32>
      %cst_61 = arith.constant 9.99999974E-6 : f32
      %126 = vector.broadcast %cst_61 : f32 to vector<8x1xf32>
      %127 = arith.addf %125, %126 : vector<8x1xf32>
      %128 = math.rsqrt %127 : vector<8x1xf32>
      %129 = vector.broadcast %128 : vector<8x1xf32> to vector<8x32xf32>
      %130 = arith.mulf %120, %129 : vector<8x32xf32>
      %131 = vector.broadcast %113 : vector<1x32xf32> to vector<8x32xf32>
      %132 = arith.mulf %130, %131 : vector<8x32xf32>
      %133 = vector.broadcast %114 : vector<1x32xf32> to vector<8x32xf32>
      %134 = arith.addf %132, %133 : vector<8x32xf32>
      %135 = arith.truncf %134 : vector<8x32xf32> to vector<8x32xbf16>
      %c0_62 = arith.constant 0 : index
      %c0_63 = arith.constant 0 : index
      %136 = vector.load %arg20[%c0_62, %c0_63] : memref<8x32xbf16, #tpu.memory_space<vmem>>, vector<8x32xbf16>
      tpu.vector_store %arg20[%c0_62, %c0_63], %135 {strides = array<i32>} : memref<8x32xbf16, #tpu.memory_space<vmem>>, vector<8x32xbf16>,
      %c0_64 = arith.constant 0 : index
      %c0_65 = arith.constant 0 : index
      %137 = vector.load %arg6[%c0_64, %c0_65] : memref<32x32xbf16, #tpu.memory_space<vmem>>, vector<32x32xbf16>
      %cst_66 = arith.constant dense<0.000000e+00> : vector<8x32xf32>
      %138 = tpu.matmul %135, %137, %cst_66 {dimension_numbers = #tpu.dot_dimension_numbers<[1], [0], [0], [1], [0, 0, 1, 1], [], []>} : vector<8x32xbf16>, vector<32x32xbf16>, vector<8x32xf32> -> vector<8x32xf32>
      %c0_67 = arith.constant 0 : index
      %c0_68 = arith.constant 0 : index
      %139 = vector.load %arg9[%c0_67, %c0_68] : memref<1x32xf32, #tpu.memory_space<vmem>>, vector<1x32xf32>
      %140 = vector.broadcast %139 : vector<1x32xf32> to vector<8x32xf32>
      %141 = arith.addf %138, %140 : vector<8x32xf32>
      %c0_69 = arith.constant 0 : index
      %c0_70 = arith.constant 0 : index
      %142 = vector.load %arg7[%c0_69, %c0_70] : memref<32x32xbf16, #tpu.memory_space<vmem>>, vector<32x32xbf16>
      %cst_71 = arith.constant dense<0.000000e+00> : vector<8x32xf32>
      %143 = tpu.matmul %135, %142, %cst_71 {dimension_numbers = #tpu.dot_dimension_numbers<[1], [0], [0], [1], [0, 0, 1, 1], [], []>} : vector<8x32xbf16>, vector<32x32xbf16>, vector<8x32xf32> -> vector<8x32xf32>
      %c0_72 = arith.constant 0 : index
      %c0_73 = arith.constant 0 : index
      %144 = vector.load %arg10[%c0_72, %c0_73] : memref<1x32xf32, #tpu.memory_space<vmem>>, vector<1x32xf32>
      %145 = vector.broadcast %144 : vector<1x32xf32> to vector<8x32xf32>
      %146 = arith.addf %143, %145 : vector<8x32xf32>
      %147 = arith.truncf %141 : vector<8x32xf32> to vector<8x32xbf16>
      %c0_74 = arith.constant 0 : index
      %c0_75 = arith.constant 0 : index
      %148 = vector.load %arg21[%c0_74, %c0_75] : memref<8x32xbf16, #tpu.memory_space<vmem>>, vector<8x32xbf16>
      tpu.vector_store %arg21[%c0_74, %c0_75], %147 {strides = array<i32>} : memref<8x32xbf16, #tpu.memory_space<vmem>>, vector<8x32xbf16>,
      %149 = arith.truncf %146 : vector<8x32xf32> to vector<8x32xbf16>
      %c0_76 = arith.constant 0 : index
      %c0_77 = arith.constant 0 : index
      %150 = vector.load %arg22[%c0_76, %c0_77] : memref<8x32xbf16, #tpu.memory_space<vmem>>, vector<8x32xbf16>
      tpu.vector_store %arg22[%c0_76, %c0_77], %149 {strides = array<i32>} : memref<8x32xbf16, #tpu.memory_space<vmem>>, vector<8x32xbf16>,
    } else {
    }
    %c8_i32 = arith.constant 8 : i32
    %3 = arith.muli %arg1, %c8_i32 : i32
    %4 = tpu.assume_multiple %3, 8 : i32
    %c0 = arith.constant 0 : index
    %5 = arith.index_cast %4 : i32 to index
    %c0_1 = arith.constant 0 : index
    %6 = vector.load %arg2[%c0, %5, %c0_1] : memref<1x8x32xf32, #tpu.memory_space<vmem>>, vector<1x8x32xf32>
    %7 = vector.shape_cast %6 : vector<1x8x32xf32> to vector<8x32xf32>
    %8 = arith.index_cast %4 : i32 to index
    %c0_2 = arith.constant 0 : index
    %9 = vector.load %arg20[%8, %c0_2] : memref<8x32xbf16, #tpu.memory_space<vmem>>, vector<8x32xbf16>
    %c0_3 = arith.constant 0 : index
    %c0_4 = arith.constant 0 : index
    %10 = vector.load %arg5[%c0_3, %c0_4] : memref<32x32xbf16, #tpu.memory_space<vmem>>, vector<32x32xbf16>
    %cst = arith.constant dense<0.000000e+00> : vector<8x32xf32>
    %11 = tpu.matmul %9, %10, %cst {dimension_numbers = #tpu.dot_dimension_numbers<[1], [0], [0], [1], [0, 0, 1, 1], [], []>} : vector<8x32xbf16>, vector<32x32xbf16>, vector<8x32xf32> -> vector<8x32xf32>
    %c0_5 = arith.constant 0 : index
    %c0_6 = arith.constant 0 : index
    %12 = vector.load %arg8[%c0_5, %c0_6] : memref<1x32xf32, #tpu.memory_space<vmem>>, vector<1x32xf32>
    %13 = vector.broadcast %12 : vector<1x32xf32> to vector<8x32xf32>
    %14 = arith.addf %11, %13 : vector<8x32xf32>
    %cst_7 = arith.constant 0.353553385 : f32
    %15 = vector.broadcast %cst_7 : f32 to vector<8x32xf32>
    %16 = arith.mulf %14, %15 : vector<8x32xf32>
    %17 = vector.shape_cast %16 : vector<8x32xf32> to vector<8x4x8xf32>
    %18 = tpu.transpose %17, [1, 0, 2] : vector<8x4x8xf32> -> vector<4x8x8xf32>
    %19 = arith.truncf %18 : vector<4x8x8xf32> to vector<4x8x8xbf16>
    %cst_8 = arith.constant 0xFF800000 : f32
    %20 = vector.broadcast %cst_8 : f32 to vector<4x8x1xf32>
    %cst_9 = arith.constant 0.000000e+00 : f32
    %21 = vector.broadcast %cst_9 : f32 to vector<4x8x1xf32>
    %cst_10 = arith.constant 0.000000e+00 : f32
    %22 = vector.broadcast %cst_10 : f32 to vector<4x8x8xf32>
    %c0_i32_11 = arith.constant 0 : i32
    %c8_i32_12 = arith.constant 8 : i32
    %23 = arith.muli %c0_i32_11, %c8_i32_12 : i32
    %24 = tpu.assume_multiple %23, 8 : i32
    %25 = arith.index_cast %24 : i32 to index
    %c0_13 = arith.constant 0 : index
    %26 = vector.load %arg21[%25, %c0_13] : memref<8x32xbf16, #tpu.memory_space<vmem>>, vector<8x32xbf16>
    %27 = arith.index_cast %24 : i32 to index
    %c0_14 = arith.constant 0 : index
    %28 = vector.load %arg22[%27, %c0_14] : memref<8x32xbf16, #tpu.memory_space<vmem>>, vector<8x32xbf16>
    %29 = vector.shape_cast %26 : vector<8x32xbf16> to vector<8x4x8xbf16>
    %30 = tpu.transpose %29, [1, 0, 2] : vector<8x4x8xbf16> -> vector<4x8x8xbf16>
    %31 = vector.shape_cast %28 : vector<8x32xbf16> to vector<8x4x8xbf16>
    %32 = tpu.transpose %31, [1, 0, 2] : vector<8x4x8xbf16> -> vector<4x8x8xbf16>
    "tpu.trace_start"() <{level = 10 : i32, message = "hqd,hkd->hqk"}> : () -> ()
    %cst_15 = arith.constant dense<0.000000e+00> : vector<4x8x8xf32>
    %33 = tpu.matmul %19, %30, %cst_15 {dimension_numbers = #tpu.dot_dimension_numbers<[2], [2], [1], [1], [0, 0, 0, 1, 1, 1], [0], [0]>} : vector<4x8x8xbf16>, vector<4x8x8xbf16>, vector<4x8x8xf32> -> vector<4x8x8xf32>
    "tpu.trace_stop"() : () -> ()
    %cst_16 = arith.constant dense<0xFF800000> : vector<4x8xf32>
    %34 = vector.multi_reduction <maximumf>, %33, %cst_16 [2] : vector<4x8x8xf32> to vector<4x8xf32>
    %35 = vector.shape_cast %34 : vector<4x8xf32> to vector<4x8x1xf32>
    %36 = arith.maximumf %20, %35 : vector<4x8x1xf32>
    %37 = arith.subf %20, %36 : vector<4x8x1xf32>
    %38 = math.exp %37 : vector<4x8x1xf32>
    %39 = vector.broadcast %36 : vector<4x8x1xf32> to vector<4x8x8xf32>
    %40 = arith.subf %33, %39 : vector<4x8x8xf32>
    %41 = math.exp %40 : vector<4x8x8xf32>
    %42 = arith.mulf %38, %21 : vector<4x8x1xf32>
    %cst_17 = arith.constant dense<0.000000e+00> : vector<4x8xf32>
    %43 = vector.multi_reduction <add>, %41, %cst_17 [2] : vector<4x8x8xf32> to vector<4x8xf32>
    %44 = vector.shape_cast %43 : vector<4x8xf32> to vector<4x8x1xf32>
    %45 = arith.addf %42, %44 : vector<4x8x1xf32>
    %46 = vector.broadcast %38 : vector<4x8x1xf32> to vector<4x8x8xf32>
    %47 = arith.mulf %46, %22 : vector<4x8x8xf32>
    %48 = arith.truncf %41 : vector<4x8x8xf32> to vector<4x8x8xbf16>
    "tpu.trace_start"() <{level = 10 : i32, message = "hqk,hkd->hqd"}> : () -> ()
    %cst_18 = arith.constant dense<0.000000e+00> : vector<4x8x8xf32>
    %49 = tpu.matmul %48, %32, %cst_18 {dimension_numbers = #tpu.dot_dimension_numbers<[2], [1], [1], [2], [0, 0, 0, 1, 1, 2], [0], [0]>} : vector<4x8x8xbf16>, vector<4x8x8xbf16>, vector<4x8x8xf32> -> vector<4x8x8xf32>
    "tpu.trace_stop"() : () -> ()
    %50 = arith.addf %47, %49 : vector<4x8x8xf32>
    %c1_i32 = arith.constant 1 : i32
    %51 = tpu.reciprocal %45 {approx = true} : vector<4x8x1xf32> -> vector<4x8x1xf32>
    %52 = vector.broadcast %51 : vector<4x8x1xf32> to vector<4x8x8xf32>
    %53 = arith.mulf %50, %52 : vector<4x8x8xf32>
    %54 = tpu.transpose %53, [1, 0, 2] : vector<4x8x8xf32> -> vector<8x4x8xf32>
    %55 = vector.shape_cast %54 : vector<8x4x8xf32> to vector<8x32xf32>
    %56 = arith.truncf %55 : vector<8x32xf32> to vector<8x32xbf16>
    %c0_19 = arith.constant 0 : index
    %c0_20 = arith.constant 0 : index
    %57 = vector.load %arg11[%c0_19, %c0_20] : memref<32x32xbf16, #tpu.memory_space<vmem>>, vector<32x32xbf16>
    %cst_21 = arith.constant dense<0.000000e+00> : vector<8x32xf32>
    %58 = tpu.matmul %56, %57, %cst_21 {dimension_numbers = #tpu.dot_dimension_numbers<[1], [0], [0], [1], [0, 0, 1, 1], [], []>} : vector<8x32xbf16>, vector<32x32xbf16>, vector<8x32xf32> -> vector<8x32xf32>
    %c0_22 = arith.constant 0 : index
    %c0_23 = arith.constant 0 : index
    %59 = vector.load %arg12[%c0_22, %c0_23] : memref<1x32xf32, #tpu.memory_space<vmem>>, vector<1x32xf32>
    %60 = vector.broadcast %59 : vector<1x32xf32> to vector<8x32xf32>
    %61 = arith.addf %58, %60 : vector<8x32xf32>
    %62 = arith.addf %7, %61 : vector<8x32xf32>
    %c0_24 = arith.constant 0 : index
    %c0_25 = arith.constant 0 : index
    %63 = vector.load %arg13[%c0_24, %c0_25] : memref<1x32xf32, #tpu.memory_space<vmem>>, vector<1x32xf32>
    %c0_26 = arith.constant 0 : index
    %c0_27 = arith.constant 0 : index
    %64 = vector.load %arg14[%c0_26, %c0_27] : memref<1x32xf32, #tpu.memory_space<vmem>>, vector<1x32xf32>
    %cst_28 = arith.constant dense<0.000000e+00> : vector<8xf32>
    %65 = vector.multi_reduction <add>, %62, %cst_28 [1] : vector<8x32xf32> to vector<8xf32>
    %66 = vector.shape_cast %65 : vector<8xf32> to vector<8x1xf32>
    %cst_29 = arith.constant 3.200000e+01 : f32
    %67 = vector.broadcast %cst_29 : f32 to vector<8x1xf32>
    %68 = arith.divf %66, %67 : vector<8x1xf32>
    %69 = vector.broadcast %68 : vector<8x1xf32> to vector<8x32xf32>
    %70 = arith.subf %62, %69 : vector<8x32xf32>
    %71 = arith.mulf %70, %70 : vector<8x32xf32>
    %cst_30 = arith.constant dense<0.000000e+00> : vector<8xf32>
    %72 = vector.multi_reduction <add>, %71, %cst_30 [1] : vector<8x32xf32> to vector<8xf32>
    %73 = vector.shape_cast %72 : vector<8xf32> to vector<8x1xf32>
    %cst_31 = arith.constant 3.200000e+01 : f32
    %74 = vector.broadcast %cst_31 : f32 to vector<8x1xf32>
    %75 = arith.divf %73, %74 : vector<8x1xf32>
    %cst_32 = arith.constant 9.99999974E-6 : f32
    %76 = vector.broadcast %cst_32 : f32 to vector<8x1xf32>
    %77 = arith.addf %75, %76 : vector<8x1xf32>
    %78 = math.rsqrt %77 : vector<8x1xf32>
    %79 = vector.broadcast %78 : vector<8x1xf32> to vector<8x32xf32>
    %80 = arith.mulf %70, %79 : vector<8x32xf32>
    %81 = vector.broadcast %63 : vector<1x32xf32> to vector<8x32xf32>
    %82 = arith.mulf %80, %81 : vector<8x32xf32>
    %83 = vector.broadcast %64 : vector<1x32xf32> to vector<8x32xf32>
    %84 = arith.addf %82, %83 : vector<8x32xf32>
    %85 = arith.truncf %84 : vector<8x32xf32> to vector<8x32xbf16>
    %cst_33 = arith.constant 0.000000e+00 : f32
    %86 = vector.broadcast %cst_33 : f32 to vector<8x32xf32>
    %c0_i32_34 = arith.constant 0 : i32
    %87 = arith.index_cast %c0_i32_34 : i32 to index
    %c0_35 = arith.constant 0 : index
    %c0_36 = arith.constant 0 : index
    %88 = vector.load %arg15[%87, %c0_35, %c0_36] : memref<1x32x64xbf16, #tpu.memory_space<vmem>>, vector<1x32x64xbf16>
    %89 = vector.shape_cast %88 : vector<1x32x64xbf16> to vector<32x64xbf16>
    %cst_37 = arith.constant dense<0.000000e+00> : vector<8x64xf32>
    %90 = tpu.matmul %85, %89, %cst_37 {dimension_numbers = #tpu.dot_dimension_numbers<[1], [0], [0], [1], [0, 0, 1, 1], [], []>} : vector<8x32xbf16>, vector<32x64xbf16>, vector<8x64xf32> -> vector<8x64xf32>
    %91 = arith.index_cast %c0_i32_34 : i32 to index
    %c0_38 = arith.constant 0 : index
    %c0_39 = arith.constant 0 : index
    %92 = vector.load %arg16[%91, %c0_38, %c0_39] : memref<1x1x64xf32, #tpu.memory_space<vmem>>, vector<1x1x64xf32>
    %93 = vector.shape_cast %92 : vector<1x1x64xf32> to vector<1x64xf32>
    %94 = vector.broadcast %93 : vector<1x64xf32> to vector<8x64xf32>
    %95 = arith.addf %90, %94 : vector<8x64xf32>
    %cst_40 = arith.constant 0.000000e+00 : f32
    %96 = vector.broadcast %cst_40 : f32 to vector<8x64xf32>
    %97 = arith.maximumf %95, %96 : vector<8x64xf32>
    %98 = arith.truncf %97 : vector<8x64xf32> to vector<8x64xbf16>
    %99 = arith.index_cast %c0_i32_34 : i32 to index
    %c0_41 = arith.constant 0 : index
    %c0_42 = arith.constant 0 : index
    %100 = vector.load %arg17[%99, %c0_41, %c0_42] : memref<1x64x32xbf16, #tpu.memory_space<vmem>>, vector<1x64x32xbf16>
    %101 = vector.shape_cast %100 : vector<1x64x32xbf16> to vector<64x32xbf16>
    %cst_43 = arith.constant dense<0.000000e+00> : vector<8x32xf32>
    %102 = tpu.matmul %98, %101, %cst_43 {dimension_numbers = #tpu.dot_dimension_numbers<[1], [0], [0], [1], [0, 0, 1, 1], [], []>} : vector<8x64xbf16>, vector<64x32xbf16>, vector<8x32xf32> -> vector<8x32xf32>
    %103 = arith.addf %86, %102 : vector<8x32xf32>
    %c1_i32_44 = arith.constant 1 : i32
    %c0_45 = arith.constant 0 : index
    %c0_46 = arith.constant 0 : index
    %104 = vector.load %arg18[%c0_45, %c0_46] : memref<1x32xf32, #tpu.memory_space<vmem>>, vector<1x32xf32>
    %105 = vector.broadcast %104 : vector<1x32xf32> to vector<8x32xf32>
    %106 = arith.addf %103, %105 : vector<8x32xf32>
    %107 = arith.addf %62, %106 : vector<8x32xf32>
    %c0_47 = arith.constant 0 : index
    %c0_48 = arith.constant 0 : index
    %c0_49 = arith.constant 0 : index
    %108 = vector.load %arg19[%c0_47, %c0_48, %c0_49] : memref<1x8x32xf32, #tpu.memory_space<vmem>>, vector<1x8x32xf32>
    %109 = vector.shape_cast %108 : vector<1x8x32xf32> to vector<8x32xf32>
    %110 = vector.shape_cast %107 : vector<8x32xf32> to vector<1x8x32xf32>
    tpu.vector_store %arg19[%c0_47, %c0_48, %c0_49], %110 {strides = array<i32>} : memref<1x8x32xf32, #tpu.memory_space<vmem>>, vector<1x8x32xf32>,
    return
  }
  func.func @transform_0(%arg0: i32, %arg1: i32) -> (i32, i32, i32) {
    %c0_i32 = arith.constant 0 : i32
    %c0_i32_0 = arith.constant 0 : i32
    %c0_i32_1 = arith.constant 0 : i32
    return %arg0, %c0_i32, %c0_i32_0 : i32, i32, i32
  }
  func.func @transform_1(%arg0: i32, %arg1: i32) -> (i32, i32) {
    %c0_i32 = arith.constant 0 : i32
    %c0_i32_0 = arith.constant 0 : i32
    %c0_i32_1 = arith.constant 0 : i32
    return %c0_i32, %c0_i32_0 : i32, i32
  }
  func.func @transform_2(%arg0: i32, %arg1: i32) -> (i32, i32) {
    %c0_i32 = arith.constant 0 : i32
    %c0_i32_0 = arith.constant 0 : i32
    %c0_i32_1 = arith.constant 0 : i32
    return %c0_i32, %c0_i32_0 : i32, i32
  }
  func.func @transform_3(%arg0: i32, %arg1: i32) -> (i32, i32) {
    %c0_i32 = arith.constant 0 : i32
    %c0_i32_0 = arith.constant 0 : i32
    %c0_i32_1 = arith.constant 0 : i32
    return %c0_i32, %c0_i32_0 : i32, i32
  }
  func.func @transform_4(%arg0: i32, %arg1: i32) -> (i32, i32) {
    %c0_i32 = arith.constant 0 : i32
    %c0_i32_0 = arith.constant 0 : i32
    %c0_i32_1 = arith.constant 0 : i32
    return %c0_i32, %c0_i32_0 : i32, i32
  }
  func.func @transform_5(%arg0: i32, %arg1: i32) -> (i32, i32) {
    %c0_i32 = arith.constant 0 : i32
    %c0_i32_0 = arith.constant 0 : i32
    %c0_i32_1 = arith.constant 0 : i32
    return %c0_i32, %c0_i32_0 : i32, i32
  }
  func.func @transform_6(%arg0: i32, %arg1: i32) -> (i32, i32) {
    %c0_i32 = arith.constant 0 : i32
    %c0_i32_0 = arith.constant 0 : i32
    %c0_i32_1 = arith.constant 0 : i32
    return %c0_i32, %c0_i32_0 : i32, i32
  }
  func.func @transform_7(%arg0: i32, %arg1: i32) -> (i32, i32) {
    %c0_i32 = arith.constant 0 : i32
    %c0_i32_0 = arith.constant 0 : i32
    %c0_i32_1 = arith.constant 0 : i32
    return %c0_i32, %c0_i32_0 : i32, i32
  }
  func.func @transform_8(%arg0: i32, %arg1: i32) -> (i32, i32) {
    %c0_i32 = arith.constant 0 : i32
    %c0_i32_0 = arith.constant 0 : i32
    %c0_i32_1 = arith.constant 0 : i32
    return %c0_i32, %c0_i32_0 : i32, i32
  }
  func.func @transform_9(%arg0: i32, %arg1: i32) -> (i32, i32) {
    %c0_i32 = arith.constant 0 : i32
    %c0_i32_0 = arith.constant 0 : i32
    %c0_i32_1 = arith.constant 0 : i32
    return %c0_i32, %c0_i32_0 : i32, i32
  }
  func.func @transform_10(%arg0: i32, %arg1: i32) -> (i32, i32) {
    %c0_i32 = arith.constant 0 : i32
    %c0_i32_0 = arith.constant 0 : i32
    %c0_i32_1 = arith.constant 0 : i32
    return %c0_i32, %c0_i32_0 : i32, i32
  }
  func.func @transform_11(%arg0: i32, %arg1: i32) -> (i32, i32) {
    %c0_i32 = arith.constant 0 : i32
    %c0_i32_0 = arith.constant 0 : i32
    %c0_i32_1 = arith.constant 0 : i32
    return %c0_i32, %c0_i32_0 : i32, i32
  }
  func.func @transform_12(%arg0: i32, %arg1: i32) -> (i32, i32) {
    %c0_i32 = arith.constant 0 : i32
    %c0_i32_0 = arith.constant 0 : i32
    %c0_i32_1 = arith.constant 0 : i32
    return %c0_i32, %c0_i32_0 : i32, i32
  }
  func.func @transform_13(%arg0: i32, %arg1: i32) -> (i32, i32, i32) {
    %c0_i32 = arith.constant 0 : i32
    %c0_i32_0 = arith.constant 0 : i32
    %c0_i32_1 = arith.constant 0 : i32
    %c0_i32_2 = arith.constant 0 : i32
    return %c0_i32, %c0_i32_0, %c0_i32_1 : i32, i32, i32
  }
  func.func @transform_14(%arg0: i32, %arg1: i32) -> (i32, i32, i32) {
    %c0_i32 = arith.constant 0 : i32
    %c0_i32_0 = arith.constant 0 : i32
    %c0_i32_1 = arith.constant 0 : i32
    %c0_i32_2 = arith.constant 0 : i32
    return %c0_i32, %c0_i32_0, %c0_i32_1 : i32, i32, i32
  }
  func.func @transform_15(%arg0: i32, %arg1: i32) -> (i32, i32, i32) {
    %c0_i32 = arith.constant 0 : i32
    %c0_i32_0 = arith.constant 0 : i32
    %c0_i32_1 = arith.constant 0 : i32
    %c0_i32_2 = arith.constant 0 : i32
    return %c0_i32, %c0_i32_0, %c0_i32_1 : i32, i32, i32
  }
  func.func @transform_16(%arg0: i32, %arg1: i32) -> (i32, i32) {
    %c0_i32 = arith.constant 0 : i32
    %c0_i32_0 = arith.constant 0 : i32
    %c0_i32_1 = arith.constant 0 : i32
    return %c0_i32, %c0_i32_0 : i32, i32
  }
  func.func @transform_17(%arg0: i32, %arg1: i32) -> (i32, i32, i32) {
    %c0_i32 = arith.constant 0 : i32
    %c0_i32_0 = arith.constant 0 : i32
    return %arg0, %arg1, %c0_i32 : i32, i32, i32
  }
}

</mosaic_0001>

<llo_original>
// kernel: tpu_custom_call.1
$region0: #{tpu_custom_call.1}
  #allocation0 [shape = 'u32[]', space=smem, size = 0x4, offset = 0x4, fixed_abs, tag = 'smem constant byte address 0x4 - core index']
  #allocation1 [shape = 'u32[144,128]{1,0:T(1,128)}', space=vmem, size = 0x12000, scoped, tag = 'internal scratch']
  #allocation2 [shape = 'bf16[8,32]{1,0:T(8,128)(2,1)}', space=vmem, size = 0x800, scoped, tag = 'scratch operand']
  #allocation3 [shape = 'bf16[8,32]{1,0:T(8,128)(2,1)}', space=vmem, size = 0x800, scoped, tag = 'scratch operand']
  #allocation4 [shape = 'bf16[8,32]{1,0:T(8,128)(2,1)}', space=vmem, size = 0x800, scoped, tag = 'scratch operand']
  %s0 = inlined_call_operand.vmem [shape: f32[2,8,32], index: 0, kind: input, shape index: {}]
  %s1 = inlined_call_operand.vmem [shape: f32[1,32], index: 1, kind: input, shape index: {}]
  %s2 = inlined_call_operand.hbm [shape: f32[1,32], index: 2, kind: input, shape index: {}]
  %s3 = inlined_call_operand.vmem [shape: bf16[32,32], index: 3, kind: input, shape index: {}]
  %s4 = inlined_call_operand.vmem [shape: bf16[32,32], index: 4, kind: input, shape index: {}]
  %s5 = inlined_call_operand.hbm [shape: bf16[32,32], index: 5, kind: input, shape index: {}]
  %s6 = inlined_call_operand.hbm [shape: f32[1,32], index: 6, kind: input, shape index: {}]
  %s7 = inlined_call_operand.hbm [shape: f32[1,32], index: 7, kind: input, shape index: {}]
  %s8 = inlined_call_operand.hbm [shape: f32[1,32], index: 8, kind: input, shape index: {}]
  %s9 = inlined_call_operand.vmem [shape: bf16[32,32], index: 9, kind: input, shape index: {}]
  %s10 = inlined_call_operand.hbm [shape: f32[1,32], index: 10, kind: input, shape index: {}]
  %s11 = inlined_call_operand.hbm [shape: f32[1,32], index: 11, kind: input, shape index: {}]
  %s12 = inlined_call_operand.hbm [shape: f32[1,32], index: 12, kind: input, shape index: {}]
  %s13 = inlined_call_operand.vmem [shape: bf16[1,32,64], index: 13, kind: input, shape index: {}]
  %s14 = inlined_call_operand.vmem [shape: f32[1,1,64], index: 14, kind: input, shape index: {}]
  %s15 = inlined_call_operand.vmem [shape: bf16[1,64,32], index: 15, kind: input, shape index: {}]
  %s16 = inlined_call_operand.vmem [shape: f32[1,32], index: 16, kind: input, shape index: {}]
  %s17 = inlined_call_operand.hbm [shape: f32[2,8,32], index: 17, kind: output, shape index: {}]
  %s18 = sld [smem:[#allocation0]]
  $region137: #{tpu_custom_call.1} parent=0
    _
  %s20 = ssub.s32 1, %s18
  %s21 = scalar_select 0, %s20, %s18
  $region1: #{tpu_custom_call.1} parent=0
    #allocation5 [shape = 'u8[512]{0}', space=vmem, size = 0x400, scoped, tag = 'input window, operand 2, single buffered']
    #allocation6 [shape = 's32[2]{0}', space=sflag, size = 0x8, scoped, tag = 'scoped memory for tpu_custom_call.1']
    #allocation7 [shape = 's32[2]{0}', space=sflag, size = 0x8, scoped, tag = 'scoped memory for tpu_custom_call.1']
    #allocation8 [shape = 'u8[8192]{0}', space=vmem, size = 0x2000, scoped, tag = 'input window, operand 5, single buffered']
    #allocation9 [shape = 's32[1]{0}', space=sflag, size = 0x4, scoped, tag = 'scoped memory for tpu_custom_call.1']
    #allocation10 [shape = 'u8[512]{0}', space=vmem, size = 0x400, scoped, tag = 'input window, operand 6, single buffered']
    #allocation11 [shape = 'u8[512]{0}', space=vmem, size = 0x400, scoped, tag = 'input window, operand 7, single buffered']
    #allocation12 [shape = 's32[1]{0}', space=sflag, size = 0x4, scoped, tag = 'scoped memory for tpu_custom_call.1']
    #allocation13 [shape = 'u8[512]{0}', space=vmem, size = 0x400, scoped, tag = 'input window, operand 8, single buffered']
    #allocation14 [shape = 'u8[512]{0}', space=vmem, size = 0x400, scoped, tag = 'input window, operand 10, single buffered']
    #allocation15 [shape = 's32[1]{0}', space=sflag, size = 0x4, scoped, tag = 'scoped memory for tpu_custom_call.1']
    #allocation16 [shape = 'u8[512]{0}', space=vmem, size = 0x400, scoped, tag = 'input window, operand 11, single buffered']
    #allocation17 [shape = 'u8[512]{0}', space=vmem, size = 0x400, scoped, tag = 'input window, operand 12, single buffered']
    #allocation18 [shape = 's32[1]{0}', space=sflag, size = 0x4, scoped, tag = 'scoped memory for tpu_custom_call.1']
    #allocation19 [shape = 'u8[8192]{0}', space=vmem, size = 0x2000, scoped, tag = 'output window, operand 0']
    %22 = vsyncpa [#allocation6], 0
    %23 = vsyncpa [#allocation9], 0
    %24 = vsyncpa [#allocation12], 0
    %25 = vsyncpa [#allocation15], 0
    %26 = vsyncpa [#allocation18], 0
    %27 = vsyncpa [#allocation7], 0
    %s28 = scalar_lea.sflag [#allocation7], 1
    %29 = vsyncpa %s28, 0
    loop: start=0, step=1, limit=4
    $region2: #{tpu_custom_call.1} parent=1 // loop_pre_header
      _
    $region3: #{tpu_custom_call.1} parent=1 // loop_header
      %s31 = sphi 0, %s35
      %p32 = scmp.ge.s32.totalorder %s31, 4
      %s38 = sphi 0, %s50
      %s39 = sphi 0, %s46
      %s40 = sphi 0, %s38
      %s41 = sphi 0, %s39
      %s42 = sphi 0, %s40
      %s43 = sphi 0, %s41
      %s53 = sphi 0, %s55
      %s56 = sphi 0, %s53
      %s57 = sphi 0, %s56
      %s73 = sphi 0, %s57
      %s77 = sphi 0, %s77
      %s79 = sphi 0, %s77
      %s80 = sphi 0, %s79
      %s94 = sphi 0, %s80
      %s98 = sphi 0, %s98
      %s100 = sphi 0, %s98
      %s101 = sphi 0, %s100
      %s115 = sphi 0, %s101
      %s119 = sphi 0, %s119
      %s121 = sphi 0, %s119
      %s122 = sphi 0, %s121
      %s136 = sphi 0, %s122
      %s140 = sphi 0, %s140
      %s142 = sphi 0, %s140
      %s143 = sphi 0, %s142
      %s157 = sphi 0, %s143
      %s161 = sphi 0, %s161
      %s163 = sphi 0, %s161
      %s164 = sphi 0, %s163
      %s178 = sphi 0, %s164
      %s182 = sphi 0, %s182
      %s184 = sphi 0, %s182
      %s185 = sphi 0, %s184
      %s199 = sphi 0, %s185
      %s203 = sphi 0, %s203
      %s205 = sphi 0, %s203
      %s206 = sphi 0, %s205
      %s220 = sphi 0, %s206
      %s224 = sphi 0, %s224
      %s226 = sphi 0, %s224
      %s227 = sphi 0, %s226
      %s241 = sphi 0, %s227
      %s245 = sphi 0, %s245
      %s247 = sphi 0, %s245
      %s248 = sphi 0, %s247
      %s262 = sphi 0, %s248
      %s266 = sphi 0, %s266
      %s268 = sphi 0, %s266
      %s269 = sphi 0, %s268
      %s283 = sphi 0, %s269
      %s287 = sphi 0, %s287
      %s289 = sphi 0, %s287
      %s290 = sphi 0, %s289
      %s304 = sphi 0, %s290
      %s308 = sphi 0, %s308
      %s310 = sphi 0, %s308
      %s311 = sphi 0, %s310
      %s325 = sphi 0, %s311
      %s329 = sphi 0, %s329
      %s331 = sphi 0, %s329
      %s332 = sphi 0, %s331
      %s346 = sphi 0, %s332
      %s350 = sphi 0, %s350
      %s352 = sphi 0, %s350
      %s353 = sphi 0, %s352
      %s367 = sphi 0, %s353
      %s371 = sphi 0, %s371
      %s373 = sphi 0, %s371
      %s374 = sphi 0, %s373
      %s388 = sphi 0, %s374
      %s392 = sphi 0, %s392
      %s394 = sphi 0, %s392
      %s395 = sphi 0, %s394
      %s409 = sphi 0, %s395
      %s417 = sphi 0, %s419
      %s420 = sphi 0, %s417
      %s421 = sphi 0, %s420
      %s437 = sphi 0, %s421
    $region4: #{tpu_custom_call.1} parent=1 // loop_header_branch
      %34 = sbr.rel (%p32) target = $region8
    $region5: #{tpu_custom_call.1} parent=1 // loop_body
      %s36 = ssub.s32 %s31, 1
      %s37 = ssub.s32 %s31, 2
      %s44 = sadd.s32 1, %s39
      %p45 = scmp.ge.s32.totalorder %s44, 1
      %s46 = scalar_select %p45, 0, %s44
      %s47 = sadd.s32 1, %s38
      %s48 = scalar_select %p45, %s47, %s38
      %p49 = scmp.ge.s32.totalorder %s48, 2
      %s50 = scalar_select %p49, 0, %s48
      %s51 = ssub.s32 %s38, %s50
      %p52 = scmp.eq.s32.totalorder %s51, 0
      %s54 = sadd.s32 %s53, 1
      %s55 = scalar_select %p52, %s53, %s54
      %p58 = pneg %p52
      %p59 = scmp.eq.s32.totalorder %s31, 1
      %p60 = por %p58, %p59
      %p61 = scmp.ne.s32.totalorder %s53, %s56
      %p62 = scmp.eq.s32.totalorder %s31, 0
      %p63 = por %p61, %p62
      %p64 = scmp.ne.s32.totalorder %s53, %s56
      %p65 = scmp.eq.s32.totalorder %s36, 1
      %p66 = por %p64, %p65
      %p67 = scmp.ne.s32.totalorder %s56, %s57
      %p68 = scmp.eq.s32.totalorder %s36, 0
      %p69 = por %p67, %p68
      %p70 = scmp.ne.s32.totalorder %s56, %s57
      %p71 = scmp.eq.s32.totalorder %s37, 1
      %p72 = por %p70, %p71
      %p74 = scmp.ne.s32.totalorder %s57, %s73
      %p75 = scmp.eq.s32.totalorder %s37, 0
      %p76 = por %p74, %p75
      %s78 = sadd.s32 %s77, 1
      %p81 = scmp.eq.s32.totalorder %s31, 1
      %p82 = scmp.ne.s32.totalorder %s77, %s79
      %p83 = scmp.eq.s32.totalorder %s31, 0
      %p84 = por %p82, %p83
      %p85 = scmp.ne.s32.totalorder %s77, %s79
      %p86 = scmp.eq.s32.totalorder %s36, 1
      %p87 = por %p85, %p86
      %p88 = scmp.ne.s32.totalorder %s79, %s80
      %p89 = scmp.eq.s32.totalorder %s36, 0
      %p90 = por %p88, %p89
      %p91 = scmp.ne.s32.totalorder %s79, %s80
      %p92 = scmp.eq.s32.totalorder %s37, 1
      %p93 = por %p91, %p92
      %p95 = scmp.ne.s32.totalorder %s80, %s94
      %p96 = scmp.eq.s32.totalorder %s37, 0
      %p97 = por %p95, %p96
      %s99 = sadd.s32 %s98, 1
      %p102 = scmp.eq.s32.totalorder %s31, 1
      %p103 = scmp.ne.s32.totalorder %s98, %s100
      %p104 = scmp.eq.s32.totalorder %s31, 0
      %p105 = por %p103, %p104
      %p106 = scmp.ne.s32.totalorder %s98, %s100
      %p107 = scmp.eq.s32.totalorder %s36, 1
      %p108 = por %p106, %p107
      %p109 = scmp.ne.s32.totalorder %s100, %s101
      %p110 = scmp.eq.s32.totalorder %s36, 0
      %p111 = por %p109, %p110
      %p112 = scmp.ne.s32.totalorder %s100, %s101
      %p113 = scmp.eq.s32.totalorder %s37, 1
      %p114 = por %p112, %p113
      %p116 = scmp.ne.s32.totalorder %s101, %s115
      %p117 = scmp.eq.s32.totalorder %s37, 0
      %p118 = por %p116, %p117
      %s120 = sadd.s32 %s119, 1
      %p123 = scmp.eq.s32.totalorder %s31, 1
      %p124 = scmp.ne.s32.totalorder %s119, %s121
      %p125 = scmp.eq.s32.totalorder %s31, 0
      %p126 = por %p124, %p125
      %p127 = scmp.ne.s32.totalorder %s119, %s121
      %p128 = scmp.eq.s32.totalorder %s36, 1
      %p129 = por %p127, %p128
      %p130 = scmp.ne.s32.totalorder %s121, %s122
      %p131 = scmp.eq.s32.totalorder %s36, 0
      %p132 = por %p130, %p131
      %p133 = scmp.ne.s32.totalorder %s121, %s122
      %p134 = scmp.eq.s32.totalorder %s37, 1
      %p135 = por %p133, %p134
      %p137 = scmp.ne.s32.totalorder %s122, %s136
      %p138 = scmp.eq.s32.totalorder %s37, 0
      %p139 = por %p137, %p138
      %s141 = sadd.s32 %s140, 1
      %p144 = scmp.eq.s32.totalorder %s31, 1
      %p145 = scmp.ne.s32.totalorder %s140, %s142
      %p146 = scmp.eq.s32.totalorder %s31, 0
      %p147 = por %p145, %p146
      %p148 = scmp.ne.s32.totalorder %s140, %s142
      %p149 = scmp.eq.s32.totalorder %s36, 1
      %p150 = por %p148, %p149
      %p151 = scmp.ne.s32.totalorder %s142, %s143
      %p152 = scmp.eq.s32.totalorder %s36, 0
      %p153 = por %p151, %p152
      %p154 = scmp.ne.s32.totalorder %s142, %s143
      %p155 = scmp.eq.s32.totalorder %s37, 1
      %p156 = por %p154, %p155
      %p158 = scmp.ne.s32.totalorder %s143, %s157
      %p159 = scmp.eq.s32.totalorder %s37, 0
      %p160 = por %p158, %p159
      %s162 = sadd.s32 %s161, 1
      %p165 = scmp.eq.s32.totalorder %s31, 1
      %p166 = scmp.ne.s32.totalorder %s161, %s163
      %p167 = scmp.eq.s32.totalorder %s31, 0
      %p168 = por %p166, %p167
      %p169 = scmp.ne.s32.totalorder %s161, %s163
      %p170 = scmp.eq.s32.totalorder %s36, 1
      %p171 = por %p169, %p170
      %p172 = scmp.ne.s32.totalorder %s163, %s164
      %p173 = scmp.eq.s32.totalorder %s36, 0
      %p174 = por %p172, %p173
      %p175 = scmp.ne.s32.totalorder %s163, %s164
      %p176 = scmp.eq.s32.totalorder %s37, 1
      %p177 = por %p175, %p176
      %p179 = scmp.ne.s32.totalorder %s164, %s178
      %p180 = scmp.eq.s32.totalorder %s37, 0
      %p181 = por %p179, %p180
      %s183 = sadd.s32 %s182, 1
      %p186 = scmp.eq.s32.totalorder %s31, 1
      %p187 = scmp.ne.s32.totalorder %s182, %s184
      %p188 = scmp.eq.s32.totalorder %s31, 0
      %p189 = por %p187, %p188
      %p190 = scmp.ne.s32.totalorder %s182, %s184
      %p191 = scmp.eq.s32.totalorder %s36, 1
      %p192 = por %p190, %p191
      %p193 = scmp.ne.s32.totalorder %s184, %s185
      %p194 = scmp.eq.s32.totalorder %s36, 0
      %p195 = por %p193, %p194
      %p196 = scmp.ne.s32.totalorder %s184, %s185
      %p197 = scmp.eq.s32.totalorder %s37, 1
      %p198 = por %p196, %p197
      %p200 = scmp.ne.s32.totalorder %s185, %s199
      %p201 = scmp.eq.s32.totalorder %s37, 0
      %p202 = por %p200, %p201
      %s204 = sadd.s32 %s203, 1
      %p207 = scmp.eq.s32.totalorder %s31, 1
      %p208 = scmp.ne.s32.totalorder %s203, %s205
      %p209 = scmp.eq.s32.totalorder %s31, 0
      %p210 = por %p208, %p209
      %p211 = scmp.ne.s32.totalorder %s203, %s205
      %p212 = scmp.eq.s32.totalorder %s36, 1
      %p213 = por %p211, %p212
      %p214 = scmp.ne.s32.totalorder %s205, %s206
      %p215 = scmp.eq.s32.totalorder %s36, 0
      %p216 = por %p214, %p215
      %p217 = scmp.ne.s32.totalorder %s205, %s206
      %p218 = scmp.eq.s32.totalorder %s37, 1
      %p219 = por %p217, %p218
      %p221 = scmp.ne.s32.totalorder %s206, %s220
      %p222 = scmp.eq.s32.totalorder %s37, 0
      %p223 = por %p221, %p222
      %s225 = sadd.s32 %s224, 1
      %p228 = scmp.eq.s32.totalorder %s31, 1
      %p229 = scmp.ne.s32.totalorder %s224, %s226
      %p230 = scmp.eq.s32.totalorder %s31, 0
      %p231 = por %p229, %p230
      %p232 = scmp.ne.s32.totalorder %s224, %s226
      %p233 = scmp.eq.s32.totalorder %s36, 1
      %p234 = por %p232, %p233
      %p235 = scmp.ne.s32.totalorder %s226, %s227
      %p236 = scmp.eq.s32.totalorder %s36, 0
      %p237 = por %p235, %p236
      %p238 = scmp.ne.s32.totalorder %s226, %s227
      %p239 = scmp.eq.s32.totalorder %s37, 1
      %p240 = por %p238, %p239
      %p242 = scmp.ne.s32.totalorder %s227, %s241
      %p243 = scmp.eq.s32.totalorder %s37, 0
      %p244 = por %p242, %p243
      %s246 = sadd.s32 %s245, 1
      %p249 = scmp.eq.s32.totalorder %s31, 1
      %p250 = scmp.ne.s32.totalorder %s245, %s247
      %p251 = scmp.eq.s32.totalorder %s31, 0
      %p252 = por %p250, %p251
      %p253 = scmp.ne.s32.totalorder %s245, %s247
      %p254 = scmp.eq.s32.totalorder %s36, 1
      %p255 = por %p253, %p254
      %p256 = scmp.ne.s32.totalorder %s247, %s248
      %p257 = scmp.eq.s32.totalorder %s36, 0
      %p258 = por %p256, %p257
      %p259 = scmp.ne.s32.totalorder %s247, %s248
      %p260 = scmp.eq.s32.totalorder %s37, 1
      %p261 = por %p259, %p260
      %p263 = scmp.ne.s32.totalorder %s248, %s262
      %p264 = scmp.eq.s32.totalorder %s37, 0
      %p265 = por %p263, %p264
      %s267 = sadd.s32 %s266, 1
      %p270 = scmp.eq.s32.totalorder %s31, 1
      %p271 = scmp.ne.s32.totalorder %s266, %s268
      %p272 = scmp.eq.s32.totalorder %s31, 0
      %p273 = por %p271, %p272
      %p274 = scmp.ne.s32.totalorder %s266, %s268
      %p275 = scmp.eq.s32.totalorder %s36, 1
      %p276 = por %p274, %p275
      %p277 = scmp.ne.s32.totalorder %s268, %s269
      %p278 = scmp.eq.s32.totalorder %s36, 0
      %p279 = por %p277, %p278
      %p280 = scmp.ne.s32.totalorder %s268, %s269
      %p281 = scmp.eq.s32.totalorder %s37, 1
      %p282 = por %p280, %p281
      %p284 = scmp.ne.s32.totalorder %s269, %s283
      %p285 = scmp.eq.s32.totalorder %s37, 0
      %p286 = por %p284, %p285
      %s288 = sadd.s32 %s287, 1
      %p291 = scmp.eq.s32.totalorder %s31, 1
      %p292 = scmp.ne.s32.totalorder %s287, %s289
      %p293 = scmp.eq.s32.totalorder %s31, 0
      %p294 = por %p292, %p293
      %p295 = scmp.ne.s32.totalorder %s287, %s289
      %p296 = scmp.eq.s32.totalorder %s36, 1
      %p297 = por %p295, %p296
      %p298 = scmp.ne.s32.totalorder %s289, %s290
      %p299 = scmp.eq.s32.totalorder %s36, 0
      %p300 = por %p298, %p299
      %p301 = scmp.ne.s32.totalorder %s289, %s290
      %p302 = scmp.eq.s32.totalorder %s37, 1
      %p303 = por %p301, %p302
      %p305 = scmp.ne.s32.totalorder %s290, %s304
      %p306 = scmp.eq.s32.totalorder %s37, 0
      %p307 = por %p305, %p306
      %s309 = sadd.s32 %s308, 1
      %p312 = scmp.eq.s32.totalorder %s31, 1
      %p313 = scmp.ne.s32.totalorder %s308, %s310
      %p314 = scmp.eq.s32.totalorder %s31, 0
      %p315 = por %p313, %p314
      %p316 = scmp.ne.s32.totalorder %s308, %s310
      %p317 = scmp.eq.s32.totalorder %s36, 1
      %p318 = por %p316, %p317
      %p319 = scmp.ne.s32.totalorder %s310, %s311
      %p320 = scmp.eq.s32.totalorder %s36, 0
      %p321 = por %p319, %p320
      %p322 = scmp.ne.s32.totalorder %s310, %s311
      %p323 = scmp.eq.s32.totalorder %s37, 1
      %p324 = por %p322, %p323
      %p326 = scmp.ne.s32.totalorder %s311, %s325
      %p327 = scmp.eq.s32.totalorder %s37, 0
      %p328 = por %p326, %p327
      %s330 = sadd.s32 %s329, 1
      %p333 = scmp.eq.s32.totalorder %s31, 1
      %p334 = scmp.ne.s32.totalorder %s329, %s331
      %p335 = scmp.eq.s32.totalorder %s31, 0
      %p336 = por %p334, %p335
      %p337 = scmp.ne.s32.totalorder %s329, %s331
      %p338 = scmp.eq.s32.totalorder %s36, 1
      %p339 = por %p337, %p338
      %p340 = scmp.ne.s32.totalorder %s331, %s332
      %p341 = scmp.eq.s32.totalorder %s36, 0
      %p342 = por %p340, %p341
      %p343 = scmp.ne.s32.totalorder %s331, %s332
      %p344 = scmp.eq.s32.totalorder %s37, 1
      %p345 = por %p343, %p344
      %p347 = scmp.ne.s32.totalorder %s332, %s346
      %p348 = scmp.eq.s32.totalorder %s37, 0
      %p349 = por %p347, %p348
      %s351 = sadd.s32 %s350, 1
      %p354 = scmp.eq.s32.totalorder %s31, 1
      %p355 = scmp.ne.s32.totalorder %s350, %s352
      %p356 = scmp.eq.s32.totalorder %s31, 0
      %p357 = por %p355, %p356
      %p358 = scmp.ne.s32.totalorder %s350, %s352
      %p359 = scmp.eq.s32.totalorder %s36, 1
      %p360 = por %p358, %p359
      %p361 = scmp.ne.s32.totalorder %s352, %s353
      %p362 = scmp.eq.s32.totalorder %s36, 0
      %p363 = por %p361, %p362
      %p364 = scmp.ne.s32.totalorder %s352, %s353
      %p365 = scmp.eq.s32.totalorder %s37, 1
      %p366 = por %p364, %p365
      %p368 = scmp.ne.s32.totalorder %s353, %s367
      %p369 = scmp.eq.s32.totalorder %s37, 0
      %p370 = por %p368, %p369
      %s372 = sadd.s32 %s371, 1
      %p375 = scmp.eq.s32.totalorder %s31, 1
      %p376 = scmp.ne.s32.totalorder %s371, %s373
      %p377 = scmp.eq.s32.totalorder %s31, 0
      %p378 = por %p376, %p377
      %p379 = scmp.ne.s32.totalorder %s371, %s373
      %p380 = scmp.eq.s32.totalorder %s36, 1
      %p381 = por %p379, %p380
      %p382 = scmp.ne.s32.totalorder %s373, %s374
      %p383 = scmp.eq.s32.totalorder %s36, 0
      %p384 = por %p382, %p383
      %p385 = scmp.ne.s32.totalorder %s373, %s374
      %p386 = scmp.eq.s32.totalorder %s37, 1
      %p387 = por %p385, %p386
      %p389 = scmp.ne.s32.totalorder %s374, %s388
      %p390 = scmp.eq.s32.totalorder %s37, 0
      %p391 = por %p389, %p390
      %s393 = sadd.s32 %s392, 1
      %p396 = scmp.eq.s32.totalorder %s31, 1
      %p397 = scmp.ne.s32.totalorder %s392, %s394
      %p398 = scmp.eq.s32.totalorder %s31, 0
      %p399 = por %p397, %p398
      %p400 = scmp.ne.s32.totalorder %s392, %s394
      %p401 = scmp.eq.s32.totalorder %s36, 1
      %p402 = por %p400, %p401
      %p403 = scmp.ne.s32.totalorder %s394, %s395
      %p404 = scmp.eq.s32.totalorder %s36, 0
      %p405 = por %p403, %p404
      %p406 = scmp.ne.s32.totalorder %s394, %s395
      %p407 = scmp.eq.s32.totalorder %s37, 1
      %p408 = por %p406, %p407
      %p410 = scmp.ne.s32.totalorder %s395, %s409
      %p411 = scmp.eq.s32.totalorder %s37, 0
      %p412 = por %p410, %p411
      %s413 = ssub.s32 %s38, %s50
      %s414 = ssub.s32 %s39, %s46
      %s415 = sor.u32 %s413, %s414
      %p416 = scmp.eq.s32.totalorder %s415, 0
      %s418 = sadd.s32 %s417, 1
      %s419 = scalar_select %p416, %s417, %s418
      %p422 = pneg %p416
      %p423 = scmp.eq.s32.totalorder %s31, 1
      %p424 = por %p422, %p423
      %p425 = scmp.ne.s32.totalorder %s417, %s420
      %p426 = scmp.eq.s32.totalorder %s31, 0
      %p427 = por %p425, %p426
      %p428 = scmp.ne.s32.totalorder %s417, %s420
      %p429 = scmp.eq.s32.totalorder %s36, 1
      %p430 = por %p428, %p429
      %p431 = scmp.ne.s32.totalorder %s420, %s421
      %p432 = scmp.eq.s32.totalorder %s36, 0
      %p433 = por %p431, %p432
      %p434 = scmp.ne.s32.totalorder %s420, %s421
      %p435 = scmp.eq.s32.totalorder %s37, 1
      %p436 = por %p434, %p435
      %p438 = scmp.ne.s32.totalorder %s421, %s437
      %p439 = scmp.eq.s32.totalorder %s37, 0
      %p440 = por %p438, %p439
      %p441 = scmp.le.s32.totalorder 1, %s31
      %p442 = scmp.lt.s32.totalorder %s31, 3
      %p443 = pnand %p441, %p442
      %p444 = pneg %p443
      // Predicated region
      $region9: #{tpu_custom_call.1} parent=5 // pred_check
        _
      $region10: #{tpu_custom_call.1} parent=5 // pred_check_branch
        %446 = sbr.rel (%p443) target = $region12
      $region11: #{tpu_custom_call.1} parent=5 // pred_region
        %s447 = ssub.s32 %s31, 1
        // Predicated region
        $region13: #{tpu_custom_call.1} parent=11 // pred_check
          %p448 = pneg %p90
        $region14: #{tpu_custom_call.1} parent=11 // pred_check_branch
          %450 = sbr.rel (%p448) target = $region16
        $region15: #{tpu_custom_call.1} parent=11 // pred_region
          _
        $region16: #{tpu_custom_call.1} parent=11 // pred_fallthru
          _
        // Predicated region
        $region17: #{tpu_custom_call.1} parent=11 // pred_check
          %p451 = pneg %p111
        $region18: #{tpu_custom_call.1} parent=11 // pred_check_branch
          %453 = sbr.rel (%p451) target = $region20
        $region19: #{tpu_custom_call.1} parent=11 // pred_region
          %s455 = ssub.s32 16, 16
          %456 = vsyncadd [#allocation6], %s455
          %s458 = sshll.u32 [#allocation5], 4
          %s459 = int_to_ptr.vmem [resolvable:$true] %s458
          %461 = dma.hbm_to_vmem [thread:$0]  %s2, 16, %s459, [#allocation6]
        $region20: #{tpu_custom_call.1} parent=11 // pred_fallthru
          _
        // Predicated region
        $region21: #{tpu_custom_call.1} parent=11 // pred_check
          %p462 = pneg %p132
        $region22: #{tpu_custom_call.1} parent=11 // pred_check_branch
          %464 = sbr.rel (%p462) target = $region24
        $region23: #{tpu_custom_call.1} parent=11 // pred_region
          _
        $region24: #{tpu_custom_call.1} parent=11 // pred_fallthru
          _
        // Predicated region
        $region25: #{tpu_custom_call.1} parent=11 // pred_check
          %p465 = pneg %p153
        $region26: #{tpu_custom_call.1} parent=11 // pred_check_branch
          %467 = sbr.rel (%p465) target = $region28
        $region27: #{tpu_custom_call.1} parent=11 // pred_region
          _
        $region28: #{tpu_custom_call.1} parent=11 // pred_fallthru
          _
        // Predicated region
        $region29: #{tpu_custom_call.1} parent=11 // pred_check
          %p468 = pneg %p174
        $region30: #{tpu_custom_call.1} parent=11 // pred_check_branch
          %470 = sbr.rel (%p468) target = $region32
        $region31: #{tpu_custom_call.1} parent=11 // pred_region
          %s472 = ssub.s32 256, 256
          %473 = vsyncadd [#allocation9], %s472
          %s474 = sshll.u32 [#allocation8], 4
          %s475 = int_to_ptr.vmem [resolvable:$true] %s474
          %480 = dma.hbm_to_vmem [thread:$0]  %s5, 256, %s475, [#allocation9], 64, 64, 4
        $region32: #{tpu_custom_call.1} parent=11 // pred_fallthru
          _
        // Predicated region
        $region33: #{tpu_custom_call.1} parent=11 // pred_check
          %p481 = pneg %p195
        $region34: #{tpu_custom_call.1} parent=11 // pred_check_branch
          %483 = sbr.rel (%p481) target = $region36
        $region35: #{tpu_custom_call.1} parent=11 // pred_region
          %s485 = ssub.s32 16, 16
          %486 = vsyncadd [#allocation9], %s485
          %s488 = sshll.u32 [#allocation10], 4
          %s489 = int_to_ptr.vmem [resolvable:$true] %s488
          %491 = dma.hbm_to_vmem [thread:$0]  %s6, 16, %s489, [#allocation9]
        $region36: #{tpu_custom_call.1} parent=11 // pred_fallthru
          _
        // Predicated region
        $region37: #{tpu_custom_call.1} parent=11 // pred_check
          %p492 = pneg %p216
        $region38: #{tpu_custom_call.1} parent=11 // pred_check_branch
          %494 = sbr.rel (%p492) target = $region40
        $region39: #{tpu_custom_call.1} parent=11 // pred_region
          %s496 = ssub.s32 16, 16
          %497 = vsyncadd [#allocation12], %s496
          %s499 = sshll.u32 [#allocation11], 4
          %s500 = int_to_ptr.vmem [resolvable:$true] %s499
          %502 = dma.hbm_to_vmem [thread:$0]  %s7, 16, %s500, [#allocation12]
        $region40: #{tpu_custom_call.1} parent=11 // pred_fallthru
          _
        // Predicated region
        $region41: #{tpu_custom_call.1} parent=11 // pred_check
          %p503 = pneg %p237
        $region42: #{tpu_custom_call.1} parent=11 // pred_check_branch
          %505 = sbr.rel (%p503) target = $region44
        $region43: #{tpu_custom_call.1} parent=11 // pred_region
          %s507 = ssub.s32 16, 16
          %508 = vsyncadd [#allocation12], %s507
          %s510 = sshll.u32 [#allocation13], 4
          %s511 = int_to_ptr.vmem [resolvable:$true] %s510
          %513 = dma.hbm_to_vmem [thread:$0]  %s8, 16, %s511, [#allocation12]
        $region44: #{tpu_custom_call.1} parent=11 // pred_fallthru
          _
        // Predicated region
        $region45: #{tpu_custom_call.1} parent=11 // pred_check
          %p514 = pneg %p258
        $region46: #{tpu_custom_call.1} parent=11 // pred_check_branch
          %516 = sbr.rel (%p514) target = $region48
        $region47: #{tpu_custom_call.1} parent=11 // pred_region
          _
        $region48: #{tpu_custom_call.1} parent=11 // pred_fallthru
          _
        // Predicated region
        $region49: #{tpu_custom_call.1} parent=11 // pred_check
          %p517 = pneg %p279
        $region50: #{tpu_custom_call.1} parent=11 // pred_check_branch
          %519 = sbr.rel (%p517) target = $region52
        $region51: #{tpu_custom_call.1} parent=11 // pred_region
          %s521 = ssub.s32 16, 16
          %522 = vsyncadd [#allocation15], %s521
          %s524 = sshll.u32 [#allocation14], 4
          %s525 = int_to_ptr.vmem [resolvable:$true] %s524
          %527 = dma.hbm_to_vmem [thread:$0]  %s10, 16, %s525, [#allocation15]
        $region52: #{tpu_custom_call.1} parent=11 // pred_fallthru
          _
        // Predicated region
        $region53: #{tpu_custom_call.1} parent=11 // pred_check
          %p528 = pneg %p300
        $region54: #{tpu_custom_call.1} parent=11 // pred_check_branch
          %530 = sbr.rel (%p528) target = $region56
        $region55: #{tpu_custom_call.1} parent=11 // pred_region
          %s532 = ssub.s32 16, 16
          %533 = vsyncadd [#allocation15], %s532
          %s535 = sshll.u32 [#allocation16], 4
          %s536 = int_to_ptr.vmem [resolvable:$true] %s535
          %538 = dma.hbm_to_vmem [thread:$0]  %s11, 16, %s536, [#allocation15]
        $region56: #{tpu_custom_call.1} parent=11 // pred_fallthru
          _
        // Predicated region
        $region57: #{tpu_custom_call.1} parent=11 // pred_check
          %p539 = pneg %p321
        $region58: #{tpu_custom_call.1} parent=11 // pred_check_branch
          %541 = sbr.rel (%p539) target = $region60
        $region59: #{tpu_custom_call.1} parent=11 // pred_region
          %s543 = ssub.s32 16, 16
          %544 = vsyncadd [#allocation18], %s543
          %s546 = sshll.u32 [#allocation17], 4
          %s547 = int_to_ptr.vmem [resolvable:$true] %s546
          %549 = dma.hbm_to_vmem [thread:$0]  %s12, 16, %s547, [#allocation18]
        $region60: #{tpu_custom_call.1} parent=11 // pred_fallthru
          _
        // Predicated region
        $region61: #{tpu_custom_call.1} parent=11 // pred_check
          %p550 = pneg %p342
        $region62: #{tpu_custom_call.1} parent=11 // pred_check_branch
          %552 = sbr.rel (%p550) target = $region64
        $region63: #{tpu_custom_call.1} parent=11 // pred_region
          _
        $region64: #{tpu_custom_call.1} parent=11 // pred_fallthru
          _
        // Predicated region
        $region65: #{tpu_custom_call.1} parent=11 // pred_check
          %p553 = pneg %p363
        $region66: #{tpu_custom_call.1} parent=11 // pred_check_branch
          %555 = sbr.rel (%p553) target = $region68
        $region67: #{tpu_custom_call.1} parent=11 // pred_region
          _
        $region68: #{tpu_custom_call.1} parent=11 // pred_fallthru
          _
        // Predicated region
        $region69: #{tpu_custom_call.1} parent=11 // pred_check
          %p556 = pneg %p384
        $region70: #{tpu_custom_call.1} parent=11 // pred_check_branch
          %558 = sbr.rel (%p556) target = $region72
        $region71: #{tpu_custom_call.1} parent=11 // pred_region
          _
        $region72: #{tpu_custom_call.1} parent=11 // pred_fallthru
          _
        // Predicated region
        $region73: #{tpu_custom_call.1} parent=11 // pred_check
          %p559 = pneg %p405
        $region74: #{tpu_custom_call.1} parent=11 // pred_check_branch
          %561 = sbr.rel (%p559) target = $region76
        $region75: #{tpu_custom_call.1} parent=11 // pred_region
          _
        $region76: #{tpu_custom_call.1} parent=11 // pred_fallthru
          _
      $region12: #{tpu_custom_call.1} parent=5 // pred_fallthru
        _
      %p562 = scmp.lt.s32.totalorder %s31, 2
      // Predicated region
      $region77: #{tpu_custom_call.1} parent=5 // pred_check
        %p563 = pneg %p562
      $region78: #{tpu_custom_call.1} parent=5 // pred_check_branch
        %565 = sbr.rel (%p563) target = $region80
      $region79: #{tpu_custom_call.1} parent=5 // pred_region
        // Predicated region
        $region81: #{tpu_custom_call.1} parent=79 // pred_check
          %p566 = pneg %p63
        $region82: #{tpu_custom_call.1} parent=79 // pred_check_branch
          %568 = sbr.rel (%p566) target = $region84
        $region83: #{tpu_custom_call.1} parent=79 // pred_region
          %p569 = scmp.lt.s32.totalorder %s38, 1
          %s570 = scalar_select %p569, %s38, 1
          %s571 = smul.addr %s570, 8
          %s572 = scalar_lea.vmem %s0, %s571
        $region84: #{tpu_custom_call.1} parent=79 // pred_fallthru
          _
      $region80: #{tpu_custom_call.1} parent=5 // pred_fallthru
        _
      %p573 = scmp.le.s32.totalorder 1, %s31
      %p574 = scmp.lt.s32.totalorder %s31, 3
      %p575 = pnand %p573, %p574
      %p576 = pneg %p575
      // Predicated region
      $region85: #{tpu_custom_call.1} parent=5 // pred_check
        _
      $region86: #{tpu_custom_call.1} parent=5 // pred_check_branch
        %578 = sbr.rel (%p575) target = $region88
      $region87: #{tpu_custom_call.1} parent=5 // pred_region
        %s579 = ssub.s32 %s31, 1
        // Predicated region
        $region89: #{tpu_custom_call.1} parent=87 // pred_check
          %p580 = pneg %p111
        $region90: #{tpu_custom_call.1} parent=87 // pred_check_branch
          %582 = sbr.rel (%p580) target = $region92
        $region91: #{tpu_custom_call.1} parent=87 // pred_region
          %583 = dma.done [#allocation6], 16
        $region92: #{tpu_custom_call.1} parent=87 // pred_fallthru
          _
        // Predicated region
        $region93: #{tpu_custom_call.1} parent=87 // pred_check
          %p584 = pneg %p174
        $region94: #{tpu_custom_call.1} parent=87 // pred_check_branch
          %586 = sbr.rel (%p584) target = $region96
        $region95: #{tpu_custom_call.1} parent=87 // pred_region
          %587 = dma.done [#allocation9], 256
        $region96: #{tpu_custom_call.1} parent=87 // pred_fallthru
          _
        // Predicated region
        $region97: #{tpu_custom_call.1} parent=87 // pred_check
          %p588 = pneg %p195
        $region98: #{tpu_custom_call.1} parent=87 // pred_check_branch
          %590 = sbr.rel (%p588) target = $region100
        $region99: #{tpu_custom_call.1} parent=87 // pred_region
          %591 = dma.done [#allocation9], 16
        $region100: #{tpu_custom_call.1} parent=87 // pred_fallthru
          _
        // Predicated region
        $region101: #{tpu_custom_call.1} parent=87 // pred_check
          %p592 = pneg %p216
        $region102: #{tpu_custom_call.1} parent=87 // pred_check_branch
          %594 = sbr.rel (%p592) target = $region104
        $region103: #{tpu_custom_call.1} parent=87 // pred_region
          %595 = dma.done [#allocation12], 16
        $region104: #{tpu_custom_call.1} parent=87 // pred_fallthru
          _
        // Predicated region
        $region105: #{tpu_custom_call.1} parent=87 // pred_check
          %p596 = pneg %p237
        $region106: #{tpu_custom_call.1} parent=87 // pred_check_branch
          %598 = sbr.rel (%p596) target = $region108
        $region107: #{tpu_custom_call.1} parent=87 // pred_region
          %599 = dma.done [#allocation12], 16
        $region108: #{tpu_custom_call.1} parent=87 // pred_fallthru
          _
        // Predicated region
        $region109: #{tpu_custom_call.1} parent=87 // pred_check
          %p600 = pneg %p279
        $region110: #{tpu_custom_call.1} parent=87 // pred_check_branch
          %602 = sbr.rel (%p600) target = $region112
        $region111: #{tpu_custom_call.1} parent=87 // pred_region
          %603 = dma.done [#allocation15], 16
        $region112: #{tpu_custom_call.1} parent=87 // pred_fallthru
          _
        // Predicated region
        $region113: #{tpu_custom_call.1} parent=87 // pred_check
          %p604 = pneg %p300
        $region114: #{tpu_custom_call.1} parent=87 // pred_check_branch
          %606 = sbr.rel (%p604) target = $region116
        $region115: #{tpu_custom_call.1} parent=87 // pred_region
          %607 = dma.done [#allocation15], 16
        $region116: #{tpu_custom_call.1} parent=87 // pred_fallthru
          _
        // Predicated region
        $region117: #{tpu_custom_call.1} parent=87 // pred_check
          %p608 = pneg %p321
        $region118: #{tpu_custom_call.1} parent=87 // pred_check_branch
          %610 = sbr.rel (%p608) target = $region120
        $region119: #{tpu_custom_call.1} parent=87 // pred_region
          %611 = dma.done [#allocation18], 16
        $region120: #{tpu_custom_call.1} parent=87 // pred_fallthru
          _
        %p612 = scmp.lt.s32.totalorder %s40, 1
        %s613 = scalar_select %p612, %s40, 1
        %s614 = smul.addr %s613, 8
        %s615 = scalar_lea.vmem %s0, %s614
        %p616 = pneg %p69
        %p617 = pneg %p66
        %p618 = pneg %p90
        %p619 = pneg %p87
        %p620 = pneg %p111
        %p621 = pneg %p108
        %p622 = pneg %p132
        %p623 = pneg %p129
        %p624 = pneg %p153
        %p625 = pneg %p150
        %p626 = pneg %p174
        %p627 = pneg %p171
        %p628 = pneg %p195
        %p629 = pneg %p192
        %p630 = pneg %p216
        %p631 = pneg %p213
        %p632 = pneg %p237
        %p633 = pneg %p234
        %p634 = pneg %p258
        %p635 = pneg %p255
        %p636 = pneg %p279
        %p637 = pneg %p276
        %p638 = pneg %p300
        %p639 = pneg %p297
        %p640 = pneg %p321
        %p641 = pneg %p318
        %p642 = pneg %p342
        %p643 = pneg %p339
        %p644 = pneg %p363
        %p645 = pneg %p360
        %p646 = pneg %p384
        %p647 = pneg %p381
        %p648 = pneg %p405
        %p649 = pneg %p402
        %p650 = pneg %p433
        %p651 = pneg %p430
        %s652 = sand.u32 %s420, 1
        %s653 = scalar_lea.sflag [#allocation7], %s652
        %s654 = sand.u32 %s420, 1
        %s655 = smul.addr %s654, 8
        %s656 = scalar_lea.vmem [#allocation19], %s655
        %p657 = scmp.lt.s32.totalorder %s40, 1
        %s658 = scalar_select %p657, %s40, 1
        %s659 = smul.addr %s658, 8
        %s660 = scalar_lea.vmem %s0, %s659
        %p662 = scmp.eq.s32.totalorder %s41, 0
        // Predicated region
        $region121: #{tpu_custom_call.1} parent=87 // pred_check
          %p663 = pneg %p662
        $region122: #{tpu_custom_call.1} parent=87 // pred_check_branch
          %665 = sbr.rel (%p663) target = $region124
        $region123: #{tpu_custom_call.1} parent=87 // pred_region
          %v666 = vld [vmem:[%s660] sm:$0xff]
          %v667 = vld [vmem:[%s1] sm:$0x1]
          %v668 = vld [vmem:[#allocation5] sm:$0x1]
          %vm669 = vcmask 261120
          %v670 = vsel %vm669, %v666, 0.0
          %671 = vadd.xlane.f32.xlu0 %v670
          %v672 = vpop.xlane.xlu0 %671
          %v673 = vrcp.pop 32.0
          %v674 = vmul.f32 %v672, %v673
          %v675 = vsub.f32 %v666, %v674
          %v676 = vmul.f32 %v675, %v675
          %v677 = vsel %vm669, %v676, 0.0
          %678 = vadd.xlane.f32.xlu0 %v677
          %v679 = vpop.xlane.xlu0 %678
          %v680 = vmul.f32 %v679, %v673
          %v681 = vadd.f32 %v680, 1e-05
          %v682 = vrsqrt.pop %v681
          %v683 = vmul.f32 %v675, %v682
          %v685 = vlaneseq
          %v686 = vshrl.u32 %v685, 7
          %v687 = vsub.s32 0, %v686
          %v688 = vrot.slane %v667, %v687
          %v690 = vmul.f32 %v683, %v688
          %v692 = vlaneseq
          %v693 = vshrl.u32 %v692, 7
          %v694 = vsub.s32 0, %v693
          %v695 = vrot.slane %v668, %v694
          %v697 = vadd.f32 %v690, %v695
          %v698 = vpack.c.bf16 %v697, %v697
          %vm699 = vcmask 257024
          %700 = vst.msk [vmem:[#allocation2] sm:$0xf] %vm699, %v698
          %v701 = vld [vmem:[%s4] sm:$0xf]
          %v702 = vld [vmem:[%s4 + $0x4] sm:$0xf]
          %v703 = vld [vmem:[%s4 + $0x8] sm:$0xf]
          %v704 = vld [vmem:[%s4 + $0xc] sm:$0xf]
          %v705 = vld [vmem:[#allocation11] sm:$0x1]
          %v707 = vlaneseq
          %v708 = vshrl.u32 %v707, 7
          %v709 = vsub.s32 0, %v708
          %v710 = vrot.slane %v705, %v709
          %v716 = vunpack.c.l.b16 %v701
          %v717 = vunpack.c.l.b16 %v702
          %v718 = vunpack.c.l.b16 %v703
          %v719 = vunpack.c.l.b16 %v704
          %v720 = vpack.c.b16 %v717, %v716
          %v721 = vpack.c.b16 %v719, %v718
          %v725 = vsel %vm669, %v698, 0
          %727 = vmatprep.subr.bf16.mxu0 0
          %728 = vmatpush1.bf16.msra.mxu0 %v720
          %729 = vmatprep.subr.bf16.mxu0 0
          %730 = vmatpush1.bf16.msra.mxu0 %v721
          %731 = vmatprep.subr.bf16.mxu0 0
          %732 = vmatpush1.bf16.msra.mxu0 0
          %733 = vmatprep.subr.bf16.mxu0 0
          %734 = vmatpush1.bf16.msra.mxu0 0
          %735 = vmatprep.subr.bf16.mxu0 0
          %736 = vmatpush1.bf16.msra.mxu0 0
          %737 = vmatprep.subr.bf16.mxu0 0
          %738 = vmatpush1.bf16.msra.mxu0 0
          %739 = vmatprep.subr.bf16.mxu0 0
          %740 = vmatpush1.bf16.msra.mxu0 0
          %741 = vmatprep.subr.bf16.mxu0 0
          %742 = vmatpush1.bf16.msra.mxu0 0
          %743 = vmatprep.subr.bf16.mxu0 0
          %744 = vmatpush1.bf16.msra.mxu0 0
          %745 = vmatprep.subr.bf16.mxu0 0
          %746 = vmatpush1.bf16.msra.mxu0 0
          %747 = vmatprep.subr.bf16.mxu0 0
          %748 = vmatpush1.bf16.msra.mxu0 0
          %749 = vmatprep.subr.bf16.mxu0 0
          %750 = vmatpush1.bf16.msra.mxu0 0
          %751 = vmatprep.subr.bf16.mxu0 0
          %752 = vmatpush1.bf16.msra.mxu0 0
          %753 = vmatprep.subr.bf16.mxu0 0
          %754 = vmatpush1.bf16.msra.mxu0 0
          %755 = vmatprep.subr.bf16.mxu0 0
          %756 = vmatpush1.bf16.msra.mxu0 0
          %757 = vmatprep.subr.bf16.mxu0 0
          %758 = vmatpush1.bf16.msra.mxu0 0
          %759 = vmatprep.mubr.bf16.mxu0 0
          %760 = vmatmul.mubr.bf16.gmra.mrb[0].mxu0 %v725
          %v761 = vpop.f32.mrb[0].mxu0
          %v762 = vadd.f32 %v710, %v761
          %v763 = vpop.f32.mrb[0].mxu0
          %v764 = vpop.f32.mrb[0].mxu0
          %v765 = vpop.f32.mrb[0].mxu0
          %766 = vdwg.mxu0
          %v767 = vld [vmem:[#allocation8] sm:$0xf]
          %v768 = vld [vmem:[#allocation8 + $0x4] sm:$0xf]
          %v769 = vld [vmem:[#allocation8 + $0x8] sm:$0xf]
          %v770 = vld [vmem:[#allocation8 + $0xc] sm:$0xf]
          %v771 = vld [vmem:[#allocation13] sm:$0x1]
          %v773 = vlaneseq
          %v774 = vshrl.u32 %v773, 7
          %v775 = vsub.s32 0, %v774
          %v776 = vrot.slane %v771, %v775
          %v782 = vunpack.c.l.b16 %v767
          %v783 = vunpack.c.l.b16 %v768
          %v784 = vunpack.c.l.b16 %v769
          %v785 = vunpack.c.l.b16 %v770
          %v786 = vpack.c.b16 %v783, %v782
          %v787 = vpack.c.b16 %v785, %v784
          %790 = vmatprep.subr.bf16.mxu0 0
          %791 = vmatpush1.bf16.msra.mxu0 %v786
          %792 = vmatprep.subr.bf16.mxu0 0
          %793 = vmatpush1.bf16.msra.mxu0 %v787
          %794 = vmatprep.subr.bf16.mxu0 0
          %795 = vmatpush1.bf16.msra.mxu0 0
          %796 = vmatprep.subr.bf16.mxu0 0
          %797 = vmatpush1.bf16.msra.mxu0 0
          %798 = vmatprep.subr.bf16.mxu0 0
          %799 = vmatpush1.bf16.msra.mxu0 0
          %800 = vmatprep.subr.bf16.mxu0 0
          %801 = vmatpush1.bf16.msra.mxu0 0
          %802 = vmatprep.subr.bf16.mxu0 0
          %803 = vmatpush1.bf16.msra.mxu0 0
          %804 = vmatprep.subr.bf16.mxu0 0
          %805 = vmatpush1.bf16.msra.mxu0 0
          %806 = vmatprep.subr.bf16.mxu0 0
          %807 = vmatpush1.bf16.msra.mxu0 0
          %808 = vmatprep.subr.bf16.mxu0 0
          %809 = vmatpush1.bf16.msra.mxu0 0
          %810 = vmatprep.subr.bf16.mxu0 0
          %811 = vmatpush1.bf16.msra.mxu0 0
          %812 = vmatprep.subr.bf16.mxu0 0
          %813 = vmatpush1.bf16.msra.mxu0 0
          %814 = vmatprep.subr.bf16.mxu0 0
          %815 = vmatpush1.bf16.msra.mxu0 0
          %816 = vmatprep.subr.bf16.mxu0 0
          %817 = vmatpush1.bf16.msra.mxu0 0
          %818 = vmatprep.subr.bf16.mxu0 0
          %819 = vmatpush1.bf16.msra.mxu0 0
          %820 = vmatprep.subr.bf16.mxu0 0
          %821 = vmatpush1.bf16.msra.mxu0 0
          %822 = vmatprep.mubr.bf16.mxu0 0
          %823 = vmatmul.mubr.bf16.gmra.mrb[0].mxu0 %v725
          %v824 = vpop.f32.mrb[0].mxu0
          %v825 = vadd.f32 %v776, %v824
          %v826 = vpop.f32.mrb[0].mxu0
          %v827 = vpop.f32.mrb[0].mxu0
          %v828 = vpop.f32.mrb[0].mxu0
          %829 = vdwg.mxu0
          %v830 = vpack.c.bf16 %v762, %v762
          %831 = vst.msk [vmem:[#allocation3] sm:$0xf] %vm699, %v830
          %v832 = vpack.c.bf16 %v825, %v825
          %833 = vst.msk [vmem:[#allocation4] sm:$0xf] %vm699, %v832
        $region124: #{tpu_custom_call.1} parent=87 // pred_fallthru
          _
        %s834 = smul.u32 %s41, 8
        %s835 = scalar_lea.vmem %s660, %s834
        %v836 = vld [vmem:[%s835] sm:$0xff]
        %s837 = sshra.s32 %s834, 3
        %s838 = sand.u32 %s834, 7
        %s839 = smul.addr %s837, 4
        %s840 = scalar_lea.vmem [#allocation2], %s839
        %v841 = vld [vmem:[%s840] sm:$0xf]
        %v842 = vld [vmem:[%s3] sm:$0xf]
        %v843 = vld [vmem:[%s3 + $0x4] sm:$0xf]
        %v844 = vld [vmem:[%s3 + $0x8] sm:$0xf]
        %v845 = vld [vmem:[%s3 + $0xc] sm:$0xf]
        %v846 = vld [vmem:[#allocation10] sm:$0x1]
        %v848 = vlaneseq
        %v849 = vshrl.u32 %v848, 7
        %v850 = vsub.s32 0, %v849
        %v851 = vrot.slane %v846, %v850
        %v857 = vunpack.c.l.b16 %v842
        %v858 = vunpack.c.l.b16 %v843
        %v859 = vunpack.c.l.b16 %v844
        %v860 = vunpack.c.l.b16 %v845
        %v861 = vpack.c.b16 %v858, %v857
        %v862 = vpack.c.b16 %v860, %v859
        %vm865 = vcmask 261120
        %v867 = vsel %vm865, %v841, 0
        %869 = vmatprep.subr.bf16.mxu0 0
        %870 = vmatpush1.bf16.msra.mxu0 %v861
        %871 = vmatprep.subr.bf16.mxu0 0
        %872 = vmatpush1.bf16.msra.mxu0 %v862
        %873 = vmatprep.subr.bf16.mxu0 0
        %874 = vmatpush1.bf16.msra.mxu0 0
        %875 = vmatprep.subr.bf16.mxu0 0
        %876 = vmatpush1.bf16.msra.mxu0 0
        %877 = vmatprep.subr.bf16.mxu0 0
        %878 = vmatpush1.bf16.msra.mxu0 0
        %879 = vmatprep.subr.bf16.mxu0 0
        %880 = vmatpush1.bf16.msra.mxu0 0
        %881 = vmatprep.subr.bf16.mxu0 0
        %882 = vmatpush1.bf16.msra.mxu0 0
        %883 = vmatprep.subr.bf16.mxu0 0
        %884 = vmatpush1.bf16.msra.mxu0 0
        %885 = vmatprep.subr.bf16.mxu0 0
        %886 = vmatpush1.bf16.msra.mxu0 0
        %887 = vmatprep.subr.bf16.mxu0 0
        %888 = vmatpush1.bf16.msra.mxu0 0
        %889 = vmatprep.subr.bf16.mxu0 0
        %890 = vmatpush1.bf16.msra.mxu0 0
        %891 = vmatprep.subr.bf16.mxu0 0
        %892 = vmatpush1.bf16.msra.mxu0 0
        %893 = vmatprep.subr.bf16.mxu0 0
        %894 = vmatpush1.bf16.msra.mxu0 0
        %895 = vmatprep.subr.bf16.mxu0 0
        %896 = vmatpush1.bf16.msra.mxu0 0
        %897 = vmatprep.subr.bf16.mxu0 0
        %898 = vmatpush1.bf16.msra.mxu0 0
        %899 = vmatprep.subr.bf16.mxu0 0
        %900 = vmatpush1.bf16.msra.mxu0 0
        %901 = vmatprep.mubr.bf16.mxu0 0
        %902 = vmatmul.mubr.bf16.gmra.mrb[0].mxu0 %v867
        %v903 = vpop.f32.mrb[0].mxu0
        %v904 = vadd.f32 %v851, %v903
        %v905 = vpop.f32.mrb[0].mxu0
        %v906 = vpop.f32.mrb[0].mxu0
        %v907 = vpop.f32.mrb[0].mxu0
        %908 = vdwg.mxu0
        %v909 = vmul.f32 %v904, 0.35355338
        %911 = vrot.lane.b32.xlu0 %v909, 120
        %v912 = vpop.permute.xlu0 %911
        %914 = vrot.lane.b32.xlu0 %v909, 112
        %v915 = vpop.permute.xlu0 %914
        %917 = vrot.lane.b32.xlu0 %v909, 104
        %v918 = vpop.permute.xlu0 %917
        %v920 = vcombine.low %v909, %v915
        %v921 = vcombine.high %v909, %v915
        %v923 = vunpack.c.l.s4 1983009808
        %v924 = vunpack.c.0.s8 %v923
        %v925 = vlaneseq
        %v926 = vshrl.u32 %v925, 7
        %v927 = vsub.s32 %v924, %v926
        %v928 = vrot.slane %v920, %v927
        %v930 = vunpack.c.l.s4 1983009808
        %v931 = vunpack.c.0.s8 %v930
        %v932 = vlaneseq
        %v933 = vshrl.u32 %v932, 7
        %v934 = vsub.s32 %v931, %v933
        %v935 = vrot.slane %v921, %v934
        %v936 = vcombine.low %v912, %v918
        %v937 = vcombine.high %v912, %v918
        %v939 = vunpack.c.l.s4 1983009808
        %v940 = vunpack.c.0.s8 %v939
        %v941 = vlaneseq
        %v942 = vshrl.u32 %v941, 7
        %v943 = vsub.s32 %v940, %v942
        %v944 = vrot.slane %v936, %v943
        %v946 = vunpack.c.l.s4 1983009808
        %v947 = vunpack.c.0.s8 %v946
        %v948 = vlaneseq
        %v949 = vshrl.u32 %v948, 7
        %v950 = vsub.s32 %v947, %v949
        %v951 = vrot.slane %v937, %v950
        %v952 = vcombine.low %v928, %v944
        %v953 = vcombine.high %v928, %v944
        %v955 = vunpack.c.l.s4 1934713408
        %v956 = vunpack.c.0.s8 %v955
        %v957 = vlaneseq
        %v958 = vshrl.u32 %v957, 7
        %v959 = vsub.s32 %v956, %v958
        %v960 = vrot.slane %v952, %v959
        %v962 = vunpack.c.l.s4 1934713408
        %v963 = vunpack.c.0.s8 %v962
        %v964 = vlaneseq
        %v965 = vshrl.u32 %v964, 7
        %v966 = vsub.s32 %v963, %v965
        %v967 = vrot.slane %v953, %v966
        %v968 = vcombine.low %v935, %v951
        %v969 = vcombine.high %v935, %v951
        %v971 = vunpack.c.l.s4 1934713408
        %v972 = vunpack.c.0.s8 %v971
        %v973 = vlaneseq
        %v974 = vshrl.u32 %v973, 7
        %v975 = vsub.s32 %v972, %v974
        %v976 = vrot.slane %v968, %v975
        %v978 = vunpack.c.l.s4 1934713408
        %v979 = vunpack.c.0.s8 %v978
        %v980 = vlaneseq
        %v981 = vshrl.u32 %v980, 7
        %v982 = vsub.s32 %v979, %v981
        %v983 = vrot.slane %v969, %v982
        %v984 = vcombine.high %v960, 0.0
        %v985 = vcombine.high %v967, 0.0
        %v986 = vcombine.high %v976, 0.0
        %v987 = vcombine.high %v983, 0.0
        %v988 = vcombine.low %v960, %v967
        %v990 = vunpack.c.l.s4 1983009808
        %v991 = vunpack.c.0.s8 %v990
        %v992 = vlaneseq
        %v993 = vshrl.u32 %v992, 7
        %v994 = vsub.s32 %v991, %v993
        %v995 = vrot.slane %v988, %v994
        %v996 = vcombine.low %v984, %v985
        %v998 = vunpack.c.l.s4 1983009808
        %v999 = vunpack.c.0.s8 %v998
        %v1000 = vlaneseq
        %v1001 = vshrl.u32 %v1000, 7
        %v1002 = vsub.s32 %v999, %v1001
        %v1003 = vrot.slane %v996, %v1002
        %v1004 = vcombine.low %v976, %v983
        %v1006 = vunpack.c.l.s4 1983009808
        %v1007 = vunpack.c.0.s8 %v1006
        %v1008 = vlaneseq
        %v1009 = vshrl.u32 %v1008, 7
        %v1010 = vsub.s32 %v1007, %v1009
        %v1011 = vrot.slane %v1004, %v1010
        %v1012 = vcombine.low %v986, %v987
        %v1014 = vunpack.c.l.s4 1983009808
        %v1015 = vunpack.c.0.s8 %v1014
        %v1016 = vlaneseq
        %v1017 = vshrl.u32 %v1016, 7
        %v1018 = vsub.s32 %v1015, %v1017
        %v1019 = vrot.slane %v1012, %v1018
        %v1020 = vcombine.low %v995, %v1003
        %v1021 = vcombine.high %v995, %v1003
        %v1023 = vunpack.c.l.s4 1934713408
        %v1024 = vunpack.c.0.s8 %v1023
        %v1025 = vlaneseq
        %v1026 = vshrl.u32 %v1025, 7
        %v1027 = vsub.s32 %v1024, %v1026
        %v1028 = vrot.slane %v1020, %v1027
        %v1030 = vunpack.c.l.s4 1934713408
        %v1031 = vunpack.c.0.s8 %v1030
        %v1032 = vlaneseq
        %v1033 = vshrl.u32 %v1032, 7
        %v1034 = vsub.s32 %v1031, %v1033
        %v1035 = vrot.slane %v1021, %v1034
        %v1036 = vcombine.low %v1011, %v1019
        %v1037 = vcombine.high %v1011, %v1019
        %v1039 = vunpack.c.l.s4 1934713408
        %v1040 = vunpack.c.0.s8 %v1039
        %v1041 = vlaneseq
        %v1042 = vshrl.u32 %v1041, 7
        %v1043 = vsub.s32 %v1040, %v1042
        %v1044 = vrot.slane %v1036, %v1043
        %v1046 = vunpack.c.l.s4 1934713408
        %v1047 = vunpack.c.0.s8 %v1046
        %v1048 = vlaneseq
        %v1049 = vshrl.u32 %v1048, 7
        %v1050 = vsub.s32 %v1047, %v1049
        %v1051 = vrot.slane %v1037, %v1050
        %v1052 = vcombine.low %v1028, %v1044
        %v1053 = vcombine.high %v1028, %v1044
        %v1054 = vcombine.low %v1035, %v1051
        %v1055 = vcombine.high %v1035, %v1051
        %v1056 = vpack.c.bf16 %v1052, %v1052
        %v1057 = vpack.c.bf16 %v1053, %v1053
        %v1058 = vpack.c.bf16 %v1054, %v1054
        %v1059 = vpack.c.bf16 %v1055, %v1055
        %v1060 = vld [vmem:[#allocation3] sm:$0xf]
        %v1061 = vld [vmem:[#allocation4] sm:$0xf]
        %1063 = vrot.lane.b32.xlu0 %v1060, 120
        %v1064 = vpop.permute.xlu0 %1063
        %1065 = vrot.lane.b32.xlu0 %v1060, 112
        %v1066 = vpop.permute.xlu0 %1065
        %1067 = vrot.lane.b32.xlu0 %v1060, 104
        %v1068 = vpop.permute.xlu0 %1067
        %v1071 = vpack.i.b16 %v1064, %v1060
        %v1072 = vshrl.u32 %v1060, 16
        %v1073 = vshrl.u32 %v1064, 16
        %v1074 = vpack.i.b16 %v1073, %v1072
        %v1077 = vpack.i.b16 %v1068, %v1066
        %v1078 = vshrl.u32 %v1066, 16
        %v1079 = vshrl.u32 %v1068, 16
        %v1080 = vpack.i.b16 %v1079, %v1078
        %v1083 = vunpack.c.l.s4 1983009808
        %v1084 = vunpack.c.0.s8 %v1083
        %v1085 = vlaneseq
        %v1086 = vshrl.u32 %v1085, 7
        %v1087 = vsub.s32 %v1084, %v1086
        %v1088 = vrot.slane %v1071, %v1087
        %v1091 = vunpack.c.l.s4 1983009808
        %v1092 = vunpack.c.0.s8 %v1091
        %v1093 = vlaneseq
        %v1094 = vshrl.u32 %v1093, 7
        %v1095 = vsub.s32 %v1092, %v1094
        %v1096 = vrot.slane %v1077, %v1095
        %v1097 = vcombine.low %v1088, %v1096
        %v1098 = vcombine.high %v1088, %v1096
        %v1100 = vunpack.c.l.s4 1934713408
        %v1101 = vunpack.c.0.s8 %v1100
        %v1102 = vlaneseq
        %v1103 = vshrl.u32 %v1102, 7
        %v1104 = vsub.s32 %v1101, %v1103
        %v1105 = vrot.slane %v1097, %v1104
        %v1107 = vunpack.c.l.s4 1934713408
        %v1108 = vunpack.c.0.s8 %v1107
        %v1109 = vlaneseq
        %v1110 = vshrl.u32 %v1109, 7
        %v1111 = vsub.s32 %v1108, %v1110
        %v1112 = vrot.slane %v1098, %v1111
        %v1113 = vcombine.high %v1105, 0
        %v1114 = vcombine.high %v1112, 0
        %v1117 = vunpack.c.l.s4 1983009808
        %v1118 = vunpack.c.0.s8 %v1117
        %v1119 = vlaneseq
        %v1120 = vshrl.u32 %v1119, 7
        %v1121 = vsub.s32 %v1118, %v1120
        %v1122 = vrot.slane %v1074, %v1121
        %v1125 = vunpack.c.l.s4 1983009808
        %v1126 = vunpack.c.0.s8 %v1125
        %v1127 = vlaneseq
        %v1128 = vshrl.u32 %v1127, 7
        %v1129 = vsub.s32 %v1126, %v1128
        %v1130 = vrot.slane %v1080, %v1129
        %v1131 = vcombine.low %v1122, %v1130
        %v1132 = vcombine.high %v1122, %v1130
        %v1134 = vunpack.c.l.s4 1934713408
        %v1135 = vunpack.c.0.s8 %v1134
        %v1136 = vlaneseq
        %v1137 = vshrl.u32 %v1136, 7
        %v1138 = vsub.s32 %v1135, %v1137
        %v1139 = vrot.slane %v1131, %v1138
        %v1141 = vunpack.c.l.s4 1934713408
        %v1142 = vunpack.c.0.s8 %v1141
        %v1143 = vlaneseq
        %v1144 = vshrl.u32 %v1143, 7
        %v1145 = vsub.s32 %v1142, %v1144
        %v1146 = vrot.slane %v1132, %v1145
        %v1147 = vcombine.high %v1139, 0
        %v1148 = vcombine.high %v1146, 0
        %v1149 = vcombine.low %v1105, %v1112
        %v1151 = vunpack.c.l.s4 1983009808
        %v1152 = vunpack.c.0.s8 %v1151
        %v1153 = vlaneseq
        %v1154 = vshrl.u32 %v1153, 7
        %v1155 = vsub.s32 %v1152, %v1154
        %v1156 = vrot.slane %v1149, %v1155
        %v1157 = vcombine.low %v1113, %v1114
        %v1159 = vunpack.c.l.s4 1983009808
        %v1160 = vunpack.c.0.s8 %v1159
        %v1161 = vlaneseq
        %v1162 = vshrl.u32 %v1161, 7
        %v1163 = vsub.s32 %v1160, %v1162
        %v1164 = vrot.slane %v1157, %v1163
        %v1165 = vcombine.low %v1156, %v1164
        %v1167 = vunpack.c.l.s4 1934713408
        %v1168 = vunpack.c.0.s8 %v1167
        %v1169 = vlaneseq
        %v1170 = vshrl.u32 %v1169, 7
        %v1171 = vsub.s32 %v1168, %v1170
        %v1172 = vrot.slane %v1165, %v1171
        %v1173 = vcombine.high %v1172, 0
        %v1174 = vcombine.low %v1139, %v1146
        %v1176 = vunpack.c.l.s4 1983009808
        %v1177 = vunpack.c.0.s8 %v1176
        %v1178 = vlaneseq
        %v1179 = vshrl.u32 %v1178, 7
        %v1180 = vsub.s32 %v1177, %v1179
        %v1181 = vrot.slane %v1174, %v1180
        %v1182 = vcombine.low %v1147, %v1148
        %v1184 = vunpack.c.l.s4 1983009808
        %v1185 = vunpack.c.0.s8 %v1184
        %v1186 = vlaneseq
        %v1187 = vshrl.u32 %v1186, 7
        %v1188 = vsub.s32 %v1185, %v1187
        %v1189 = vrot.slane %v1182, %v1188
        %v1190 = vcombine.low %v1181, %v1189
        %v1192 = vunpack.c.l.s4 1934713408
        %v1193 = vunpack.c.0.s8 %v1192
        %v1194 = vlaneseq
        %v1195 = vshrl.u32 %v1194, 7
        %v1196 = vsub.s32 %v1193, %v1195
        %v1197 = vrot.slane %v1190, %v1196
        %v1198 = vcombine.high %v1197, 0
        %v1201 = vpack.i.b16 %v1197, %v1172
        %v1202 = vshrl.u32 %v1172, 16
        %v1203 = vshrl.u32 %v1197, 16
        %v1204 = vpack.i.b16 %v1203, %v1202
        %v1207 = vpack.i.b16 %v1198, %v1173
        %v1208 = vshrl.u32 %v1173, 16
        %v1209 = vshrl.u32 %v1198, 16
        %v1210 = vpack.i.b16 %v1209, %v1208
        %1212 = vrot.lane.b32.xlu0 %v1061, 120
        %v1213 = vpop.permute.xlu0 %1212
        %1214 = vrot.lane.b32.xlu0 %v1061, 112
        %v1215 = vpop.permute.xlu0 %1214
        %1216 = vrot.lane.b32.xlu0 %v1061, 104
        %v1217 = vpop.permute.xlu0 %1216
        %v1220 = vpack.i.b16 %v1213, %v1061
        %v1221 = vshrl.u32 %v1061, 16
        %v1222 = vshrl.u32 %v1213, 16
        %v1223 = vpack.i.b16 %v1222, %v1221
        %v1226 = vpack.i.b16 %v1217, %v1215
        %v1227 = vshrl.u32 %v1215, 16
        %v1228 = vshrl.u32 %v1217, 16
        %v1229 = vpack.i.b16 %v1228, %v1227
        %v1232 = vunpack.c.l.s4 1983009808
        %v1233 = vunpack.c.0.s8 %v1232
        %v1234 = vlaneseq
        %v1235 = vshrl.u32 %v1234, 7
        %v1236 = vsub.s32 %v1233, %v1235
        %v1237 = vrot.slane %v1220, %v1236
        %v1240 = vunpack.c.l.s4 1983009808
        %v1241 = vunpack.c.0.s8 %v1240
        %v1242 = vlaneseq
        %v1243 = vshrl.u32 %v1242, 7
        %v1244 = vsub.s32 %v1241, %v1243
        %v1245 = vrot.slane %v1226, %v1244
        %v1246 = vcombine.low %v1237, %v1245
        %v1247 = vcombine.high %v1237, %v1245
        %v1249 = vunpack.c.l.s4 1934713408
        %v1250 = vunpack.c.0.s8 %v1249
        %v1251 = vlaneseq
        %v1252 = vshrl.u32 %v1251, 7
        %v1253 = vsub.s32 %v1250, %v1252
        %v1254 = vrot.slane %v1246, %v1253
        %v1256 = vunpack.c.l.s4 1934713408
        %v1257 = vunpack.c.0.s8 %v1256
        %v1258 = vlaneseq
        %v1259 = vshrl.u32 %v1258, 7
        %v1260 = vsub.s32 %v1257, %v1259
        %v1261 = vrot.slane %v1247, %v1260
        %v1262 = vcombine.high %v1254, 0
        %v1263 = vcombine.high %v1261, 0
        %v1266 = vunpack.c.l.s4 1983009808
        %v1267 = vunpack.c.0.s8 %v1266
        %v1268 = vlaneseq
        %v1269 = vshrl.u32 %v1268, 7
        %v1270 = vsub.s32 %v1267, %v1269
        %v1271 = vrot.slane %v1223, %v1270
        %v1274 = vunpack.c.l.s4 1983009808
        %v1275 = vunpack.c.0.s8 %v1274
        %v1276 = vlaneseq
        %v1277 = vshrl.u32 %v1276, 7
        %v1278 = vsub.s32 %v1275, %v1277
        %v1279 = vrot.slane %v1229, %v1278
        %v1280 = vcombine.low %v1271, %v1279
        %v1281 = vcombine.high %v1271, %v1279
        %v1283 = vunpack.c.l.s4 1934713408
        %v1284 = vunpack.c.0.s8 %v1283
        %v1285 = vlaneseq
        %v1286 = vshrl.u32 %v1285, 7
        %v1287 = vsub.s32 %v1284, %v1286
        %v1288 = vrot.slane %v1280, %v1287
        %v1290 = vunpack.c.l.s4 1934713408
        %v1291 = vunpack.c.0.s8 %v1290
        %v1292 = vlaneseq
        %v1293 = vshrl.u32 %v1292, 7
        %v1294 = vsub.s32 %v1291, %v1293
        %v1295 = vrot.slane %v1281, %v1294
        %v1296 = vcombine.high %v1288, 0
        %v1297 = vcombine.high %v1295, 0
        %v1298 = vcombine.low %v1254, %v1261
        %v1300 = vunpack.c.l.s4 1983009808
        %v1301 = vunpack.c.0.s8 %v1300
        %v1302 = vlaneseq
        %v1303 = vshrl.u32 %v1302, 7
        %v1304 = vsub.s32 %v1301, %v1303
        %v1305 = vrot.slane %v1298, %v1304
        %v1306 = vcombine.low %v1262, %v1263
        %v1308 = vunpack.c.l.s4 1983009808
        %v1309 = vunpack.c.0.s8 %v1308
        %v1310 = vlaneseq
        %v1311 = vshrl.u32 %v1310, 7
        %v1312 = vsub.s32 %v1309, %v1311
        %v1313 = vrot.slane %v1306, %v1312
        %v1314 = vcombine.low %v1305, %v1313
        %v1316 = vunpack.c.l.s4 1934713408
        %v1317 = vunpack.c.0.s8 %v1316
        %v1318 = vlaneseq
        %v1319 = vshrl.u32 %v1318, 7
        %v1320 = vsub.s32 %v1317, %v1319
        %v1321 = vrot.slane %v1314, %v1320
        %v1322 = vcombine.high %v1321, 0
        %v1323 = vcombine.low %v1288, %v1295
        %v1325 = vunpack.c.l.s4 1983009808
        %v1326 = vunpack.c.0.s8 %v1325
        %v1327 = vlaneseq
        %v1328 = vshrl.u32 %v1327, 7
        %v1329 = vsub.s32 %v1326, %v1328
        %v1330 = vrot.slane %v1323, %v1329
        %v1331 = vcombine.low %v1296, %v1297
        %v1333 = vunpack.c.l.s4 1983009808
        %v1334 = vunpack.c.0.s8 %v1333
        %v1335 = vlaneseq
        %v1336 = vshrl.u32 %v1335, 7
        %v1337 = vsub.s32 %v1334, %v1336
        %v1338 = vrot.slane %v1331, %v1337
        %v1339 = vcombine.low %v1330, %v1338
        %v1341 = vunpack.c.l.s4 1934713408
        %v1342 = vunpack.c.0.s8 %v1341
        %v1343 = vlaneseq
        %v1344 = vshrl.u32 %v1343, 7
        %v1345 = vsub.s32 %v1342, %v1344
        %v1346 = vrot.slane %v1339, %v1345
        %v1347 = vcombine.high %v1346, 0
        %v1350 = vpack.i.b16 %v1346, %v1321
        %v1351 = vshrl.u32 %v1321, 16
        %v1352 = vshrl.u32 %v1346, 16
        %v1353 = vpack.i.b16 %v1352, %v1351
        %v1356 = vpack.i.b16 %v1347, %v1322
        %v1357 = vshrl.u32 %v1322, 16
        %v1358 = vshrl.u32 %v1347, 16
        %v1359 = vpack.i.b16 %v1358, %v1357
        %vm1360 = vcmask 64512
        %v1362 = vsel %vm1360, %v1056, 0
        %v1365 = vsel %vm1360, %v1201, 0
        %1367 = vmatprep.subr.bf16.mxu0 0
        %1368 = vmatpush1.bf16.xpose.msra.mxu0 %v1365
        %1369 = vmatprep.subr.bf16.mxu0 0
        %1370 = vmatpush1.bf16.xpose.msra.mxu0 0
        %1371 = vmatprep.subr.bf16.mxu0 0
        %1372 = vmatpush1.bf16.xpose.msra.mxu0 0
        %1373 = vmatprep.subr.bf16.mxu0 0
        %1374 = vmatpush1.bf16.xpose.msra.mxu0 0
        %1375 = vmatprep.subr.bf16.mxu0 0
        %1376 = vmatpush1.bf16.xpose.msra.mxu0 0
        %1377 = vmatprep.subr.bf16.mxu0 0
        %1378 = vmatpush1.bf16.xpose.msra.mxu0 0
        %1379 = vmatprep.subr.bf16.mxu0 0
        %1380 = vmatpush1.bf16.xpose.msra.mxu0 0
        %1381 = vmatprep.subr.bf16.mxu0 0
        %1382 = vmatpush1.bf16.xpose.msra.mxu0 0
        %1383 = vmatprep.subr.bf16.mxu0 0
        %1384 = vmatpush1.bf16.xpose.msra.mxu0 0
        %1385 = vmatprep.subr.bf16.mxu0 0
        %1386 = vmatpush1.bf16.xpose.msra.mxu0 0
        %1387 = vmatprep.subr.bf16.mxu0 0
        %1388 = vmatpush1.bf16.xpose.msra.mxu0 0
        %1389 = vmatprep.subr.bf16.mxu0 0
        %1390 = vmatpush1.bf16.xpose.msra.mxu0 0
        %1391 = vmatprep.subr.bf16.mxu0 0
        %1392 = vmatpush1.bf16.xpose.msra.mxu0 0
        %1393 = vmatprep.subr.bf16.mxu0 0
        %1394 = vmatpush1.bf16.xpose.msra.mxu0 0
        %1395 = vmatprep.subr.bf16.mxu0 0
        %1396 = vmatpush1.bf16.xpose.msra.mxu0 0
        %1397 = vmatprep.subr.bf16.mxu0 0
        %1398 = vmatpush1.bf16.xpose.msra.mxu0 0
        %1399 = vmatprep.mubr.bf16.mxu0 0
        %1400 = vmatmul.mubr.bf16.gmra.mrb[0].mxu0 %v1362
        %v1401 = vpop.f32.mrb[0].mxu0
        %v1402 = vadd.f32 0.0, %v1401
        %v1403 = vpop.f32.mrb[0].mxu0
        %v1404 = vpop.f32.mrb[0].mxu0
        %v1405 = vpop.f32.mrb[0].mxu0
        %1406 = vdwg.mxu0
        %v1408 = vsel %vm1360, %v1057, 0
        %v1411 = vsel %vm1360, %v1204, 0
        %1413 = vmatprep.subr.bf16.mxu0 0
        %1414 = vmatpush1.bf16.xpose.msra.mxu0 %v1411
        %1415 = vmatprep.subr.bf16.mxu0 0
        %1416 = vmatpush1.bf16.xpose.msra.mxu0 0
        %1417 = vmatprep.subr.bf16.mxu0 0
        %1418 = vmatpush1.bf16.xpose.msra.mxu0 0
        %1419 = vmatprep.subr.bf16.mxu0 0
        %1420 = vmatpush1.bf16.xpose.msra.mxu0 0
        %1421 = vmatprep.subr.bf16.mxu0 0
        %1422 = vmatpush1.bf16.xpose.msra.mxu0 0
        %1423 = vmatprep.subr.bf16.mxu0 0
        %1424 = vmatpush1.bf16.xpose.msra.mxu0 0
        %1425 = vmatprep.subr.bf16.mxu0 0
        %1426 = vmatpush1.bf16.xpose.msra.mxu0 0
        %1427 = vmatprep.subr.bf16.mxu0 0
        %1428 = vmatpush1.bf16.xpose.msra.mxu0 0
        %1429 = vmatprep.subr.bf16.mxu0 0
        %1430 = vmatpush1.bf16.xpose.msra.mxu0 0
        %1431 = vmatprep.subr.bf16.mxu0 0
        %1432 = vmatpush1.bf16.xpose.msra.mxu0 0
        %1433 = vmatprep.subr.bf16.mxu0 0
        %1434 = vmatpush1.bf16.xpose.msra.mxu0 0
        %1435 = vmatprep.subr.bf16.mxu0 0
        %1436 = vmatpush1.bf16.xpose.msra.mxu0 0
        %1437 = vmatprep.subr.bf16.mxu0 0
        %1438 = vmatpush1.bf16.xpose.msra.mxu0 0
        %1439 = vmatprep.subr.bf16.mxu0 0
        %1440 = vmatpush1.bf16.xpose.msra.mxu0 0
        %1441 = vmatprep.subr.bf16.mxu0 0
        %1442 = vmatpush1.bf16.xpose.msra.mxu0 0
        %1443 = vmatprep.subr.bf16.mxu0 0
        %1444 = vmatpush1.bf16.xpose.msra.mxu0 0
        %1445 = vmatprep.mubr.bf16.mxu0 0
        %1446 = vmatmul.mubr.bf16.gmra.mrb[0].mxu0 %v1408
        %v1447 = vpop.f32.mrb[0].mxu0
        %v1448 = vadd.f32 0.0, %v1447
        %v1449 = vpop.f32.mrb[0].mxu0
        %v1450 = vpop.f32.mrb[0].mxu0
        %v1451 = vpop.f32.mrb[0].mxu0
        %1452 = vdwg.mxu0
        %v1454 = vsel %vm1360, %v1058, 0
        %v1457 = vsel %vm1360, %v1207, 0
        %1459 = vmatprep.subr.bf16.mxu0 0
        %1460 = vmatpush1.bf16.xpose.msra.mxu0 %v1457
        %1461 = vmatprep.subr.bf16.mxu0 0
        %1462 = vmatpush1.bf16.xpose.msra.mxu0 0
        %1463 = vmatprep.subr.bf16.mxu0 0
        %1464 = vmatpush1.bf16.xpose.msra.mxu0 0
        %1465 = vmatprep.subr.bf16.mxu0 0
        %1466 = vmatpush1.bf16.xpose.msra.mxu0 0
        %1467 = vmatprep.subr.bf16.mxu0 0
        %1468 = vmatpush1.bf16.xpose.msra.mxu0 0
        %1469 = vmatprep.subr.bf16.mxu0 0
        %1470 = vmatpush1.bf16.xpose.msra.mxu0 0
        %1471 = vmatprep.subr.bf16.mxu0 0
        %1472 = vmatpush1.bf16.xpose.msra.mxu0 0
        %1473 = vmatprep.subr.bf16.mxu0 0
        %1474 = vmatpush1.bf16.xpose.msra.mxu0 0
        %1475 = vmatprep.subr.bf16.mxu0 0
        %1476 = vmatpush1.bf16.xpose.msra.mxu0 0
        %1477 = vmatprep.subr.bf16.mxu0 0
        %1478 = vmatpush1.bf16.xpose.msra.mxu0 0
        %1479 = vmatprep.subr.bf16.mxu0 0
        %1480 = vmatpush1.bf16.xpose.msra.mxu0 0
        %1481 = vmatprep.subr.bf16.mxu0 0
        %1482 = vmatpush1.bf16.xpose.msra.mxu0 0
        %1483 = vmatprep.subr.bf16.mxu0 0
        %1484 = vmatpush1.bf16.xpose.msra.mxu0 0
        %1485 = vmatprep.subr.bf16.mxu0 0
        %1486 = vmatpush1.bf16.xpose.msra.mxu0 0
        %1487 = vmatprep.subr.bf16.mxu0 0
        %1488 = vmatpush1.bf16.xpose.msra.mxu0 0
        %1489 = vmatprep.subr.bf16.mxu0 0
        %1490 = vmatpush1.bf16.xpose.msra.mxu0 0
        %1491 = vmatprep.mubr.bf16.mxu0 0
        %1492 = vmatmul.mubr.bf16.gmra.mrb[0].mxu0 %v1454
        %v1493 = vpop.f32.mrb[0].mxu0
        %v1494 = vadd.f32 0.0, %v1493
        %v1495 = vpop.f32.mrb[0].mxu0
        %v1496 = vpop.f32.mrb[0].mxu0
        %v1497 = vpop.f32.mrb[0].mxu0
        %1498 = vdwg.mxu0
        %v1500 = vsel %vm1360, %v1059, 0
        %v1503 = vsel %vm1360, %v1210, 0
        %1505 = vmatprep.subr.bf16.mxu0 0
        %1506 = vmatpush1.bf16.xpose.msra.mxu0 %v1503
        %1507 = vmatprep.subr.bf16.mxu0 0
        %1508 = vmatpush1.bf16.xpose.msra.mxu0 0
        %1509 = vmatprep.subr.bf16.mxu0 0
        %1510 = vmatpush1.bf16.xpose.msra.mxu0 0
        %1511 = vmatprep.subr.bf16.mxu0 0
        %1512 = vmatpush1.bf16.xpose.msra.mxu0 0
        %1513 = vmatprep.subr.bf16.mxu0 0
        %1514 = vmatpush1.bf16.xpose.msra.mxu0 0
        %1515 = vmatprep.subr.bf16.mxu0 0
        %1516 = vmatpush1.bf16.xpose.msra.mxu0 0
        %1517 = vmatprep.subr.bf16.mxu0 0
        %1518 = vmatpush1.bf16.xpose.msra.mxu0 0
        %1519 = vmatprep.subr.bf16.mxu0 0
        %1520 = vmatpush1.bf16.xpose.msra.mxu0 0
        %1521 = vmatprep.subr.bf16.mxu0 0
        %1522 = vmatpush1.bf16.xpose.msra.mxu0 0
        %1523 = vmatprep.subr.bf16.mxu0 0
        %1524 = vmatpush1.bf16.xpose.msra.mxu0 0
        %1525 = vmatprep.subr.bf16.mxu0 0
        %1526 = vmatpush1.bf16.xpose.msra.mxu0 0
        %1527 = vmatprep.subr.bf16.mxu0 0
        %1528 = vmatpush1.bf16.xpose.msra.mxu0 0
        %1529 = vmatprep.subr.bf16.mxu0 0
        %1530 = vmatpush1.bf16.xpose.msra.mxu0 0
        %1531 = vmatprep.subr.bf16.mxu0 0
        %1532 = vmatpush1.bf16.xpose.msra.mxu0 0
        %1533 = vmatprep.subr.bf16.mxu0 0
        %1534 = vmatpush1.bf16.xpose.msra.mxu0 0
        %1535 = vmatprep.subr.bf16.mxu0 0
        %1536 = vmatpush1.bf16.xpose.msra.mxu0 0
        %1537 = vmatprep.mubr.bf16.mxu0 0
        %1538 = vmatmul.mubr.bf16.gmra.mrb[0].mxu0 %v1500
        %v1539 = vpop.f32.mrb[0].mxu0
        %v1540 = vadd.f32 0.0, %v1539
        %v1541 = vpop.f32.mrb[0].mxu0
        %v1542 = vpop.f32.mrb[0].mxu0
        %v1543 = vpop.f32.mrb[0].mxu0
        %1544 = vdwg.mxu0
        %v1545 = vsel %vm1360, %v1402, -inf
        %1546 = vmax.xlane.f32.xlu0 %v1545
        %v1547 = vpop.xlane.xlu0 %1546
        %v1548 = vsel %vm1360, %v1448, -inf
        %1549 = vmax.xlane.f32.xlu0 %v1548
        %v1550 = vpop.xlane.xlu0 %1549
        %v1551 = vsel %vm1360, %v1494, -inf
        %1552 = vmax.xlane.f32.xlu0 %v1551
        %v1553 = vpop.xlane.xlu0 %1552
        %v1554 = vsel %vm1360, %v1540, -inf
        %1555 = vmax.xlane.f32.xlu0 %v1554
        %v1556 = vpop.xlane.xlu0 %1555
        %v1557 = vsub.f32 -inf, %v1547
        %v1558 = vsub.f32 -inf, %v1550
        %v1559 = vsub.f32 -inf, %v1553
        %v1560 = vsub.f32 -inf, %v1556
        %v1561 = vmul.f32 %v1557, 1.442695
        %v1562 = vpow.pop %v1561
        %v1563 = vmul.f32 %v1558, 1.442695
        %v1564 = vpow.pop %v1563
        %v1565 = vmul.f32 %v1559, 1.442695
        %v1566 = vpow.pop %v1565
        %v1567 = vmul.f32 %v1560, 1.442695
        %v1568 = vpow.pop %v1567
        %v1569 = vsub.f32 %v1402, %v1547
        %v1570 = vsub.f32 %v1448, %v1550
        %v1571 = vsub.f32 %v1494, %v1553
        %v1572 = vsub.f32 %v1540, %v1556
        %v1573 = vmul.f32 %v1569, 1.442695
        %v1574 = vpow.pop %v1573
        %v1575 = vmul.f32 %v1570, 1.442695
        %v1576 = vpow.pop %v1575
        %v1577 = vmul.f32 %v1571, 1.442695
        %v1578 = vpow.pop %v1577
        %v1579 = vmul.f32 %v1572, 1.442695
        %v1580 = vpow.pop %v1579
        %v1581 = vmul.f32 %v1562, 0.0
        %v1582 = vmul.f32 %v1564, 0.0
        %v1583 = vmul.f32 %v1566, 0.0
        %v1584 = vmul.f32 %v1568, 0.0
        %v1585 = vsel %vm1360, %v1574, 0.0
        %1586 = vadd.xlane.f32.xlu0 %v1585
        %v1587 = vpop.xlane.xlu0 %1586
        %v1588 = vsel %vm1360, %v1576, 0.0
        %1589 = vadd.xlane.f32.xlu0 %v1588
        %v1590 = vpop.xlane.xlu0 %1589
        %v1591 = vsel %vm1360, %v1578, 0.0
        %1592 = vadd.xlane.f32.xlu0 %v1591
        %v1593 = vpop.xlane.xlu0 %1592
        %v1594 = vsel %vm1360, %v1580, 0.0
        %1595 = vadd.xlane.f32.xlu0 %v1594
        %v1596 = vpop.xlane.xlu0 %1595
        %v1597 = vadd.f32 %v1581, %v1587
        %v1598 = vadd.f32 %v1582, %v1590
        %v1599 = vadd.f32 %v1583, %v1593
        %v1600 = vadd.f32 %v1584, %v1596
        %v1601 = vpack.c.bf16 %v1574, %v1574
        %v1602 = vpack.c.bf16 %v1576, %v1576
        %v1603 = vpack.c.bf16 %v1578, %v1578
        %v1604 = vpack.c.bf16 %v1580, %v1580
        %v1606 = vsel %vm1360, %v1601, 0
        %vm1608 = vcmask 1043456
        %v1610 = vsel %vm1608, %v1350, 0
        %1612 = vmatprep.subr.bf16.mxu0 0
        %1613 = vmatpush1.bf16.msra.mxu0 %v1610
        %1614 = vmatprep.subr.bf16.mxu0 0
        %1615 = vmatpush1.bf16.msra.mxu0 0
        %1616 = vmatprep.subr.bf16.mxu0 0
        %1617 = vmatpush1.bf16.msra.mxu0 0
        %1618 = vmatprep.subr.bf16.mxu0 0
        %1619 = vmatpush1.bf16.msra.mxu0 0
        %1620 = vmatprep.subr.bf16.mxu0 0
        %1621 = vmatpush1.bf16.msra.mxu0 0
        %1622 = vmatprep.subr.bf16.mxu0 0
        %1623 = vmatpush1.bf16.msra.mxu0 0
        %1624 = vmatprep.subr.bf16.mxu0 0
        %1625 = vmatpush1.bf16.msra.mxu0 0
        %1626 = vmatprep.subr.bf16.mxu0 0
        %1627 = vmatpush1.bf16.msra.mxu0 0
        %1628 = vmatprep.subr.bf16.mxu0 0
        %1629 = vmatpush1.bf16.msra.mxu0 0
        %1630 = vmatprep.subr.bf16.mxu0 0
        %1631 = vmatpush1.bf16.msra.mxu0 0
        %1632 = vmatprep.subr.bf16.mxu0 0
        %1633 = vmatpush1.bf16.msra.mxu0 0
        %1634 = vmatprep.subr.bf16.mxu0 0
        %1635 = vmatpush1.bf16.msra.mxu0 0
        %1636 = vmatprep.subr.bf16.mxu0 0
        %1637 = vmatpush1.bf16.msra.mxu0 0
        %1638 = vmatprep.subr.bf16.mxu0 0
        %1639 = vmatpush1.bf16.msra.mxu0 0
        %1640 = vmatprep.subr.bf16.mxu0 0
        %1641 = vmatpush1.bf16.msra.mxu0 0
        %1642 = vmatprep.subr.bf16.mxu0 0
        %1643 = vmatpush1.bf16.msra.mxu0 0
        %1644 = vmatprep.mubr.bf16.mxu0 0
        %1645 = vmatmul.mubr.bf16.gmra.mrb[0].mxu0 %v1606
        %v1646 = vpop.f32.mrb[0].mxu0
        %v1647 = vadd.f32 0.0, %v1646
        %v1648 = vpop.f32.mrb[0].mxu0
        %v1649 = vpop.f32.mrb[0].mxu0
        %v1650 = vpop.f32.mrb[0].mxu0
        %1651 = vdwg.mxu0
        %v1653 = vsel %vm1360, %v1602, 0
        %v1656 = vsel %vm1608, %v1353, 0
        %1658 = vmatprep.subr.bf16.mxu0 0
        %1659 = vmatpush1.bf16.msra.mxu0 %v1656
        %1660 = vmatprep.subr.bf16.mxu0 0
        %1661 = vmatpush1.bf16.msra.mxu0 0
        %1662 = vmatprep.subr.bf16.mxu0 0
        %1663 = vmatpush1.bf16.msra.mxu0 0
        %1664 = vmatprep.subr.bf16.mxu0 0
        %1665 = vmatpush1.bf16.msra.mxu0 0
        %1666 = vmatprep.subr.bf16.mxu0 0
        %1667 = vmatpush1.bf16.msra.mxu0 0
        %1668 = vmatprep.subr.bf16.mxu0 0
        %1669 = vmatpush1.bf16.msra.mxu0 0
        %1670 = vmatprep.subr.bf16.mxu0 0
        %1671 = vmatpush1.bf16.msra.mxu0 0
        %1672 = vmatprep.subr.bf16.mxu0 0
        %1673 = vmatpush1.bf16.msra.mxu0 0
        %1674 = vmatprep.subr.bf16.mxu0 0
        %1675 = vmatpush1.bf16.msra.mxu0 0
        %1676 = vmatprep.subr.bf16.mxu0 0
        %1677 = vmatpush1.bf16.msra.mxu0 0
        %1678 = vmatprep.subr.bf16.mxu0 0
        %1679 = vmatpush1.bf16.msra.mxu0 0
        %1680 = vmatprep.subr.bf16.mxu0 0
        %1681 = vmatpush1.bf16.msra.mxu0 0
        %1682 = vmatprep.subr.bf16.mxu0 0
        %1683 = vmatpush1.bf16.msra.mxu0 0
        %1684 = vmatprep.subr.bf16.mxu0 0
        %1685 = vmatpush1.bf16.msra.mxu0 0
        %1686 = vmatprep.subr.bf16.mxu0 0
        %1687 = vmatpush1.bf16.msra.mxu0 0
        %1688 = vmatprep.subr.bf16.mxu0 0
        %1689 = vmatpush1.bf16.msra.mxu0 0
        %1690 = vmatprep.mubr.bf16.mxu0 0
        %1691 = vmatmul.mubr.bf16.gmra.mrb[0].mxu0 %v1653
        %v1692 = vpop.f32.mrb[0].mxu0
        %v1693 = vadd.f32 0.0, %v1692
        %v1694 = vpop.f32.mrb[0].mxu0
        %v1695 = vpop.f32.mrb[0].mxu0
        %v1696 = vpop.f32.mrb[0].mxu0
        %1697 = vdwg.mxu0
        %v1699 = vsel %vm1360, %v1603, 0
        %v1702 = vsel %vm1608, %v1356, 0
        %1704 = vmatprep.subr.bf16.mxu0 0
        %1705 = vmatpush1.bf16.msra.mxu0 %v1702
        %1706 = vmatprep.subr.bf16.mxu0 0
        %1707 = vmatpush1.bf16.msra.mxu0 0
        %1708 = vmatprep.subr.bf16.mxu0 0
        %1709 = vmatpush1.bf16.msra.mxu0 0
        %1710 = vmatprep.subr.bf16.mxu0 0
        %1711 = vmatpush1.bf16.msra.mxu0 0
        %1712 = vmatprep.subr.bf16.mxu0 0
        %1713 = vmatpush1.bf16.msra.mxu0 0
        %1714 = vmatprep.subr.bf16.mxu0 0
        %1715 = vmatpush1.bf16.msra.mxu0 0
        %1716 = vmatprep.subr.bf16.mxu0 0
        %1717 = vmatpush1.bf16.msra.mxu0 0
        %1718 = vmatprep.subr.bf16.mxu0 0
        %1719 = vmatpush1.bf16.msra.mxu0 0
        %1720 = vmatprep.subr.bf16.mxu0 0
        %1721 = vmatpush1.bf16.msra.mxu0 0
        %1722 = vmatprep.subr.bf16.mxu0 0
        %1723 = vmatpush1.bf16.msra.mxu0 0
        %1724 = vmatprep.subr.bf16.mxu0 0
        %1725 = vmatpush1.bf16.msra.mxu0 0
        %1726 = vmatprep.subr.bf16.mxu0 0
        %1727 = vmatpush1.bf16.msra.mxu0 0
        %1728 = vmatprep.subr.bf16.mxu0 0
        %1729 = vmatpush1.bf16.msra.mxu0 0
        %1730 = vmatprep.subr.bf16.mxu0 0
        %1731 = vmatpush1.bf16.msra.mxu0 0
        %1732 = vmatprep.subr.bf16.mxu0 0
        %1733 = vmatpush1.bf16.msra.mxu0 0
        %1734 = vmatprep.subr.bf16.mxu0 0
        %1735 = vmatpush1.bf16.msra.mxu0 0
        %1736 = vmatprep.mubr.bf16.mxu0 0
        %1737 = vmatmul.mubr.bf16.gmra.mrb[0].mxu0 %v1699
        %v1738 = vpop.f32.mrb[0].mxu0
        %v1739 = vadd.f32 0.0, %v1738
        %v1740 = vpop.f32.mrb[0].mxu0
        %v1741 = vpop.f32.mrb[0].mxu0
        %v1742 = vpop.f32.mrb[0].mxu0
        %1743 = vdwg.mxu0
        %v1745 = vsel %vm1360, %v1604, 0
        %v1748 = vsel %vm1608, %v1359, 0
        %1750 = vmatprep.subr.bf16.mxu0 0
        %1751 = vmatpush1.bf16.msra.mxu0 %v1748
        %1752 = vmatprep.subr.bf16.mxu0 0
        %1753 = vmatpush1.bf16.msra.mxu0 0
        %1754 = vmatprep.subr.bf16.mxu0 0
        %1755 = vmatpush1.bf16.msra.mxu0 0
        %1756 = vmatprep.subr.bf16.mxu0 0
        %1757 = vmatpush1.bf16.msra.mxu0 0
        %1758 = vmatprep.subr.bf16.mxu0 0
        %1759 = vmatpush1.bf16.msra.mxu0 0
        %1760 = vmatprep.subr.bf16.mxu0 0
        %1761 = vmatpush1.bf16.msra.mxu0 0
        %1762 = vmatprep.subr.bf16.mxu0 0
        %1763 = vmatpush1.bf16.msra.mxu0 0
        %1764 = vmatprep.subr.bf16.mxu0 0
        %1765 = vmatpush1.bf16.msra.mxu0 0
        %1766 = vmatprep.subr.bf16.mxu0 0
        %1767 = vmatpush1.bf16.msra.mxu0 0
        %1768 = vmatprep.subr.bf16.mxu0 0
        %1769 = vmatpush1.bf16.msra.mxu0 0
        %1770 = vmatprep.subr.bf16.mxu0 0
        %1771 = vmatpush1.bf16.msra.mxu0 0
        %1772 = vmatprep.subr.bf16.mxu0 0
        %1773 = vmatpush1.bf16.msra.mxu0 0
        %1774 = vmatprep.subr.bf16.mxu0 0
        %1775 = vmatpush1.bf16.msra.mxu0 0
        %1776 = vmatprep.subr.bf16.mxu0 0
        %1777 = vmatpush1.bf16.msra.mxu0 0
        %1778 = vmatprep.subr.bf16.mxu0 0
        %1779 = vmatpush1.bf16.msra.mxu0 0
        %1780 = vmatprep.subr.bf16.mxu0 0
        %1781 = vmatpush1.bf16.msra.mxu0 0
        %1782 = vmatprep.mubr.bf16.mxu0 0
        %1783 = vmatmul.mubr.bf16.gmra.mrb[0].mxu0 %v1745
        %v1784 = vpop.f32.mrb[0].mxu0
        %v1785 = vadd.f32 0.0, %v1784
        %v1786 = vpop.f32.mrb[0].mxu0
        %v1787 = vpop.f32.mrb[0].mxu0
        %v1788 = vpop.f32.mrb[0].mxu0
        %1789 = vdwg.mxu0
        %v1790 = vadd.f32 %v1581, %v1647
        %v1791 = vadd.f32 %v1582, %v1693
        %v1792 = vadd.f32 %v1583, %v1739
        %v1793 = vadd.f32 %v1584, %v1785
        %v1794 = vrcp.pop %v1597
        %v1795 = vrcp.pop %v1598
        %v1796 = vrcp.pop %v1599
        %v1797 = vrcp.pop %v1600
        %v1798 = vmul.f32 %v1790, %v1794
        %v1799 = vmul.f32 %v1791, %v1795
        %v1800 = vmul.f32 %v1792, %v1796
        %v1801 = vmul.f32 %v1793, %v1797
        %v1802 = vcombine.low %v1798, %v1800
        %v1803 = vcombine.high %v1798, %v1800
        %v1805 = vunpack.c.l.s4 1983009808
        %v1806 = vunpack.c.0.s8 %v1805
        %v1807 = vlaneseq
        %v1808 = vshrl.u32 %v1807, 7
        %v1809 = vsub.s32 %v1806, %v1808
        %v1810 = vrot.slane %v1802, %v1809
        %v1812 = vunpack.c.l.s4 1983009808
        %v1813 = vunpack.c.0.s8 %v1812
        %v1814 = vlaneseq
        %v1815 = vshrl.u32 %v1814, 7
        %v1816 = vsub.s32 %v1813, %v1815
        %v1817 = vrot.slane %v1803, %v1816
        %v1818 = vcombine.low %v1799, %v1801
        %v1819 = vcombine.high %v1799, %v1801
        %v1821 = vunpack.c.l.s4 1983009808
        %v1822 = vunpack.c.0.s8 %v1821
        %v1823 = vlaneseq
        %v1824 = vshrl.u32 %v1823, 7
        %v1825 = vsub.s32 %v1822, %v1824
        %v1826 = vrot.slane %v1818, %v1825
        %v1828 = vunpack.c.l.s4 1983009808
        %v1829 = vunpack.c.0.s8 %v1828
        %v1830 = vlaneseq
        %v1831 = vshrl.u32 %v1830, 7
        %v1832 = vsub.s32 %v1829, %v1831
        %v1833 = vrot.slane %v1819, %v1832
        %v1834 = vcombine.low %v1810, %v1826
        %v1835 = vcombine.high %v1810, %v1826
        %v1837 = vunpack.c.l.s4 1934713408
        %v1838 = vunpack.c.0.s8 %v1837
        %v1839 = vlaneseq
        %v1840 = vshrl.u32 %v1839, 7
        %v1841 = vsub.s32 %v1838, %v1840
        %v1842 = vrot.slane %v1834, %v1841
        %v1844 = vunpack.c.l.s4 1934713408
        %v1845 = vunpack.c.0.s8 %v1844
        %v1846 = vlaneseq
        %v1847 = vshrl.u32 %v1846, 7
        %v1848 = vsub.s32 %v1845, %v1847
        %v1849 = vrot.slane %v1835, %v1848
        %v1850 = vcombine.low %v1817, %v1833
        %v1851 = vcombine.high %v1817, %v1833
        %v1853 = vunpack.c.l.s4 1934713408
        %v1854 = vunpack.c.0.s8 %v1853
        %v1855 = vlaneseq
        %v1856 = vshrl.u32 %v1855, 7
        %v1857 = vsub.s32 %v1854, %v1856
        %v1858 = vrot.slane %v1850, %v1857
        %v1860 = vunpack.c.l.s4 1934713408
        %v1861 = vunpack.c.0.s8 %v1860
        %v1862 = vlaneseq
        %v1863 = vshrl.u32 %v1862, 7
        %v1864 = vsub.s32 %v1861, %v1863
        %v1865 = vrot.slane %v1851, %v1864
        %v1866 = vcombine.high %v1842, 0.0
        %v1867 = vcombine.high %v1849, 0.0
        %v1868 = vcombine.high %v1858, 0.0
        %v1869 = vcombine.high %v1865, 0.0
        %v1870 = vcombine.low %v1842, %v1849
        %v1872 = vunpack.c.l.s4 1983009808
        %v1873 = vunpack.c.0.s8 %v1872
        %v1874 = vlaneseq
        %v1875 = vshrl.u32 %v1874, 7
        %v1876 = vsub.s32 %v1873, %v1875
        %v1877 = vrot.slane %v1870, %v1876
        %v1878 = vcombine.low %v1866, %v1867
        %v1880 = vunpack.c.l.s4 1983009808
        %v1881 = vunpack.c.0.s8 %v1880
        %v1882 = vlaneseq
        %v1883 = vshrl.u32 %v1882, 7
        %v1884 = vsub.s32 %v1881, %v1883
        %v1885 = vrot.slane %v1878, %v1884
        %v1886 = vcombine.low %v1858, %v1865
        %v1888 = vunpack.c.l.s4 1983009808
        %v1889 = vunpack.c.0.s8 %v1888
        %v1890 = vlaneseq
        %v1891 = vshrl.u32 %v1890, 7
        %v1892 = vsub.s32 %v1889, %v1891
        %v1893 = vrot.slane %v1886, %v1892
        %v1894 = vcombine.low %v1868, %v1869
        %v1896 = vunpack.c.l.s4 1983009808
        %v1897 = vunpack.c.0.s8 %v1896
        %v1898 = vlaneseq
        %v1899 = vshrl.u32 %v1898, 7
        %v1900 = vsub.s32 %v1897, %v1899
        %v1901 = vrot.slane %v1894, %v1900
        %v1902 = vcombine.low %v1877, %v1885
        %v1903 = vcombine.high %v1877, %v1885
        %v1905 = vunpack.c.l.s4 1934713408
        %v1906 = vunpack.c.0.s8 %v1905
        %v1907 = vlaneseq
        %v1908 = vshrl.u32 %v1907, 7
        %v1909 = vsub.s32 %v1906, %v1908
        %v1910 = vrot.slane %v1902, %v1909
        %v1912 = vunpack.c.l.s4 1934713408
        %v1913 = vunpack.c.0.s8 %v1912
        %v1914 = vlaneseq
        %v1915 = vshrl.u32 %v1914, 7
        %v1916 = vsub.s32 %v1913, %v1915
        %v1917 = vrot.slane %v1903, %v1916
        %v1918 = vcombine.low %v1893, %v1901
        %v1919 = vcombine.high %v1893, %v1901
        %v1921 = vunpack.c.l.s4 1934713408
        %v1922 = vunpack.c.0.s8 %v1921
        %v1923 = vlaneseq
        %v1924 = vshrl.u32 %v1923, 7
        %v1925 = vsub.s32 %v1922, %v1924
        %v1926 = vrot.slane %v1918, %v1925
        %v1928 = vunpack.c.l.s4 1934713408
        %v1929 = vunpack.c.0.s8 %v1928
        %v1930 = vlaneseq
        %v1931 = vshrl.u32 %v1930, 7
        %v1932 = vsub.s32 %v1929, %v1931
        %v1933 = vrot.slane %v1919, %v1932
        %v1934 = vcombine.low %v1910, %v1926
        %v1935 = vcombine.high %v1910, %v1926
        %v1936 = vcombine.low %v1917, %v1933
        %v1937 = vcombine.high %v1917, %v1933
        %1939 = vrot.lane.b32.xlu0 %v1935, 8
        %v1940 = vpop.permute.xlu0 %1939
        %1943 = vrot.lane.b32.xlu0 %v1936, 16
        %v1944 = vpop.permute.xlu0 %1943
        %1947 = vrot.lane.b32.xlu0 %v1937, 24
        %v1948 = vpop.permute.xlu0 %1947
        %v1950 = vsel %vm1360, %v1934, %v1940
        %vm1951 = vcmask 130048
        %v1952 = vsel %vm1951, %v1950, %v1944
        %vm1953 = vcmask 195584
        %v1954 = vsel %vm1953, %v1952, %v1948
        %v1955 = vpack.c.bf16 %v1954, %v1954
        %v1956 = vld [vmem:[%s9] sm:$0xf]
        %v1957 = vld [vmem:[%s9 + $0x4] sm:$0xf]
        %v1958 = vld [vmem:[%s9 + $0x8] sm:$0xf]
        %v1959 = vld [vmem:[%s9 + $0xc] sm:$0xf]
        %v1960 = vld [vmem:[#allocation14] sm:$0x1]
        %v1962 = vlaneseq
        %v1963 = vshrl.u32 %v1962, 7
        %v1964 = vsub.s32 0, %v1963
        %v1965 = vrot.slane %v1960, %v1964
        %v1971 = vunpack.c.l.b16 %v1956
        %v1972 = vunpack.c.l.b16 %v1957
        %v1973 = vunpack.c.l.b16 %v1958
        %v1974 = vunpack.c.l.b16 %v1959
        %v1975 = vpack.c.b16 %v1972, %v1971
        %v1976 = vpack.c.b16 %v1974, %v1973
        %v1980 = vsel %vm865, %v1955, 0
        %1982 = vmatprep.subr.bf16.mxu0 0
        %1983 = vmatpush1.bf16.msra.mxu0 %v1975
        %1984 = vmatprep.subr.bf16.mxu0 0
        %1985 = vmatpush1.bf16.msra.mxu0 %v1976
        %1986 = vmatprep.subr.bf16.mxu0 0
        %1987 = vmatpush1.bf16.msra.mxu0 0
        %1988 = vmatprep.subr.bf16.mxu0 0
        %1989 = vmatpush1.bf16.msra.mxu0 0
        %1990 = vmatprep.subr.bf16.mxu0 0
        %1991 = vmatpush1.bf16.msra.mxu0 0
        %1992 = vmatprep.subr.bf16.mxu0 0
        %1993 = vmatpush1.bf16.msra.mxu0 0
        %1994 = vmatprep.subr.bf16.mxu0 0
        %1995 = vmatpush1.bf16.msra.mxu0 0
        %1996 = vmatprep.subr.bf16.mxu0 0
        %1997 = vmatpush1.bf16.msra.mxu0 0
        %1998 = vmatprep.subr.bf16.mxu0 0
        %1999 = vmatpush1.bf16.msra.mxu0 0
        %2000 = vmatprep.subr.bf16.mxu0 0
        %2001 = vmatpush1.bf16.msra.mxu0 0
        %2002 = vmatprep.subr.bf16.mxu0 0
        %2003 = vmatpush1.bf16.msra.mxu0 0
        %2004 = vmatprep.subr.bf16.mxu0 0
        %2005 = vmatpush1.bf16.msra.mxu0 0
        %2006 = vmatprep.subr.bf16.mxu0 0
        %2007 = vmatpush1.bf16.msra.mxu0 0
        %2008 = vmatprep.subr.bf16.mxu0 0
        %2009 = vmatpush1.bf16.msra.mxu0 0
        %2010 = vmatprep.subr.bf16.mxu0 0
        %2011 = vmatpush1.bf16.msra.mxu0 0
        %2012 = vmatprep.subr.bf16.mxu0 0
        %2013 = vmatpush1.bf16.msra.mxu0 0
        %2014 = vmatprep.mubr.bf16.mxu0 0
        %2015 = vmatmul.mubr.bf16.gmra.mrb[0].mxu0 %v1980
        %v2016 = vpop.f32.mrb[0].mxu0
        %v2017 = vadd.f32 %v1965, %v2016
        %v2018 = vpop.f32.mrb[0].mxu0
        %v2019 = vpop.f32.mrb[0].mxu0
        %v2020 = vpop.f32.mrb[0].mxu0
        %2021 = vdwg.mxu0
        %v2022 = vadd.f32 %v836, %v2017
        %v2023 = vld [vmem:[#allocation16] sm:$0x1]
        %v2024 = vld [vmem:[#allocation17] sm:$0x1]
        %v2025 = vsel %vm865, %v2022, 0.0
        %2026 = vadd.xlane.f32.xlu0 %v2025
        %v2027 = vpop.xlane.xlu0 %2026
        %v2028 = vrcp.pop 32.0
        %v2029 = vmul.f32 %v2027, %v2028
        %v2030 = vsub.f32 %v2022, %v2029
        %v2031 = vmul.f32 %v2030, %v2030
        %v2032 = vsel %vm865, %v2031, 0.0
        %2033 = vadd.xlane.f32.xlu0 %v2032
        %v2034 = vpop.xlane.xlu0 %2033
        %v2035 = vmul.f32 %v2034, %v2028
        %v2036 = vadd.f32 %v2035, 1e-05
        %v2037 = vrsqrt.pop %v2036
        %v2038 = vmul.f32 %v2030, %v2037
        %v2040 = vlaneseq
        %v2041 = vshrl.u32 %v2040, 7
        %v2042 = vsub.s32 0, %v2041
        %v2043 = vrot.slane %v2023, %v2042
        %v2045 = vmul.f32 %v2038, %v2043
        %v2047 = vlaneseq
        %v2048 = vshrl.u32 %v2047, 7
        %v2049 = vsub.s32 0, %v2048
        %v2050 = vrot.slane %v2024, %v2049
        %v2052 = vadd.f32 %v2045, %v2050
        %v2053 = vpack.c.bf16 %v2052, %v2052
        %v2054 = vld [vmem:[%s13] sm:$0xf]
        %v2055 = vld [vmem:[%s13 + $0x4] sm:$0xf]
        %v2056 = vld [vmem:[%s13 + $0x8] sm:$0xf]
        %v2057 = vld [vmem:[%s13 + $0xc] sm:$0xf]
        %v2058 = vld [vmem:[%s14] sm:$0x1]
        %v2060 = vlaneseq
        %v2061 = vshrl.u32 %v2060, 7
        %v2062 = vsub.s32 0, %v2061
        %v2063 = vrot.slane %v2058, %v2062
        %v2069 = vunpack.c.l.b16 %v2054
        %v2070 = vunpack.c.l.b16 %v2055
        %v2071 = vunpack.c.l.b16 %v2056
        %v2072 = vunpack.c.l.b16 %v2057
        %v2073 = vpack.c.b16 %v2070, %v2069
        %v2074 = vpack.c.b16 %v2072, %v2071
        %v2078 = vsel %vm865, %v2053, 0
        %2080 = vmatprep.subr.bf16.mxu0 0
        %2081 = vmatpush1.bf16.msra.mxu0 %v2073
        %2082 = vmatprep.subr.bf16.mxu0 0
        %2083 = vmatpush1.bf16.msra.mxu0 %v2074
        %2084 = vmatprep.subr.bf16.mxu0 0
        %2085 = vmatpush1.bf16.msra.mxu0 0
        %2086 = vmatprep.subr.bf16.mxu0 0
        %2087 = vmatpush1.bf16.msra.mxu0 0
        %2088 = vmatprep.subr.bf16.mxu0 0
        %2089 = vmatpush1.bf16.msra.mxu0 0
        %2090 = vmatprep.subr.bf16.mxu0 0
        %2091 = vmatpush1.bf16.msra.mxu0 0
        %2092 = vmatprep.subr.bf16.mxu0 0
        %2093 = vmatpush1.bf16.msra.mxu0 0
        %2094 = vmatprep.subr.bf16.mxu0 0
        %2095 = vmatpush1.bf16.msra.mxu0 0
        %2096 = vmatprep.subr.bf16.mxu0 0
        %2097 = vmatpush1.bf16.msra.mxu0 0
        %2098 = vmatprep.subr.bf16.mxu0 0
        %2099 = vmatpush1.bf16.msra.mxu0 0
        %2100 = vmatprep.subr.bf16.mxu0 0
        %2101 = vmatpush1.bf16.msra.mxu0 0
        %2102 = vmatprep.subr.bf16.mxu0 0
        %2103 = vmatpush1.bf16.msra.mxu0 0
        %2104 = vmatprep.subr.bf16.mxu0 0
        %2105 = vmatpush1.bf16.msra.mxu0 0
        %2106 = vmatprep.subr.bf16.mxu0 0
        %2107 = vmatpush1.bf16.msra.mxu0 0
        %2108 = vmatprep.subr.bf16.mxu0 0
        %2109 = vmatpush1.bf16.msra.mxu0 0
        %2110 = vmatprep.subr.bf16.mxu0 0
        %2111 = vmatpush1.bf16.msra.mxu0 0
        %2112 = vmatprep.mubr.bf16.mxu0 0
        %2113 = vmatmul.mubr.bf16.gmra.mrb[0].mxu0 %v2078
        %v2114 = vpop.f32.mrb[0].mxu0
        %v2115 = vadd.f32 %v2063, %v2114
        %v2116 = vpop.f32.mrb[0].mxu0
        %v2117 = vpop.f32.mrb[0].mxu0
        %v2118 = vpop.f32.mrb[0].mxu0
        %2119 = vdwg.mxu0
        %v2120 = vmax.f32 %v2115, 0.0
        %v2121 = vpack.c.bf16 %v2120, %v2120
        %v2122 = vld [vmem:[%s15] sm:$0xf]
        %v2123 = vld [vmem:[%s15 + $0x4] sm:$0xf]
        %v2124 = vld [vmem:[%s15 + $0x8] sm:$0xf]
        %v2125 = vld [vmem:[%s15 + $0xc] sm:$0xf]
        %v2126 = vld [vmem:[%s15 + $0x10] sm:$0xf]
        %v2127 = vld [vmem:[%s15 + $0x14] sm:$0xf]
        %v2128 = vld [vmem:[%s15 + $0x18] sm:$0xf]
        %v2129 = vld [vmem:[%s15 + $0x1c] sm:$0xf]
        %v2130 = vld [vmem:[%s16] sm:$0x1]
        %v2132 = vlaneseq
        %v2133 = vshrl.u32 %v2132, 7
        %v2134 = vsub.s32 0, %v2133
        %v2135 = vrot.slane %v2130, %v2134
        %v2145 = vunpack.c.l.b16 %v2122
        %v2146 = vunpack.c.l.b16 %v2123
        %v2147 = vunpack.c.l.b16 %v2124
        %v2148 = vunpack.c.l.b16 %v2125
        %v2149 = vunpack.c.l.b16 %v2126
        %v2150 = vunpack.c.l.b16 %v2127
        %v2151 = vunpack.c.l.b16 %v2128
        %v2152 = vunpack.c.l.b16 %v2129
        %v2153 = vpack.c.b16 %v2146, %v2145
        %v2154 = vpack.c.b16 %v2148, %v2147
        %v2155 = vpack.c.b16 %v2150, %v2149
        %v2156 = vpack.c.b16 %v2152, %v2151
        %vm2161 = vcmask 523264
        %v2163 = vsel %vm2161, %v2121, 0
        %2165 = vmatprep.subr.bf16.mxu0 0
        %2166 = vmatpush1.bf16.msra.mxu0 %v2153
        %2167 = vmatprep.subr.bf16.mxu0 0
        %2168 = vmatpush1.bf16.msra.mxu0 %v2154
        %2169 = vmatprep.subr.bf16.mxu0 0
        %2170 = vmatpush1.bf16.msra.mxu0 %v2155
        %2171 = vmatprep.subr.bf16.mxu0 0
        %2172 = vmatpush1.bf16.msra.mxu0 %v2156
        %2173 = vmatprep.subr.bf16.mxu0 0
        %2174 = vmatpush1.bf16.msra.mxu0 0
        %2175 = vmatprep.subr.bf16.mxu0 0
        %2176 = vmatpush1.bf16.msra.mxu0 0
        %2177 = vmatprep.subr.bf16.mxu0 0
        %2178 = vmatpush1.bf16.msra.mxu0 0
        %2179 = vmatprep.subr.bf16.mxu0 0
        %2180 = vmatpush1.bf16.msra.mxu0 0
        %2181 = vmatprep.subr.bf16.mxu0 0
        %2182 = vmatpush1.bf16.msra.mxu0 0
        %2183 = vmatprep.subr.bf16.mxu0 0
        %2184 = vmatpush1.bf16.msra.mxu0 0
        %2185 = vmatprep.subr.bf16.mxu0 0
        %2186 = vmatpush1.bf16.msra.mxu0 0
        %2187 = vmatprep.subr.bf16.mxu0 0
        %2188 = vmatpush1.bf16.msra.mxu0 0
        %2189 = vmatprep.subr.bf16.mxu0 0
        %2190 = vmatpush1.bf16.msra.mxu0 0
        %2191 = vmatprep.subr.bf16.mxu0 0
        %2192 = vmatpush1.bf16.msra.mxu0 0
        %2193 = vmatprep.subr.bf16.mxu0 0
        %2194 = vmatpush1.bf16.msra.mxu0 0
        %2195 = vmatprep.subr.bf16.mxu0 0
        %2196 = vmatpush1.bf16.msra.mxu0 0
        %2197 = vmatprep.mubr.bf16.mxu0 0
        %2198 = vmatmul.mubr.bf16.gmra.mrb[0].mxu0 %v2163
        %v2199 = vpop.f32.mrb[0].mxu0
        %v2200 = vadd.f32 %v2135, %v2199
        %v2201 = vpop.f32.mrb[0].mxu0
        %v2202 = vpop.f32.mrb[0].mxu0
        %v2203 = vpop.f32.mrb[0].mxu0
        %2204 = vdwg.mxu0
        %v2205 = vadd.f32 %v2022, %v2200
        %2206 = vst.msk [vmem:[%s656] sm:$0xff] %vm865, %v2205
        %s2207 = sand.u32 %s420, 1
        %s2208 = scalar_lea.sflag [#allocation7], %s2207
        %s2209 = sand.u32 %s420, 1
        %s2210 = smul.addr %s2209, 8
        %s2211 = scalar_lea.vmem [#allocation19], %s2210
        // Predicated region
        $region125: #{tpu_custom_call.1} parent=87 // pred_check
          %p2212 = pneg %p430
        $region126: #{tpu_custom_call.1} parent=87 // pred_check_branch
          %2214 = sbr.rel (%p2212) target = $region128
        $region127: #{tpu_custom_call.1} parent=87 // pred_region
          %s2216 = ssub.s32 128, 128
          %2217 = vsyncadd %s2208, %s2216
          %s2218 = sadd.s32 %s41, %s40
          %s2219 = smul.addr %s2218, 128
          %s2220 = scalar_lea.hbm %s17, %s2219
          %s2222 = sshll.u32 %s2211, 4
          %s2223 = int_to_ptr.vmem [resolvable:$true] %s2222
          %2225 = dma.vmem_to_hbm [thread:$0]  %s2223, 128, %s2220, %s2208
        $region128: #{tpu_custom_call.1} parent=87 // pred_fallthru
          _
      $region88: #{tpu_custom_call.1} parent=5 // pred_fallthru
        _
      %p2226 = scmp.le.s32.totalorder 2, %s31
      // Predicated region
      $region129: #{tpu_custom_call.1} parent=5 // pred_check
        %p2227 = pneg %p2226
      $region130: #{tpu_custom_call.1} parent=5 // pred_check_branch
        %2229 = sbr.rel (%p2227) target = $region132
      $region131: #{tpu_custom_call.1} parent=5 // pred_region
        %s2230 = ssub.s32 %s31, 2
        // Predicated region
        $region133: #{tpu_custom_call.1} parent=131 // pred_check
          %p2231 = pneg %p436
        $region134: #{tpu_custom_call.1} parent=131 // pred_check_branch
          %2233 = sbr.rel (%p2231) target = $region136
        $region135: #{tpu_custom_call.1} parent=131 // pred_region
          %s2234 = sand.u32 %s421, 1
          %s2235 = scalar_lea.sflag [#allocation7], %s2234
          %s2236 = sand.u32 %s421, 1
          %s2237 = smul.addr %s2236, 8
          %s2238 = scalar_lea.vmem [#allocation19], %s2237
          %2239 = dma.done %s2235, 128
        $region136: #{tpu_custom_call.1} parent=131 // pred_fallthru
          _
      $region132: #{tpu_custom_call.1} parent=5 // pred_fallthru
        _
    $region6: #{tpu_custom_call.1} parent=1 // loop_footer
      %s35 = sadd.s32 1, %s31
    $region7: #{tpu_custom_call.1} parent=1 // loop_footer_branch
      %30 = sbr.rel target = $region3
    $region8: #{tpu_custom_call.1} parent=1 // loop_exit
      _
    %2240 = vsyncpa [#allocation6], 1
    %s2241 = scalar_lea.sflag [#allocation6], 1
    %2242 = vsyncpa %s2241, 1
    %2243 = vsyncpa [#allocation9], 1
    %2244 = vsyncpa [#allocation12], 1
    %2245 = vsyncpa [#allocation15], 1
    %2246 = vsyncpa [#allocation18], 1
    %2247 = vsyncpa [#allocation7], 1
    %s2248 = scalar_lea.sflag [#allocation7], 1
    %2249 = vsyncpa %s2248, 1

// kernel: tpu_custom_call.1
$region0: #{tpu_custom_call.1}
  #allocation0 [shape = 'u32[]', space=smem, size = 0x4, offset = 0x4, fixed_abs, tag = 'smem constant byte address 0x4 - core index']
  #allocation1 [shape = 'u32[144,128]{1,0:T(1,128)}', space=vmem, size = 0x12000, scoped, tag = 'internal scratch']
  #allocation2 [shape = 'bf16[8,32]{1,0:T(8,128)(2,1)}', space=vmem, size = 0x800, scoped, tag = 'scratch operand']
  #allocation3 [shape = 'bf16[8,32]{1,0:T(8,128)(2,1)}', space=vmem, size = 0x800, scoped, tag = 'scratch operand']
  #allocation4 [shape = 'bf16[8,32]{1,0:T(8,128)(2,1)}', space=vmem, size = 0x800, scoped, tag = 'scratch operand']
  %s0 = inlined_call_operand.vmem [shape: f32[2,8,32], index: 0, kind: input, shape index: {}]
  %s1 = inlined_call_operand.vmem [shape: f32[1,32], index: 1, kind: input, shape index: {}]
  %s2 = inlined_call_operand.hbm [shape: f32[1,32], index: 2, kind: input, shape index: {}]
  %s3 = inlined_call_operand.vmem [shape: bf16[32,32], index: 3, kind: input, shape index: {}]
  %s4 = inlined_call_operand.vmem [shape: bf16[32,32], index: 4, kind: input, shape index: {}]
  %s5 = inlined_call_operand.hbm [shape: bf16[32,32], index: 5, kind: input, shape index: {}]
  %s6 = inlined_call_operand.hbm [shape: f32[1,32], index: 6, kind: input, shape index: {}]
  %s7 = inlined_call_operand.hbm [shape: f32[1,32], index: 7, kind: input, shape index: {}]
  %s8 = inlined_call_operand.hbm [shape: f32[1,32], index: 8, kind: input, shape index: {}]
  %s9 = inlined_call_operand.vmem [shape: bf16[32,32], index: 9, kind: input, shape index: {}]
  %s10 = inlined_call_operand.hbm [shape: f32[1,32], index: 10, kind: input, shape index: {}]
  %s11 = inlined_call_operand.hbm [shape: f32[1,32], index: 11, kind: input, shape index: {}]
  %s12 = inlined_call_operand.hbm [shape: f32[1,32], index: 12, kind: input, shape index: {}]
  %s13 = inlined_call_operand.vmem [shape: bf16[1,32,64], index: 13, kind: input, shape index: {}]
  %s14 = inlined_call_operand.vmem [shape: f32[1,1,64], index: 14, kind: input, shape index: {}]
  %s15 = inlined_call_operand.vmem [shape: bf16[1,64,32], index: 15, kind: input, shape index: {}]
  %s16 = inlined_call_operand.vmem [shape: f32[1,32], index: 16, kind: input, shape index: {}]
  %s17 = inlined_call_operand.hbm [shape: f32[2,8,32], index: 17, kind: output, shape index: {}]
  %s18 = sld [smem:[#allocation0]]
  $region137: #{tpu_custom_call.1} parent=0
    _
  %s20 = ssub.s32 1, %s18
  %s21 = scalar_select 0, %s20, %s18
  $region1: #{tpu_custom_call.1} parent=0
    #allocation5 [shape = 'u8[512]{0}', space=vmem, size = 0x400, scoped, tag = 'input window, operand 2, single buffered']
    #allocation6 [shape = 's32[2]{0}', space=sflag, size = 0x8, scoped, tag = 'scoped memory for tpu_custom_call.1']
    #allocation7 [shape = 's32[2]{0}', space=sflag, size = 0x8, scoped, tag = 'scoped memory for tpu_custom_call.1']
    #allocation8 [shape = 'u8[8192]{0}', space=vmem, size = 0x2000, scoped, tag = 'input window, operand 5, single buffered']
    #allocation9 [shape = 's32[1]{0}', space=sflag, size = 0x4, scoped, tag = 'scoped memory for tpu_custom_call.1']
    #allocation10 [shape = 'u8[512]{0}', space=vmem, size = 0x400, scoped, tag = 'input window, operand 6, single buffered']
    #allocation11 [shape = 'u8[512]{0}', space=vmem, size = 0x400, scoped, tag = 'input window, operand 7, single buffered']
    #allocation12 [shape = 's32[1]{0}', space=sflag, size = 0x4, scoped, tag = 'scoped memory for tpu_custom_call.1']
    #allocation13 [shape = 'u8[512]{0}', space=vmem, size = 0x400, scoped, tag = 'input window, operand 8, single buffered']
    #allocation14 [shape = 'u8[512]{0}', space=vmem, size = 0x400, scoped, tag = 'input window, operand 10, single buffered']
    #allocation15 [shape = 's32[1]{0}', space=sflag, size = 0x4, scoped, tag = 'scoped memory for tpu_custom_call.1']
    #allocation16 [shape = 'u8[512]{0}', space=vmem, size = 0x400, scoped, tag = 'input window, operand 11, single buffered']
    #allocation17 [shape = 'u8[512]{0}', space=vmem, size = 0x400, scoped, tag = 'input window, operand 12, single buffered']
    #allocation18 [shape = 's32[1]{0}', space=sflag, size = 0x4, scoped, tag = 'scoped memory for tpu_custom_call.1']
    #allocation19 [shape = 'u8[8192]{0}', space=vmem, size = 0x2000, scoped, tag = 'output window, operand 0']
    %22 = vsyncpa [#allocation6], 0
    %23 = vsyncpa [#allocation9], 0
    %24 = vsyncpa [#allocation12], 0
    %25 = vsyncpa [#allocation15], 0
    %26 = vsyncpa [#allocation18], 0
    %27 = vsyncpa [#allocation7], 0
    %s28 = scalar_lea.sflag [#allocation7], 1
    %29 = vsyncpa %s28, 0
    loop: start=0, step=1, limit=4
    $region2: #{tpu_custom_call.1} parent=1 // loop_pre_header
      _
    $region3: #{tpu_custom_call.1} parent=1 // loop_header
      %s31 = sphi 0, %s35
      %p32 = scmp.ge.s32.totalorder %s31, 4
      %s38 = sphi 0, %s50
      %s39 = sphi 0, %s46
      %s40 = sphi 0, %s38
      %s41 = sphi 0, %s39
      %s42 = sphi 0, %s40
      %s43 = sphi 0, %s41
      %s53 = sphi 0, %s55
      %s56 = sphi 0, %s53
      %s57 = sphi 0, %s56
      %s73 = sphi 0, %s57
      %s77 = sphi 0, %s77
      %s79 = sphi 0, %s77
      %s80 = sphi 0, %s79
      %s94 = sphi 0, %s80
      %s98 = sphi 0, %s98
      %s100 = sphi 0, %s98
      %s101 = sphi 0, %s100
      %s115 = sphi 0, %s101
      %s119 = sphi 0, %s119
      %s121 = sphi 0, %s119
      %s122 = sphi 0, %s121
      %s136 = sphi 0, %s122
      %s140 = sphi 0, %s140
      %s142 = sphi 0, %s140
      %s143 = sphi 0, %s142
      %s157 = sphi 0, %s143
      %s161 = sphi 0, %s161
      %s163 = sphi 0, %s161
      %s164 = sphi 0, %s163
      %s178 = sphi 0, %s164
      %s182 = sphi 0, %s182
      %s184 = sphi 0, %s182
      %s185 = sphi 0, %s184
      %s199 = sphi 0, %s185
      %s203 = sphi 0, %s203
      %s205 = sphi 0, %s203
      %s206 = sphi 0, %s205
      %s220 = sphi 0, %s206
      %s224 = sphi 0, %s224
      %s226 = sphi 0, %s224
      %s227 = sphi 0, %s226
      %s241 = sphi 0, %s227
      %s245 = sphi 0, %s245
      %s247 = sphi 0, %s245
      %s248 = sphi 0, %s247
      %s262 = sphi 0, %s248
      %s266 = sphi 0, %s266
      %s268 = sphi 0, %s266
      %s269 = sphi 0, %s268
      %s283 = sphi 0, %s269
      %s287 = sphi 0, %s287
      %s289 = sphi 0, %s287
      %s290 = sphi 0, %s289
      %s304 = sphi 0, %s290
      %s308 = sphi 0, %s308
      %s310 = sphi 0, %s308
      %s311 = sphi 0, %s310
      %s325 = sphi 0, %s311
      %s329 = sphi 0, %s329
      %s331 = sphi 0, %s329
      %s332 = sphi 0, %s331
      %s346 = sphi 0, %s332
      %s350 = sphi 0, %s350
      %s352 = sphi 0, %s350
      %s353 = sphi 0, %s352
      %s367 = sphi 0, %s353
      %s371 = sphi 0, %s371
      %s373 = sphi 0, %s371
      %s374 = sphi 0, %s373
      %s388 = sphi 0, %s374
      %s392 = sphi 0, %s392
      %s394 = sphi 0, %s392
      %s395 = sphi 0, %s394
      %s409 = sphi 0, %s395
      %s417 = sphi 0, %s419
      %s420 = sphi 0, %s417
      %s421 = sphi 0, %s420
      %s437 = sphi 0, %s421
    $region4: #{tpu_custom_call.1} parent=1 // loop_header_branch
      %34 = sbr.rel (%p32) target = $region8
    $region5: #{tpu_custom_call.1} parent=1 // loop_body
      %s36 = ssub.s32 %s31, 1
      %s37 = ssub.s32 %s31, 2
      %s44 = sadd.s32 1, %s39
      %p45 = scmp.ge.s32.totalorder %s44, 1
      %s46 = scalar_select %p45, 0, %s44
      %s47 = sadd.s32 1, %s38
      %s48 = scalar_select %p45, %s47, %s38
      %p49 = scmp.ge.s32.totalorder %s48, 2
      %s50 = scalar_select %p49, 0, %s48
      %s51 = ssub.s32 %s38, %s50
      %p52 = scmp.eq.s32.totalorder %s51, 0
      %s54 = sadd.s32 %s53, 1
      %s55 = scalar_select %p52, %s53, %s54
      %p58 = pneg %p52
      %p59 = scmp.eq.s32.totalorder %s31, 1
      %p60 = por %p58, %p59
      %p61 = scmp.ne.s32.totalorder %s53, %s56
      %p62 = scmp.eq.s32.totalorder %s31, 0
      %p63 = por %p61, %p62
      %p64 = scmp.ne.s32.totalorder %s53, %s56
      %p65 = scmp.eq.s32.totalorder %s36, 1
      %p66 = por %p64, %p65
      %p67 = scmp.ne.s32.totalorder %s56, %s57
      %p68 = scmp.eq.s32.totalorder %s36, 0
      %p69 = por %p67, %p68
      %p70 = scmp.ne.s32.totalorder %s56, %s57
      %p71 = scmp.eq.s32.totalorder %s37, 1
      %p72 = por %p70, %p71
      %p74 = scmp.ne.s32.totalorder %s57, %s73
      %p75 = scmp.eq.s32.totalorder %s37, 0
      %p76 = por %p74, %p75
      %s78 = sadd.s32 %s77, 1
      %p81 = scmp.eq.s32.totalorder %s31, 1
      %p82 = scmp.ne.s32.totalorder %s77, %s79
      %p83 = scmp.eq.s32.totalorder %s31, 0
      %p84 = por %p82, %p83
      %p85 = scmp.ne.s32.totalorder %s77, %s79
      %p86 = scmp.eq.s32.totalorder %s36, 1
      %p87 = por %p85, %p86
      %p88 = scmp.ne.s32.totalorder %s79, %s80
      %p89 = scmp.eq.s32.totalorder %s36, 0
      %p90 = por %p88, %p89
      %p91 = scmp.ne.s32.totalorder %s79, %s80
      %p92 = scmp.eq.s32.totalorder %s37, 1
      %p93 = por %p91, %p92
      %p95 = scmp.ne.s32.totalorder %s80, %s94
      %p96 = scmp.eq.s32.totalorder %s37, 0
      %p97 = por %p95, %p96
      %s99 = sadd.s32 %s98, 1
      %p102 = scmp.eq.s32.totalorder %s31, 1
      %p103 = scmp.ne.s32.totalorder %s98, %s100
      %p104 = scmp.eq.s32.totalorder %s31, 0
      %p105 = por %p103, %p104
      %p106 = scmp.ne.s32.totalorder %s98, %s100
      %p107 = scmp.eq.s32.totalorder %s36, 1
      %p108 = por %p106, %p107
      %p109 = scmp.ne.s32.totalorder %s100, %s101
      %p110 = scmp.eq.s32.totalorder %s36, 0
      %p111 = por %p109, %p110
      %p112 = scmp.ne.s32.totalorder %s100, %s101
      %p113 = scmp.eq.s32.totalorder %s37, 1
      %p114 = por %p112, %p113
      %p116 = scmp.ne.s32.totalorder %s101, %s115
      %p117 = scmp.eq.s32.totalorder %s37, 0
      %p118 = por %p116, %p117
      %s120 = sadd.s32 %s119, 1
      %p123 = scmp.eq.s32.totalorder %s31, 1
      %p124 = scmp.ne.s32.totalorder %s119, %s121
      %p125 = scmp.eq.s32.totalorder %s31, 0
      %p126 = por %p124, %p125
      %p127 = scmp.ne.s32.totalorder %s119, %s121
      %p128 = scmp.eq.s32.totalorder %s36, 1
      %p129 = por %p127, %p128
      %p130 = scmp.ne.s32.totalorder %s121, %s122
      %p131 = scmp.eq.s32.totalorder %s36, 0
      %p132 = por %p130, %p131
      %p133 = scmp.ne.s32.totalorder %s121, %s122
      %p134 = scmp.eq.s32.totalorder %s37, 1
      %p135 = por %p133, %p134
      %p137 = scmp.ne.s32.totalorder %s122, %s136
      %p138 = scmp.eq.s32.totalorder %s37, 0
      %p139 = por %p137, %p138
      %s141 = sadd.s32 %s140, 1
      %p144 = scmp.eq.s32.totalorder %s31, 1
      %p145 = scmp.ne.s32.totalorder %s140, %s142
      %p146 = scmp.eq.s32.totalorder %s31, 0
      %p147 = por %p145, %p146
      %p148 = scmp.ne.s32.totalorder %s140, %s142
      %p149 = scmp.eq.s32.totalorder %s36, 1
      %p150 = por %p148, %p149
      %p151 = scmp.ne.s32.totalorder %s142, %s143
      %p152 = scmp.eq.s32.totalorder %s36, 0
      %p153 = por %p151, %p152
      %p154 = scmp.ne.s32.totalorder %s142, %s143
      %p155 = scmp.eq.s32.totalorder %s37, 1
      %p156 = por %p154, %p155
      %p158 = scmp.ne.s32.totalorder %s143, %s157
      %p159 = scmp.eq.s32.totalorder %s37, 0
      %p160 = por %p158, %p159
      %s162 = sadd.s32 %s161, 1
      %p165 = scmp.eq.s32.totalorder %s31, 1
      %p166 = scmp.ne.s32.totalorder %s161, %s163
      %p167 = scmp.eq.s32.totalorder %s31, 0
      %p168 = por %p166, %p167
      %p169 = scmp.ne.s32.totalorder %s161, %s163
      %p170 = scmp.eq.s32.totalorder %s36, 1
      %p171 = por %p169, %p170
      %p172 = scmp.ne.s32.totalorder %s163, %s164
      %p173 = scmp.eq.s32.totalorder %s36, 0
      %p174 = por %p172, %p173
      %p175 = scmp.ne.s32.totalorder %s163, %s164
      %p176 = scmp.eq.s32.totalorder %s37, 1
      %p177 = por %p175, %p176
      %p179 = scmp.ne.s32.totalorder %s164, %s178
      %p180 = scmp.eq.s32.totalorder %s37, 0
      %p181 = por %p179, %p180
      %s183 = sadd.s32 %s182, 1
      %p186 = scmp.eq.s32.totalorder %s31, 1
      %p187 = scmp.ne.s32.totalorder %s182, %s184
      %p188 = scmp.eq.s32.totalorder %s31, 0
      %p189 = por %p187, %p188
      %p190 = scmp.ne.s32.totalorder %s182, %s184
      %p191 = scmp.eq.s32.totalorder %s36, 1
      %p192 = por %p190, %p191
      %p193 = scmp.ne.s32.totalorder %s184, %s185
      %p194 = scmp.eq.s32.totalorder %s36, 0
      %p195 = por %p193, %p194
      %p196 = scmp.ne.s32.totalorder %s184, %s185
      %p197 = scmp.eq.s32.totalorder %s37, 1
      %p198 = por %p196, %p197
      %p200 = scmp.ne.s32.totalorder %s185, %s199
      %p201 = scmp.eq.s32.totalorder %s37, 0
      %p202 = por %p200, %p201
      %s204 = sadd.s32 %s203, 1
      %p207 = scmp.eq.s32.totalorder %s31, 1
      %p208 = scmp.ne.s32.totalorder %s203, %s205
      %p209 = scmp.eq.s32.totalorder %s31, 0
      %p210 = por %p208, %p209
      %p211 = scmp.ne.s32.totalorder %s203, %s205
      %p212 = scmp.eq.s32.totalorder %s36, 1
      %p213 = por %p211, %p212
      %p214 = scmp.ne.s32.totalorder %s205, %s206
      %p215 = scmp.eq.s32.totalorder %s36, 0
      %p216 = por %p214, %p215
      %p217 = scmp.ne.s32.totalorder %s205, %s206
      %p218 = scmp.eq.s32.totalorder %s37, 1
      %p219 = por %p217, %p218
      %p221 = scmp.ne.s32.totalorder %s206, %s220
      %p222 = scmp.eq.s32.totalorder %s37, 0
      %p223 = por %p221, %p222
      %s225 = sadd.s32 %s224, 1
      %p228 = scmp.eq.s32.totalorder %s31, 1
      %p229 = scmp.ne.s32.totalorder %s224, %s226
      %p230 = scmp.eq.s32.totalorder %s31, 0
      %p231 = por %p229, %p230
      %p232 = scmp.ne.s32.totalorder %s224, %s226
      %p233 = scmp.eq.s32.totalorder %s36, 1
      %p234 = por %p232, %p233
      %p235 = scmp.ne.s32.totalorder %s226, %s227
      %p236 = scmp.eq.s32.totalorder %s36, 0
      %p237 = por %p235, %p236
      %p238 = scmp.ne.s32.totalorder %s226, %s227
      %p239 = scmp.eq.s32.totalorder %s37, 1
      %p240 = por %p238, %p239
      %p242 = scmp.ne.s32.totalorder %s227, %s241
      %p243 = scmp.eq.s32.totalorder %s37, 0
      %p244 = por %p242, %p243
      %s246 = sadd.s32 %s245, 1
      %p249 = scmp.eq.s32.totalorder %s31, 1
      %p250 = scmp.ne.s32.totalorder %s245, %s247
      %p251 = scmp.eq.s32.totalorder %s31, 0
      %p252 = por %p250, %p251
      %p253 = scmp.ne.s32.totalorder %s245, %s247
      %p254 = scmp.eq.s32.totalorder %s36, 1
      %p255 = por %p253, %p254
      %p256 = scmp.ne.s32.totalorder %s247, %s248
      %p257 = scmp.eq.s32.totalorder %s36, 0
      %p258 = por %p256, %p257
      %p259 = scmp.ne.s32.totalorder %s247, %s248
      %p260 = scmp.eq.s32.totalorder %s37, 1
      %p261 = por %p259, %p260
      %p263 = scmp.ne.s32.totalorder %s248, %s262
      %p264 = scmp.eq.s32.totalorder %s37, 0
      %p265 = por %p263, %p264
      %s267 = sadd.s32 %s266, 1
      %p270 = scmp.eq.s32.totalorder %s31, 1
      %p271 = scmp.ne.s32.totalorder %s266, %s268
      %p272 = scmp.eq.s32.totalorder %s31, 0
      %p273 = por %p271, %p272
      %p274 = scmp.ne.s32.totalorder %s266, %s268
      %p275 = scmp.eq.s32.totalorder %s36, 1
      %p276 = por %p274, %p275
      %p277 = scmp.ne.s32.totalorder %s268, %s269
      %p278 = scmp.eq.s32.totalorder %s36, 0
      %p279 = por %p277, %p278
      %p280 = scmp.ne.s32.totalorder %s268, %s269
      %p281 = scmp.eq.s32.totalorder %s37, 1
      %p282 = por %p280, %p281
      %p284 = scmp.ne.s32.totalorder %s269, %s283
      %p285 = scmp.eq.s32.totalorder %s37, 0
      %p286 = por %p284, %p285
      %s288 = sadd.s32 %s287, 1
      %p291 = scmp.eq.s32.totalorder %s31, 1
      %p292 = scmp.ne.s32.totalorder %s287, %s289
      %p293 = scmp.eq.s32.totalorder %s31, 0
      %p294 = por %p292, %p293
      %p295 = scmp.ne.s32.totalorder %s287, %s289
      %p296 = scmp.eq.s32.totalorder %s36, 1
      %p297 = por %p295, %p296
      %p298 = scmp.ne.s32.totalorder %s289, %s290
      %p299 = scmp.eq.s32.totalorder %s36, 0
      %p300 = por %p298, %p299
      %p301 = scmp.ne.s32.totalorder %s289, %s290
      %p302 = scmp.eq.s32.totalorder %s37, 1
      %p303 = por %p301, %p302
      %p305 = scmp.ne.s32.totalorder %s290, %s304
      %p306 = scmp.eq.s32.totalorder %s37, 0
      %p307 = por %p305, %p306
      %s309 = sadd.s32 %s308, 1
      %p312 = scmp.eq.s32.totalorder %s31, 1
      %p313 = scmp.ne.s32.totalorder %s308, %s310
      %p314 = scmp.eq.s32.totalorder %s31, 0
      %p315 = por %p313, %p314
      %p316 = scmp.ne.s32.totalorder %s308, %s310
      %p317 = scmp.eq.s32.totalorder %s36, 1
      %p318 = por %p316, %p317
      %p319 = scmp.ne.s32.totalorder %s310, %s311
      %p320 = scmp.eq.s32.totalorder %s36, 0
      %p321 = por %p319, %p320
      %p322 = scmp.ne.s32.totalorder %s310, %s311
      %p323 = scmp.eq.s32.totalorder %s37, 1
      %p324 = por %p322, %p323
      %p326 = scmp.ne.s32.totalorder %s311, %s325
      %p327 = scmp.eq.s32.totalorder %s37, 0
      %p328 = por %p326, %p327
      %s330 = sadd.s32 %s329, 1
      %p333 = scmp.eq.s32.totalorder %s31, 1
      %p334 = scmp.ne.s32.totalorder %s329, %s331
      %p335 = scmp.eq.s32.totalorder %s31, 0
      %p336 = por %p334, %p335
      %p337 = scmp.ne.s32.totalorder %s329, %s331
      %p338 = scmp.eq.s32.totalorder %s36, 1
      %p339 = por %p337, %p338
      %p340 = scmp.ne.s32.totalorder %s331, %s332
      %p341 = scmp.eq.s32.totalorder %s36, 0
      %p342 = por %p340, %p341
      %p343 = scmp.ne.s32.totalorder %s331, %s332
      %p344 = scmp.eq.s32.totalorder %s37, 1
      %p345 = por %p343, %p344
      %p347 = scmp.ne.s32.totalorder %s332, %s346
      %p348 = scmp.eq.s32.totalorder %s37, 0
      %p349 = por %p347, %p348
      %s351 = sadd.s32 %s350, 1
      %p354 = scmp.eq.s32.totalorder %s31, 1
      %p355 = scmp.ne.s32.totalorder %s350, %s352
      %p356 = scmp.eq.s32.totalorder %s31, 0
      %p357 = por %p355, %p356
      %p358 = scmp.ne.s32.totalorder %s350, %s352
      %p359 = scmp.eq.s32.totalorder %s36, 1
      %p360 = por %p358, %p359
      %p361 = scmp.ne.s32.totalorder %s352, %s353
      %p362 = scmp.eq.s32.totalorder %s36, 0
      %p363 = por %p361, %p362
      %p364 = scmp.ne.s32.totalorder %s352, %s353
      %p365 = scmp.eq.s32.totalorder %s37, 1
      %p366 = por %p364, %p365
      %p368 = scmp.ne.s32.totalorder %s353, %s367
      %p369 = scmp.eq.s32.totalorder %s37, 0
      %p370 = por %p368, %p369
      %s372 = sadd.s32 %s371, 1
      %p375 = scmp.eq.s32.totalorder %s31, 1
      %p376 = scmp.ne.s32.totalorder %s371, %s373
      %p377 = scmp.eq.s32.totalorder %s31, 0
      %p378 = por %p376, %p377
      %p379 = scmp.ne.s32.totalorder %s371, %s373
      %p380 = scmp.eq.s32.totalorder %s36, 1
      %p381 = por %p379, %p380
      %p382 = scmp.ne.s32.totalorder %s373, %s374
      %p383 = scmp.eq.s32.totalorder %s36, 0
      %p384 = por %p382, %p383
      %p385 = scmp.ne.s32.totalorder %s373, %s374
      %p386 = scmp.eq.s32.totalorder %s37, 1
      %p387 = por %p385, %p386
      %p389 = scmp.ne.s32.totalorder %s374, %s388
      %p390 = scmp.eq.s32.totalorder %s37, 0
      %p391 = por %p389, %p390
      %s393 = sadd.s32 %s392, 1
      %p396 = scmp.eq.s32.totalorder %s31, 1
      %p397 = scmp.ne.s32.totalorder %s392, %s394
      %p398 = scmp.eq.s32.totalorder %s31, 0
      %p399 = por %p397, %p398
      %p400 = scmp.ne.s32.totalorder %s392, %s394
      %p401 = scmp.eq.s32.totalorder %s36, 1
      %p402 = por %p400, %p401
      %p403 = scmp.ne.s32.totalorder %s394, %s395
      %p404 = scmp.eq.s32.totalorder %s36, 0
      %p405 = por %p403, %p404
      %p406 = scmp.ne.s32.totalorder %s394, %s395
      %p407 = scmp.eq.s32.totalorder %s37, 1
      %p408 = por %p406, %p407
      %p410 = scmp.ne.s32.totalorder %s395, %s409
      %p411 = scmp.eq.s32.totalorder %s37, 0
      %p412 = por %p410, %p411
      %s413 = ssub.s32 %s38, %s50
      %s414 = ssub.s32 %s39, %s46
      %s415 = sor.u32 %s413, %s414
      %p416 = scmp.eq.s32.totalorder %s415, 0
      %s418 = sadd.s32 %s417, 1
      %s419 = scalar_select %p416, %s417, %s418
      %p422 = pneg %p416
      %p423 = scmp.eq.s32.totalorder %s31, 1
      %p424 = por %p422, %p423
      %p425 = scmp.ne.s32.totalorder %s417, %s420
      %p426 = scmp.eq.s32.totalorder %s31, 0
      %p427 = por %p425, %p426
      %p428 = scmp.ne.s32.totalorder %s417, %s420
      %p429 = scmp.eq.s32.totalorder %s36, 1
      %p430 = por %p428, %p429
      %p431 = scmp.ne.s32.totalorder %s420, %s421
      %p432 = scmp.eq.s32.totalorder %s36, 0
      %p433 = por %p431, %p432
      %p434 = scmp.ne.s32.totalorder %s420, %s421
      %p435 = scmp.eq.s32.totalorder %s37, 1
      %p436 = por %p434, %p435
      %p438 = scmp.ne.s32.totalorder %s421, %s437
      %p439 = scmp.eq.s32.totalorder %s37, 0
      %p440 = por %p438, %p439
      %p441 = scmp.le.s32.totalorder 1, %s31
      %p442 = scmp.lt.s32.totalorder %s31, 3
      %p443 = pnand %p441, %p442
      %p444 = pneg %p443
      // Predicated region
      $region9: #{tpu_custom_call.1} parent=5 // pred_check
        _
      $region10: #{tpu_custom_call.1} parent=5 // pred_check_branch
        %446 = sbr.rel (%p443) target = $region12
      $region11: #{tpu_custom_call.1} parent=5 // pred_region
        %s447 = ssub.s32 %s31, 1
        // Predicated region
        $region13: #{tpu_custom_call.1} parent=11 // pred_check
          %p448 = pneg %p90
        $region14: #{tpu_custom_call.1} parent=11 // pred_check_branch
          %450 = sbr.rel (%p448) target = $region16
        $region15: #{tpu_custom_call.1} parent=11 // pred_region
          _
        $region16: #{tpu_custom_call.1} parent=11 // pred_fallthru
          _
        // Predicated region
        $region17: #{tpu_custom_call.1} parent=11 // pred_check
          %p451 = pneg %p111
        $region18: #{tpu_custom_call.1} parent=11 // pred_check_branch
          %453 = sbr.rel (%p451) target = $region20
        $region19: #{tpu_custom_call.1} parent=11 // pred_region
          %s455 = ssub.s32 16, 16
          %456 = vsyncadd [#allocation6], %s455
          %s458 = sshll.u32 [#allocation5], 4
          %s459 = int_to_ptr.vmem [resolvable:$true] %s458
          %461 = dma.hbm_to_vmem [thread:$0]  %s2, 16, %s459, [#allocation6]
        $region20: #{tpu_custom_call.1} parent=11 // pred_fallthru
          _
        // Predicated region
        $region21: #{tpu_custom_call.1} parent=11 // pred_check
          %p462 = pneg %p132
        $region22: #{tpu_custom_call.1} parent=11 // pred_check_branch
          %464 = sbr.rel (%p462) target = $region24
        $region23: #{tpu_custom_call.1} parent=11 // pred_region
          _
        $region24: #{tpu_custom_call.1} parent=11 // pred_fallthru
          _
        // Predicated region
        $region25: #{tpu_custom_call.1} parent=11 // pred_check
          %p465 = pneg %p153
        $region26: #{tpu_custom_call.1} parent=11 // pred_check_branch
          %467 = sbr.rel (%p465) target = $region28
        $region27: #{tpu_custom_call.1} parent=11 // pred_region
          _
        $region28: #{tpu_custom_call.1} parent=11 // pred_fallthru
          _
        // Predicated region
        $region29: #{tpu_custom_call.1} parent=11 // pred_check
          %p468 = pneg %p174
        $region30: #{tpu_custom_call.1} parent=11 // pred_check_branch
          %470 = sbr.rel (%p468) target = $region32
        $region31: #{tpu_custom_call.1} parent=11 // pred_region
          %s472 = ssub.s32 256, 256
          %473 = vsyncadd [#allocation9], %s472
          %s474 = sshll.u32 [#allocation8], 4
          %s475 = int_to_ptr.vmem [resolvable:$true] %s474
          %480 = dma.hbm_to_vmem [thread:$0]  %s5, 256, %s475, [#allocation9], 64, 64, 4
        $region32: #{tpu_custom_call.1} parent=11 // pred_fallthru
          _
        // Predicated region
        $region33: #{tpu_custom_call.1} parent=11 // pred_check
          %p481 = pneg %p195
        $region34: #{tpu_custom_call.1} parent=11 // pred_check_branch
          %483 = sbr.rel (%p481) target = $region36
        $region35: #{tpu_custom_call.1} parent=11 // pred_region
          %s485 = ssub.s32 16, 16
          %486 = vsyncadd [#allocation9], %s485
          %s488 = sshll.u32 [#allocation10], 4
          %s489 = int_to_ptr.vmem [resolvable:$true] %s488
          %491 = dma.hbm_to_vmem [thread:$0]  %s6, 16, %s489, [#allocation9]
        $region36: #{tpu_custom_call.1} parent=11 // pred_fallthru
          _
        // Predicated region
        $region37: #{tpu_custom_call.1} parent=11 // pred_check
          %p492 = pneg %p216
        $region38: #{tpu_custom_call.1} parent=11 // pred_check_branch
          %494 = sbr.rel (%p492) target = $region40
        $region39: #{tpu_custom_call.1} parent=11 // pred_region
          %s496 = ssub.s32 16, 16
          %497 = vsyncadd [#allocation12], %s496
          %s499 = sshll.u32 [#allocation11], 4
          %s500 = int_to_ptr.vmem [resolvable:$true] %s499
          %502 = dma.hbm_to_vmem [thread:$0]  %s7, 16, %s500, [#allocation12]
        $region40: #{tpu_custom_call.1} parent=11 // pred_fallthru
          _
        // Predicated region
        $region41: #{tpu_custom_call.1} parent=11 // pred_check
          %p503 = pneg %p237
        $region42: #{tpu_custom_call.1} parent=11 // pred_check_branch
          %505 = sbr.rel (%p503) target = $region44
        $region43: #{tpu_custom_call.1} parent=11 // pred_region
          %s507 = ssub.s32 16, 16
          %508 = vsyncadd [#allocation12], %s507
          %s510 = sshll.u32 [#allocation13], 4
          %s511 = int_to_ptr.vmem [resolvable:$true] %s510
          %513 = dma.hbm_to_vmem [thread:$0]  %s8, 16, %s511, [#allocation12]
        $region44: #{tpu_custom_call.1} parent=11 // pred_fallthru
          _
        // Predicated region
        $region45: #{tpu_custom_call.1} parent=11 // pred_check
          %p514 = pneg %p258
        $region46: #{tpu_custom_call.1} parent=11 // pred_check_branch
          %516 = sbr.rel (%p514) target = $region48
        $region47: #{tpu_custom_call.1} parent=11 // pred_region
          _
        $region48: #{tpu_custom_call.1} parent=11 // pred_fallthru
          _
        // Predicated region
        $region49: #{tpu_custom_call.1} parent=11 // pred_check
          %p517 = pneg %p279
        $region50: #{tpu_custom_call.1} parent=11 // pred_check_branch
          %519 = sbr.rel (%p517) target = $region52
        $region51: #{tpu_custom_call.1} parent=11 // pred_region
          %s521 = ssub.s32 16, 16
          %522 = vsyncadd [#allocation15], %s521
          %s524 = sshll.u32 [#allocation14], 4
          %s525 = int_to_ptr.vmem [resolvable:$true] %s524
          %527 = dma.hbm_to_vmem [thread:$0]  %s10, 16, %s525, [#allocation15]
        $region52: #{tpu_custom_call.1} parent=11 // pred_fallthru
          _
        // Predicated region
        $region53: #{tpu_custom_call.1} parent=11 // pred_check
          %p528 = pneg %p300
        $region54: #{tpu_custom_call.1} parent=11 // pred_check_branch
          %530 = sbr.rel (%p528) target = $region56
        $region55: #{tpu_custom_call.1} parent=11 // pred_region
          %s532 = ssub.s32 16, 16
          %533 = vsyncadd [#allocation15], %s532
          %s535 = sshll.u32 [#allocation16], 4
          %s536 = int_to_ptr.vmem [resolvable:$true] %s535
          %538 = dma.hbm_to_vmem [thread:$0]  %s11, 16, %s536, [#allocation15]
        $region56: #{tpu_custom_call.1} parent=11 // pred_fallthru
          _
        // Predicated region
        $region57: #{tpu_custom_call.1} parent=11 // pred_check
          %p539 = pneg %p321
        $region58: #{tpu_custom_call.1} parent=11 // pred_check_branch
          %541 = sbr.rel (%p539) target = $region60
        $region59: #{tpu_custom_call.1} parent=11 // pred_region
          %s543 = ssub.s32 16, 16
          %544 = vsyncadd [#allocation18], %s543
          %s546 = sshll.u32 [#allocation17], 4
          %s547 = int_to_ptr.vmem [resolvable:$true] %s546
          %549 = dma.hbm_to_vmem [thread:$0]  %s12, 16, %s547, [#allocation18]
        $region60: #{tpu_custom_call.1} parent=11 // pred_fallthru
          _
        // Predicated region
        $region61: #{tpu_custom_call.1} parent=11 // pred_check
          %p550 = pneg %p342
        $region62: #{tpu_custom_call.1} parent=11 // pred_check_branch
          %552 = sbr.rel (%p550) target = $region64
        $region63: #{tpu_custom_call.1} parent=11 // pred_region
          _
        $region64: #{tpu_custom_call.1} parent=11 // pred_fallthru
          _
        // Predicated region
        $region65: #{tpu_custom_call.1} parent=11 // pred_check
          %p553 = pneg %p363
        $region66: #{tpu_custom_call.1} parent=11 // pred_check_branch
          %555 = sbr.rel (%p553) target = $region68
        $region67: #{tpu_custom_call.1} parent=11 // pred_region
          _
        $region68: #{tpu_custom_call.1} parent=11 // pred_fallthru
          _
        // Predicated region
        $region69: #{tpu_custom_call.1} parent=11 // pred_check
          %p556 = pneg %p384
        $region70: #{tpu_custom_call.1} parent=11 // pred_check_branch
          %558 = sbr.rel (%p556) target = $region72
        $region71: #{tpu_custom_call.1} parent=11 // pred_region
          _
        $region72: #{tpu_custom_call.1} parent=11 // pred_fallthru
          _
        // Predicated region
        $region73: #{tpu_custom_call.1} parent=11 // pred_check
          %p559 = pneg %p405
        $region74: #{tpu_custom_call.1} parent=11 // pred_check_branch
          %561 = sbr.rel (%p559) target = $region76
        $region75: #{tpu_custom_call.1} parent=11 // pred_region
          _
        $region76: #{tpu_custom_call.1} parent=11 // pred_fallthru
          _
      $region12: #{tpu_custom_call.1} parent=5 // pred_fallthru
        _
      %p562 = scmp.lt.s32.totalorder %s31, 2
      // Predicated region
      $region77: #{tpu_custom_call.1} parent=5 // pred_check
        %p563 = pneg %p562
      $region78: #{tpu_custom_call.1} parent=5 // pred_check_branch
        %565 = sbr.rel (%p563) target = $region80
      $region79: #{tpu_custom_call.1} parent=5 // pred_region
        // Predicated region
        $region81: #{tpu_custom_call.1} parent=79 // pred_check
          %p566 = pneg %p63
        $region82: #{tpu_custom_call.1} parent=79 // pred_check_branch
          %568 = sbr.rel (%p566) target = $region84
        $region83: #{tpu_custom_call.1} parent=79 // pred_region
          %p569 = scmp.lt.s32.totalorder %s38, 1
          %s570 = scalar_select %p569, %s38, 1
          %s571 = smul.addr %s570, 8
          %s572 = scalar_lea.vmem %s0, %s571
        $region84: #{tpu_custom_call.1} parent=79 // pred_fallthru
          _
      $region80: #{tpu_custom_call.1} parent=5 // pred_fallthru
        _
      %p573 = scmp.le.s32.totalorder 1, %s31
      %p574 = scmp.lt.s32.totalorder %s31, 3
      %p575 = pnand %p573, %p574
      %p576 = pneg %p575
      // Predicated region
      $region85: #{tpu_custom_call.1} parent=5 // pred_check
        _
      $region86: #{tpu_custom_call.1} parent=5 // pred_check_branch
        %578 = sbr.rel (%p575) target = $region88
      $region87: #{tpu_custom_call.1} parent=5 // pred_region
        %s579 = ssub.s32 %s31, 1
        // Predicated region
        $region89: #{tpu_custom_call.1} parent=87 // pred_check
          %p580 = pneg %p111
        $region90: #{tpu_custom_call.1} parent=87 // pred_check_branch
          %582 = sbr.rel (%p580) target = $region92
        $region91: #{tpu_custom_call.1} parent=87 // pred_region
          %583 = dma.done [#allocation6], 16
        $region92: #{tpu_custom_call.1} parent=87 // pred_fallthru
          _
        // Predicated region
        $region93: #{tpu_custom_call.1} parent=87 // pred_check
          %p584 = pneg %p174
        $region94: #{tpu_custom_call.1} parent=87 // pred_check_branch
          %586 = sbr.rel (%p584) target = $region96
        $region95: #{tpu_custom_call.1} parent=87 // pred_region
          %587 = dma.done [#allocation9], 256
        $region96: #{tpu_custom_call.1} parent=87 // pred_fallthru
          _
        // Predicated region
        $region97: #{tpu_custom_call.1} parent=87 // pred_check
          %p588 = pneg %p195
        $region98: #{tpu_custom_call.1} parent=87 // pred_check_branch
          %590 = sbr.rel (%p588) target = $region100
        $region99: #{tpu_custom_call.1} parent=87 // pred_region
          %591 = dma.done [#allocation9], 16
        $region100: #{tpu_custom_call.1} parent=87 // pred_fallthru
          _
        // Predicated region
        $region101: #{tpu_custom_call.1} parent=87 // pred_check
          %p592 = pneg %p216
        $region102: #{tpu_custom_call.1} parent=87 // pred_check_branch
          %594 = sbr.rel (%p592) target = $region104
        $region103: #{tpu_custom_call.1} parent=87 // pred_region
          %595 = dma.done [#allocation12], 16
        $region104: #{tpu_custom_call.1} parent=87 // pred_fallthru
          _
        // Predicated region
        $region105: #{tpu_custom_call.1} parent=87 // pred_check
          %p596 = pneg %p237
        $region106: #{tpu_custom_call.1} parent=87 // pred_check_branch
          %598 = sbr.rel (%p596) target = $region108
        $region107: #{tpu_custom_call.1} parent=87 // pred_region
          %599 = dma.done [#allocation12], 16
        $region108: #{tpu_custom_call.1} parent=87 // pred_fallthru
          _
        // Predicated region
        $region109: #{tpu_custom_call.1} parent=87 // pred_check
          %p600 = pneg %p279
        $region110: #{tpu_custom_call.1} parent=87 // pred_check_branch
          %602 = sbr.rel (%p600) target = $region112
        $region111: #{tpu_custom_call.1} parent=87 // pred_region
          %603 = dma.done [#allocation15], 16
        $region112: #{tpu_custom_call.1} parent=87 // pred_fallthru
          _
        // Predicated region
        $region113: #{tpu_custom_call.1} parent=87 // pred_check
          %p604 = pneg %p300
        $region114: #{tpu_custom_call.1} parent=87 // pred_check_branch
          %606 = sbr.rel (%p604) target = $region116
        $region115: #{tpu_custom_call.1} parent=87 // pred_region
          %607 = dma.done [#allocation15], 16
        $region116: #{tpu_custom_call.1} parent=87 // pred_fallthru
          _
        // Predicated region
        $region117: #{tpu_custom_call.1} parent=87 // pred_check
          %p608 = pneg %p321
        $region118: #{tpu_custom_call.1} parent=87 // pred_check_branch
          %610 = sbr.rel (%p608) target = $region120
        $region119: #{tpu_custom_call.1} parent=87 // pred_region
          %611 = dma.done [#allocation18], 16
        $region120: #{tpu_custom_call.1} parent=87 // pred_fallthru
          _
        %p612 = scmp.lt.s32.totalorder %s40, 1
        %s613 = scalar_select %p612, %s40, 1
        %s614 = smul.addr %s613, 8
        %s615 = scalar_lea.vmem %s0, %s614
        %p616 = pneg %p69
        %p617 = pneg %p66
        %p618 = pneg %p90
        %p619 = pneg %p87
        %p620 = pneg %p111
        %p621 = pneg %p108
        %p622 = pneg %p132
        %p623 = pneg %p129
        %p624 = pneg %p153
        %p625 = pneg %p150
        %p626 = pneg %p174
        %p627 = pneg %p171
        %p628 = pneg %p195
        %p629 = pneg %p192
        %p630 = pneg %p216
        %p631 = pneg %p213
        %p632 = pneg %p237
        %p633 = pneg %p234
        %p634 = pneg %p258
        %p635 = pneg %p255
        %p636 = pneg %p279
        %p637 = pneg %p276
        %p638 = pneg %p300
        %p639 = pneg %p297
        %p640 = pneg %p321
        %p641 = pneg %p318
        %p642 = pneg %p342
        %p643 = pneg %p339
        %p644 = pneg %p363
        %p645 = pneg %p360
        %p646 = pneg %p384
        %p647 = pneg %p381
        %p648 = pneg %p405
        %p649 = pneg %p402
        %p650 = pneg %p433
        %p651 = pneg %p430
        %s652 = sand.u32 %s420, 1
        %s653 = scalar_lea.sflag [#allocation7], %s652
        %s654 = sand.u32 %s420, 1
        %s655 = smul.addr %s654, 8
        %s656 = scalar_lea.vmem [#allocation19], %s655
        %p657 = scmp.lt.s32.totalorder %s40, 1
        %s658 = scalar_select %p657, %s40, 1
        %s659 = smul.addr %s658, 8
        %s660 = scalar_lea.vmem %s0, %s659
        %p662 = scmp.eq.s32.totalorder %s41, 0
        // Predicated region
        $region121: #{tpu_custom_call.1} parent=87 // pred_check
          %p663 = pneg %p662
        $region122: #{tpu_custom_call.1} parent=87 // pred_check_branch
          %665 = sbr.rel (%p663) target = $region124
        $region123: #{tpu_custom_call.1} parent=87 // pred_region
          %v666 = vld [vmem:[%s660] sm:$0xff]
          %v667 = vld [vmem:[%s1] sm:$0x1]
          %v668 = vld [vmem:[#allocation5] sm:$0x1]
          %vm669 = vcmask 261120
          %v670 = vsel %vm669, %v666, 0.0
          %671 = vadd.xlane.f32.xlu0 %v670
          %v672 = vpop.xlane.xlu0 %671
          %v673 = vrcp.pop 32.0
          %v674 = vmul.f32 %v672, %v673
          %v675 = vsub.f32 %v666, %v674
          %v676 = vmul.f32 %v675, %v675
          %v677 = vsel %vm669, %v676, 0.0
          %678 = vadd.xlane.f32.xlu0 %v677
          %v679 = vpop.xlane.xlu0 %678
          %v680 = vmul.f32 %v679, %v673
          %v681 = vadd.f32 %v680, 1e-05
          %v682 = vrsqrt.pop %v681
          %v683 = vmul.f32 %v675, %v682
          %v685 = vlaneseq
          %v686 = vshrl.u32 %v685, 7
          %v687 = vsub.s32 0, %v686
          %v688 = vrot.slane %v667, %v687
          %v690 = vmul.f32 %v683, %v688
          %v692 = vlaneseq
          %v693 = vshrl.u32 %v692, 7
          %v694 = vsub.s32 0, %v693
          %v695 = vrot.slane %v668, %v694
          %v697 = vadd.f32 %v690, %v695
          %v698 = vpack.c.bf16 %v697, %v697
          %vm699 = vcmask 257024
          %700 = vst.msk [vmem:[#allocation2] sm:$0xf] %vm699, %v698
          %v701 = vld [vmem:[%s4] sm:$0xf]
          %v702 = vld [vmem:[%s4 + $0x4] sm:$0xf]
          %v703 = vld [vmem:[%s4 + $0x8] sm:$0xf]
          %v704 = vld [vmem:[%s4 + $0xc] sm:$0xf]
          %v705 = vld [vmem:[#allocation11] sm:$0x1]
          %v707 = vlaneseq
          %v708 = vshrl.u32 %v707, 7
          %v709 = vsub.s32 0, %v708
          %v710 = vrot.slane %v705, %v709
          %v716 = vunpack.c.l.b16 %v701
          %v717 = vunpack.c.l.b16 %v702
          %v718 = vunpack.c.l.b16 %v703
          %v719 = vunpack.c.l.b16 %v704
          %v720 = vpack.c.b16 %v717, %v716
          %v721 = vpack.c.b16 %v719, %v718
          %v725 = vsel %vm669, %v698, 0
          %727 = vmatprep.subr.bf16.mxu0 0
          %728 = vmatpush1.bf16.msra.mxu0 %v720
          %729 = vmatprep.subr.bf16.mxu0 0
          %730 = vmatpush1.bf16.msra.mxu0 %v721
          %731 = vmatprep.subr.bf16.mxu0 0
          %732 = vmatpush1.bf16.msra.mxu0 0
          %733 = vmatprep.subr.bf16.mxu0 0
          %734 = vmatpush1.bf16.msra.mxu0 0
          %735 = vmatprep.subr.bf16.mxu0 0
          %736 = vmatpush1.bf16.msra.mxu0 0
          %737 = vmatprep.subr.bf16.mxu0 0
          %738 = vmatpush1.bf16.msra.mxu0 0
          %739 = vmatprep.subr.bf16.mxu0 0
          %740 = vmatpush1.bf16.msra.mxu0 0
          %741 = vmatprep.subr.bf16.mxu0 0
          %742 = vmatpush1.bf16.msra.mxu0 0
          %743 = vmatprep.subr.bf16.mxu0 0
          %744 = vmatpush1.bf16.msra.mxu0 0
          %745 = vmatprep.subr.bf16.mxu0 0
          %746 = vmatpush1.bf16.msra.mxu0 0
          %747 = vmatprep.subr.bf16.mxu0 0
          %748 = vmatpush1.bf16.msra.mxu0 0
          %749 = vmatprep.subr.bf16.mxu0 0
          %750 = vmatpush1.bf16.msra.mxu0 0
          %751 = vmatprep.subr.bf16.mxu0 0
          %752 = vmatpush1.bf16.msra.mxu0 0
          %753 = vmatprep.subr.bf16.mxu0 0
          %754 = vmatpush1.bf16.msra.mxu0 0
          %755 = vmatprep.subr.bf16.mxu0 0
          %756 = vmatpush1.bf16.msra.mxu0 0
          %757 = vmatprep.subr.bf16.mxu0 0
          %758 = vmatpush1.bf16.msra.mxu0 0
          %759 = vmatprep.mubr.bf16.mxu0 0
          %760 = vmatmul.mubr.bf16.gmra.mrb[0].mxu0 %v725
          %v761 = vpop.f32.mrb[0].mxu0
          %v762 = vadd.f32 %v710, %v761
          %v763 = vpop.f32.mrb[0].mxu0
          %v764 = vpop.f32.mrb[0].mxu0
          %v765 = vpop.f32.mrb[0].mxu0
          %766 = vdwg.mxu0
          %v767 = vld [vmem:[#allocation8] sm:$0xf]
          %v768 = vld [vmem:[#allocation8 + $0x4] sm:$0xf]
          %v769 = vld [vmem:[#allocation8 + $0x8] sm:$0xf]
          %v770 = vld [vmem:[#allocation8 + $0xc] sm:$0xf]
          %v771 = vld [vmem:[#allocation13] sm:$0x1]
          %v773 = vlaneseq
          %v774 = vshrl.u32 %v773, 7
          %v775 = vsub.s32 0, %v774
          %v776 = vrot.slane %v771, %v775
          %v782 = vunpack.c.l.b16 %v767
          %v783 = vunpack.c.l.b16 %v768
          %v784 = vunpack.c.l.b16 %v769
          %v785 = vunpack.c.l.b16 %v770
          %v786 = vpack.c.b16 %v783, %v782
          %v787 = vpack.c.b16 %v785, %v784
          %790 = vmatprep.subr.bf16.mxu0 0
          %791 = vmatpush1.bf16.msra.mxu0 %v786
          %792 = vmatprep.subr.bf16.mxu0 0
          %793 = vmatpush1.bf16.msra.mxu0 %v787
          %794 = vmatprep.subr.bf16.mxu0 0
          %795 = vmatpush1.bf16.msra.mxu0 0
          %796 = vmatprep.subr.bf16.mxu0 0
          %797 = vmatpush1.bf16.msra.mxu0 0
          %798 = vmatprep.subr.bf16.mxu0 0
          %799 = vmatpush1.bf16.msra.mxu0 0
          %800 = vmatprep.subr.bf16.mxu0 0
          %801 = vmatpush1.bf16.msra.mxu0 0
          %802 = vmatprep.subr.bf16.mxu0 0
          %803 = vmatpush1.bf16.msra.mxu0 0
          %804 = vmatprep.subr.bf16.mxu0 0
          %805 = vmatpush1.bf16.msra.mxu0 0
          %806 = vmatprep.subr.bf16.mxu0 0
          %807 = vmatpush1.bf16.msra.mxu0 0
          %808 = vmatprep.subr.bf16.mxu0 0
          %809 = vmatpush1.bf16.msra.mxu0 0
          %810 = vmatprep.subr.bf16.mxu0 0
          %811 = vmatpush1.bf16.msra.mxu0 0
          %812 = vmatprep.subr.bf16.mxu0 0
          %813 = vmatpush1.bf16.msra.mxu0 0
          %814 = vmatprep.subr.bf16.mxu0 0
          %815 = vmatpush1.bf16.msra.mxu0 0
          %816 = vmatprep.subr.bf16.mxu0 0
          %817 = vmatpush1.bf16.msra.mxu0 0
          %818 = vmatprep.subr.bf16.mxu0 0
          %819 = vmatpush1.bf16.msra.mxu0 0
          %820 = vmatprep.subr.bf16.mxu0 0
          %821 = vmatpush1.bf16.msra.mxu0 0
          %822 = vmatprep.mubr.bf16.mxu0 0
          %823 = vmatmul.mubr.bf16.gmra.mrb[0].mxu0 %v725
          %v824 = vpop.f32.mrb[0].mxu0
          %v825 = vadd.f32 %v776, %v824
          %v826 = vpop.f32.mrb[0].mxu0
          %v827 = vpop.f32.mrb[0].mxu0
          %v828 = vpop.f32.mrb[0].mxu0
          %829 = vdwg.mxu0
          %v830 = vpack.c.bf16 %v762, %v762
          %831 = vst.msk [vmem:[#allocation3] sm:$0xf] %vm699, %v830
          %v832 = vpack.c.bf16 %v825, %v825
          %833 = vst.msk [vmem:[#allocation4] sm:$0xf] %vm699, %v832
        $region124: #{tpu_custom_call.1} parent=87 // pred_fallthru
          _
        %s834 = smul.u32 %s41, 8
        %s835 = scalar_lea.vmem %s660, %s834
        %v836 = vld [vmem:[%s835] sm:$0xff]
        %s837 = sshra.s32 %s834, 3
        %s838 = sand.u32 %s834, 7
        %s839 = smul.addr %s837, 4
        %s840 = scalar_lea.vmem [#allocation2], %s839
        %v841 = vld [vmem:[%s840] sm:$0xf]
        %v842 = vld [vmem:[%s3] sm:$0xf]
        %v843 = vld [vmem:[%s3 + $0x4] sm:$0xf]
        %v844 = vld [vmem:[%s3 + $0x8] sm:$0xf]
        %v845 = vld [vmem:[%s3 + $0xc] sm:$0xf]
        %v846 = vld [vmem:[#allocation10] sm:$0x1]
        %v848 = vlaneseq
        %v849 = vshrl.u32 %v848, 7
        %v850 = vsub.s32 0, %v849
        %v851 = vrot.slane %v846, %v850
        %v857 = vunpack.c.l.b16 %v842
        %v858 = vunpack.c.l.b16 %v843
        %v859 = vunpack.c.l.b16 %v844
        %v860 = vunpack.c.l.b16 %v845
        %v861 = vpack.c.b16 %v858, %v857
        %v862 = vpack.c.b16 %v860, %v859
        %vm865 = vcmask 261120
        %v867 = vsel %vm865, %v841, 0
        %869 = vmatprep.subr.bf16.mxu0 0
        %870 = vmatpush1.bf16.msra.mxu0 %v861
        %871 = vmatprep.subr.bf16.mxu0 0
        %872 = vmatpush1.bf16.msra.mxu0 %v862
        %873 = vmatprep.subr.bf16.mxu0 0
        %874 = vmatpush1.bf16.msra.mxu0 0
        %875 = vmatprep.subr.bf16.mxu0 0
        %876 = vmatpush1.bf16.msra.mxu0 0
        %877 = vmatprep.subr.bf16.mxu0 0
        %878 = vmatpush1.bf16.msra.mxu0 0
        %879 = vmatprep.subr.bf16.mxu0 0
        %880 = vmatpush1.bf16.msra.mxu0 0
        %881 = vmatprep.subr.bf16.mxu0 0
        %882 = vmatpush1.bf16.msra.mxu0 0
        %883 = vmatprep.subr.bf16.mxu0 0
        %884 = vmatpush1.bf16.msra.mxu0 0
        %885 = vmatprep.subr.bf16.mxu0 0
        %886 = vmatpush1.bf16.msra.mxu0 0
        %887 = vmatprep.subr.bf16.mxu0 0
        %888 = vmatpush1.bf16.msra.mxu0 0
        %889 = vmatprep.subr.bf16.mxu0 0
        %890 = vmatpush1.bf16.msra.mxu0 0
        %891 = vmatprep.subr.bf16.mxu0 0
        %892 = vmatpush1.bf16.msra.mxu0 0
        %893 = vmatprep.subr.bf16.mxu0 0
        %894 = vmatpush1.bf16.msra.mxu0 0
        %895 = vmatprep.subr.bf16.mxu0 0
        %896 = vmatpush1.bf16.msra.mxu0 0
        %897 = vmatprep.subr.bf16.mxu0 0
        %898 = vmatpush1.bf16.msra.mxu0 0
        %899 = vmatprep.subr.bf16.mxu0 0
        %900 = vmatpush1.bf16.msra.mxu0 0
        %901 = vmatprep.mubr.bf16.mxu0 0
        %902 = vmatmul.mubr.bf16.gmra.mrb[0].mxu0 %v867
        %v903 = vpop.f32.mrb[0].mxu0
        %v904 = vadd.f32 %v851, %v903
        %v905 = vpop.f32.mrb[0].mxu0
        %v906 = vpop.f32.mrb[0].mxu0
        %v907 = vpop.f32.mrb[0].mxu0
        %908 = vdwg.mxu0
        %v909 = vmul.f32 %v904, 0.35355338
        %911 = vrot.lane.b32.xlu0 %v909, 120
        %v912 = vpop.permute.xlu0 %911
        %914 = vrot.lane.b32.xlu0 %v909, 112
        %v915 = vpop.permute.xlu0 %914
        %917 = vrot.lane.b32.xlu0 %v909, 104
        %v918 = vpop.permute.xlu0 %917
        %v920 = vcombine.low %v909, %v915
        %v921 = vcombine.high %v909, %v915
        %v923 = vunpack.c.l.s4 1983009808
        %v924 = vunpack.c.0.s8 %v923
        %v925 = vlaneseq
        %v926 = vshrl.u32 %v925, 7
        %v927 = vsub.s32 %v924, %v926
        %v928 = vrot.slane %v920, %v927
        %v930 = vunpack.c.l.s4 1983009808
        %v931 = vunpack.c.0.s8 %v930
        %v932 = vlaneseq
        %v933 = vshrl.u32 %v932, 7
        %v934 = vsub.s32 %v931, %v933
        %v935 = vrot.slane %v921, %v934
        %v936 = vcombine.low %v912, %v918
        %v937 = vcombine.high %v912, %v918
        %v939 = vunpack.c.l.s4 1983009808
        %v940 = vunpack.c.0.s8 %v939
        %v941 = vlaneseq
        %v942 = vshrl.u32 %v941, 7
        %v943 = vsub.s32 %v940, %v942
        %v944 = vrot.slane %v936, %v943
        %v946 = vunpack.c.l.s4 1983009808
        %v947 = vunpack.c.0.s8 %v946
        %v948 = vlaneseq
        %v949 = vshrl.u32 %v948, 7
        %v950 = vsub.s32 %v947, %v949
        %v951 = vrot.slane %v937, %v950
        %v952 = vcombine.low %v928, %v944
        %v953 = vcombine.high %v928, %v944
        %v955 = vunpack.c.l.s4 1934713408
        %v956 = vunpack.c.0.s8 %v955
        %v957 = vlaneseq
        %v958 = vshrl.u32 %v957, 7
        %v959 = vsub.s32 %v956, %v958
        %v960 = vrot.slane %v952, %v959
        %v962 = vunpack.c.l.s4 1934713408
        %v963 = vunpack.c.0.s8 %v962
        %v964 = vlaneseq
        %v965 = vshrl.u32 %v964, 7
        %v966 = vsub.s32 %v963, %v965
        %v967 = vrot.slane %v953, %v966
        %v968 = vcombine.low %v935, %v951
        %v969 = vcombine.high %v935, %v951
        %v971 = vunpack.c.l.s4 1934713408
        %v972 = vunpack.c.0.s8 %v971
        %v973 = vlaneseq
        %v974 = vshrl.u32 %v973, 7
        %v975 = vsub.s32 %v972, %v974
        %v976 = vrot.slane %v968, %v975
        %v978 = vunpack.c.l.s4 1934713408
        %v979 = vunpack.c.0.s8 %v978
        %v980 = vlaneseq
        %v981 = vshrl.u32 %v980, 7
        %v982 = vsub.s32 %v979, %v981
        %v983 = vrot.slane %v969, %v982
        %v984 = vcombine.high %v960, 0.0
        %v985 = vcombine.high %v967, 0.0
        %v986 = vcombine.high %v976, 0.0
        %v987 = vcombine.high %v983, 0.0
        %v988 = vcombine.low %v960, %v967
        %v990 = vunpack.c.l.s4 1983009808
        %v991 = vunpack.c.0.s8 %v990
        %v992 = vlaneseq
        %v993 = vshrl.u32 %v992, 7
        %v994 = vsub.s32 %v991, %v993
        %v995 = vrot.slane %v988, %v994
        %v996 = vcombine.low %v984, %v985
        %v998 = vunpack.c.l.s4 1983009808
        %v999 = vunpack.c.0.s8 %v998
        %v1000 = vlaneseq
        %v1001 = vshrl.u32 %v1000, 7
        %v1002 = vsub.s32 %v999, %v1001
        %v1003 = vrot.slane %v996, %v1002
        %v1004 = vcombine.low %v976, %v983
        %v1006 = vunpack.c.l.s4 1983009808
        %v1007 = vunpack.c.0.s8 %v1006
        %v1008 = vlaneseq
        %v1009 = vshrl.u32 %v1008, 7
        %v1010 = vsub.s32 %v1007, %v1009
        %v1011 = vrot.slane %v1004, %v1010
        %v1012 = vcombine.low %v986, %v987
        %v1014 = vunpack.c.l.s4 1983009808
        %v1015 = vunpack.c.0.s8 %v1014
        %v1016 = vlaneseq
        %v1017 = vshrl.u32 %v1016, 7
        %v1018 = vsub.s32 %v1015, %v1017
        %v1019 = vrot.slane %v1012, %v1018
        %v1020 = vcombine.low %v995, %v1003
        %v1021 = vcombine.high %v995, %v1003
        %v1023 = vunpack.c.l.s4 1934713408
        %v1024 = vunpack.c.0.s8 %v1023
        %v1025 = vlaneseq
        %v1026 = vshrl.u32 %v1025, 7
        %v1027 = vsub.s32 %v1024, %v1026
        %v1028 = vrot.slane %v1020, %v1027
        %v1030 = vunpack.c.l.s4 1934713408
        %v1031 = vunpack.c.0.s8 %v1030
        %v1032 = vlaneseq
        %v1033 = vshrl.u32 %v1032, 7
        %v1034 = vsub.s32 %v1031, %v1033
        %v1035 = vrot.slane %v1021, %v1034
        %v1036 = vcombine.low %v1011, %v1019
        %v1037 = vcombine.high %v1011, %v1019
        %v1039 = vunpack.c.l.s4 1934713408
        %v1040 = vunpack.c.0.s8 %v1039
        %v1041 = vlaneseq
        %v1042 = vshrl.u32 %v1041, 7
        %v1043 = vsub.s32 %v1040, %v1042
        %v1044 = vrot.slane %v1036, %v1043
        %v1046 = vunpack.c.l.s4 1934713408
        %v1047 = vunpack.c.0.s8 %v1046
        %v1048 = vlaneseq
        %v1049 = vshrl.u32 %v1048, 7
        %v1050 = vsub.s32 %v1047, %v1049
        %v1051 = vrot.slane %v1037, %v1050
        %v1052 = vcombine.low %v1028, %v1044
        %v1053 = vcombine.high %v1028, %v1044
        %v1054 = vcombine.low %v1035, %v1051
        %v1055 = vcombine.high %v1035, %v1051
        %v1056 = vpack.c.bf16 %v1052, %v1052
        %v1057 = vpack.c.bf16 %v1053, %v1053
        %v1058 = vpack.c.bf16 %v1054, %v1054
        %v1059 = vpack.c.bf16 %v1055, %v1055
        %v1060 = vld [vmem:[#allocation3] sm:$0xf]
        %v1061 = vld [vmem:[#allocation4] sm:$0xf]
        %1063 = vrot.lane.b32.xlu0 %v1060, 120
        %v1064 = vpop.permute.xlu0 %1063
        %1065 = vrot.lane.b32.xlu0 %v1060, 112
        %v1066 = vpop.permute.xlu0 %1065
        %1067 = vrot.lane.b32.xlu0 %v1060, 104
        %v1068 = vpop.permute.xlu0 %1067
        %v1071 = vpack.i.b16 %v1064, %v1060
        %v1072 = vshrl.u32 %v1060, 16
        %v1073 = vshrl.u32 %v1064, 16
        %v1074 = vpack.i.b16 %v1073, %v1072
        %v1077 = vpack.i.b16 %v1068, %v1066
        %v1078 = vshrl.u32 %v1066, 16
        %v1079 = vshrl.u32 %v1068, 16
        %v1080 = vpack.i.b16 %v1079, %v1078
        %v1083 = vunpack.c.l.s4 1983009808
        %v1084 = vunpack.c.0.s8 %v1083
        %v1085 = vlaneseq
        %v1086 = vshrl.u32 %v1085, 7
        %v1087 = vsub.s32 %v1084, %v1086
        %v1088 = vrot.slane %v1071, %v1087
        %v1091 = vunpack.c.l.s4 1983009808
        %v1092 = vunpack.c.0.s8 %v1091
        %v1093 = vlaneseq
        %v1094 = vshrl.u32 %v1093, 7
        %v1095 = vsub.s32 %v1092, %v1094
        %v1096 = vrot.slane %v1077, %v1095
        %v1097 = vcombine.low %v1088, %v1096
        %v1098 = vcombine.high %v1088, %v1096
        %v1100 = vunpack.c.l.s4 1934713408
        %v1101 = vunpack.c.0.s8 %v1100
        %v1102 = vlaneseq
        %v1103 = vshrl.u32 %v1102, 7
        %v1104 = vsub.s32 %v1101, %v1103
        %v1105 = vrot.slane %v1097, %v1104
        %v1107 = vunpack.c.l.s4 1934713408
        %v1108 = vunpack.c.0.s8 %v1107
        %v1109 = vlaneseq
        %v1110 = vshrl.u32 %v1109, 7
        %v1111 = vsub.s32 %v1108, %v1110
        %v1112 = vrot.slane %v1098, %v1111
        %v1113 = vcombine.high %v1105, 0
        %v1114 = vcombine.high %v1112, 0
        %v1117 = vunpack.c.l.s4 1983009808
        %v1118 = vunpack.c.0.s8 %v1117
        %v1119 = vlaneseq
        %v1120 = vshrl.u32 %v1119, 7
        %v1121 = vsub.s32 %v1118, %v1120
        %v1122 = vrot.slane %v1074, %v1121
        %v1125 = vunpack.c.l.s4 1983009808
        %v1126 = vunpack.c.0.s8 %v1125
        %v1127 = vlaneseq
        %v1128 = vshrl.u32 %v1127, 7
        %v1129 = vsub.s32 %v1126, %v1128
        %v1130 = vrot.slane %v1080, %v1129
        %v1131 = vcombine.low %v1122, %v1130
        %v1132 = vcombine.high %v1122, %v1130
        %v1134 = vunpack.c.l.s4 1934713408
        %v1135 = vunpack.c.0.s8 %v1134
        %v1136 = vlaneseq
        %v1137 = vshrl.u32 %v1136, 7
        %v1138 = vsub.s32 %v1135, %v1137
        %v1139 = vrot.slane %v1131, %v1138
        %v1141 = vunpack.c.l.s4 1934713408
        %v1142 = vunpack.c.0.s8 %v1141
        %v1143 = vlaneseq
        %v1144 = vshrl.u32 %v1143, 7
        %v1145 = vsub.s32 %v1142, %v1144
        %v1146 = vrot.slane %v1132, %v1145
        %v1147 = vcombine.high %v1139, 0
        %v1148 = vcombine.high %v1146, 0
        %v1149 = vcombine.low %v1105, %v1112
        %v1151 = vunpack.c.l.s4 1983009808
        %v1152 = vunpack.c.0.s8 %v1151
        %v1153 = vlaneseq
        %v1154 = vshrl.u32 %v1153, 7
        %v1155 = vsub.s32 %v1152, %v1154
        %v1156 = vrot.slane %v1149, %v1155
        %v1157 = vcombine.low %v1113, %v1114
        %v1159 = vunpack.c.l.s4 1983009808
        %v1160 = vunpack.c.0.s8 %v1159
        %v1161 = vlaneseq
        %v1162 = vshrl.u32 %v1161, 7
        %v1163 = vsub.s32 %v1160, %v1162
        %v1164 = vrot.slane %v1157, %v1163
        %v1165 = vcombine.low %v1156, %v1164
        %v1167 = vunpack.c.l.s4 1934713408
        %v1168 = vunpack.c.0.s8 %v1167
        %v1169 = vlaneseq
        %v1170 = vshrl.u32 %v1169, 7
        %v1171 = vsub.s32 %v1168, %v1170
        %v1172 = vrot.slane %v1165, %v1171
        %v1173 = vcombine.high %v1172, 0
        %v1174 = vcombine.low %v1139, %v1146
        %v1176 = vunpack.c.l.s4 1983009808
        %v1177 = vunpack.c.0.s8 %v1176
        %v1178 = vlaneseq
        %v1179 = vshrl.u32 %v1178, 7
        %v1180 = vsub.s32 %v1177, %v1179
        %v1181 = vrot.slane %v1174, %v1180
        %v1182 = vcombine.low %v1147, %v1148
        %v1184 = vunpack.c.l.s4 1983009808
        %v1185 = vunpack.c.0.s8 %v1184
        %v1186 = vlaneseq
        %v1187 = vshrl.u32 %v1186, 7
        %v1188 = vsub.s32 %v1185, %v1187
        %v1189 = vrot.slane %v1182, %v1188
        %v1190 = vcombine.low %v1181, %v1189
        %v1192 = vunpack.c.l.s4 1934713408
        %v1193 = vunpack.c.0.s8 %v1192
        %v1194 = vlaneseq
        %v1195 = vshrl.u32 %v1194, 7
        %v1196 = vsub.s32 %v1193, %v1195
        %v1197 = vrot.slane %v1190, %v1196
        %v1198 = vcombine.high %v1197, 0
        %v1201 = vpack.i.b16 %v1197, %v1172
        %v1202 = vshrl.u32 %v1172, 16
        %v1203 = vshrl.u32 %v1197, 16
        %v1204 = vpack.i.b16 %v1203, %v1202
        %v1207 = vpack.i.b16 %v1198, %v1173
        %v1208 = vshrl.u32 %v1173, 16
        %v1209 = vshrl.u32 %v1198, 16
        %v1210 = vpack.i.b16 %v1209, %v1208
        %1212 = vrot.lane.b32.xlu0 %v1061, 120
        %v1213 = vpop.permute.xlu0 %1212
        %1214 = vrot.lane.b32.xlu0 %v1061, 112
        %v1215 = vpop.permute.xlu0 %1214
        %1216 = vrot.lane.b32.xlu0 %v1061, 104
        %v1217 = vpop.permute.xlu0 %1216
        %v1220 = vpack.i.b16 %v1213, %v1061
        %v1221 = vshrl.u32 %v1061, 16
        %v1222 = vshrl.u32 %v1213, 16
        %v1223 = vpack.i.b16 %v1222, %v1221
        %v1226 = vpack.i.b16 %v1217, %v1215
        %v1227 = vshrl.u32 %v1215, 16
        %v1228 = vshrl.u32 %v1217, 16
        %v1229 = vpack.i.b16 %v1228, %v1227
        %v1232 = vunpack.c.l.s4 1983009808
        %v1233 = vunpack.c.0.s8 %v1232
        %v1234 = vlaneseq
        %v1235 = vshrl.u32 %v1234, 7
        %v1236 = vsub.s32 %v1233, %v1235
        %v1237 = vrot.slane %v1220, %v1236
        %v1240 = vunpack.c.l.s4 1983009808
        %v1241 = vunpack.c.0.s8 %v1240
        %v1242 = vlaneseq
        %v1243 = vshrl.u32 %v1242, 7
        %v1244 = vsub.s32 %v1241, %v1243
        %v1245 = vrot.slane %v1226, %v1244
        %v1246 = vcombine.low %v1237, %v1245
        %v1247 = vcombine.high %v1237, %v1245
        %v1249 = vunpack.c.l.s4 1934713408
        %v1250 = vunpack.c.0.s8 %v1249
        %v1251 = vlaneseq
        %v1252 = vshrl.u32 %v1251, 7
        %v1253 = vsub.s32 %v1250, %v1252
        %v1254 = vrot.slane %v1246, %v1253
        %v1256 = vunpack.c.l.s4 1934713408
        %v1257 = vunpack.c.0.s8 %v1256
        %v1258 = vlaneseq
        %v1259 = vshrl.u32 %v1258, 7
        %v1260 = vsub.s32 %v1257, %v1259
        %v1261 = vrot.slane %v1247, %v1260
        %v1262 = vcombine.high %v1254, 0
        %v1263 = vcombine.high %v1261, 0
        %v1266 = vunpack.c.l.s4 1983009808
        %v1267 = vunpack.c.0.s8 %v1266
        %v1268 = vlaneseq
        %v1269 = vshrl.u32 %v1268, 7
        %v1270 = vsub.s32 %v1267, %v1269
        %v1271 = vrot.slane %v1223, %v1270
        %v1274 = vunpack.c.l.s4 1983009808
        %v1275 = vunpack.c.0.s8 %v1274
        %v1276 = vlaneseq
        %v1277 = vshrl.u32 %v1276, 7
        %v1278 = vsub.s32 %v1275, %v1277
        %v1279 = vrot.slane %v1229, %v1278
        %v1280 = vcombine.low %v1271, %v1279
        %v1281 = vcombine.high %v1271, %v1279
        %v1283 = vunpack.c.l.s4 1934713408
        %v1284 = vunpack.c.0.s8 %v1283
        %v1285 = vlaneseq
        %v1286 = vshrl.u32 %v1285, 7
        %v1287 = vsub.s32 %v1284, %v1286
        %v1288 = vrot.slane %v1280, %v1287
        %v1290 = vunpack.c.l.s4 1934713408
        %v1291 = vunpack.c.0.s8 %v1290
        %v1292 = vlaneseq
        %v1293 = vshrl.u32 %v1292, 7
        %v1294 = vsub.s32 %v1291, %v1293
        %v1295 = vrot.slane %v1281, %v1294
        %v1296 = vcombine.high %v1288, 0
        %v1297 = vcombine.high %v1295, 0
        %v1298 = vcombine.low %v1254, %v1261
        %v1300 = vunpack.c.l.s4 1983009808
        %v1301 = vunpack.c.0.s8 %v1300
        %v1302 = vlaneseq
        %v1303 = vshrl.u32 %v1302, 7
        %v1304 = vsub.s32 %v1301, %v1303
        %v1305 = vrot.slane %v1298, %v1304
        %v1306 = vcombine.low %v1262, %v1263
        %v1308 = vunpack.c.l.s4 1983009808
        %v1309 = vunpack.c.0.s8 %v1308
        %v1310 = vlaneseq
        %v1311 = vshrl.u32 %v1310, 7
        %v1312 = vsub.s32 %v1309, %v1311
        %v1313 = vrot.slane %v1306, %v1312
        %v1314 = vcombine.low %v1305, %v1313
        %v1316 = vunpack.c.l.s4 1934713408
        %v1317 = vunpack.c.0.s8 %v1316
        %v1318 = vlaneseq
        %v1319 = vshrl.u32 %v1318, 7
        %v1320 = vsub.s32 %v1317, %v1319
        %v1321 = vrot.slane %v1314, %v1320
        %v1322 = vcombine.high %v1321, 0
        %v1323 = vcombine.low %v1288, %v1295
        %v1325 = vunpack.c.l.s4 1983009808
        %v1326 = vunpack.c.0.s8 %v1325
        %v1327 = vlaneseq
        %v1328 = vshrl.u32 %v1327, 7
        %v1329 = vsub.s32 %v1326, %v1328
        %v1330 = vrot.slane %v1323, %v1329
        %v1331 = vcombine.low %v1296, %v1297
        %v1333 = vunpack.c.l.s4 1983009808
        %v1334 = vunpack.c.0.s8 %v1333
        %v1335 = vlaneseq
        %v1336 = vshrl.u32 %v1335, 7
        %v1337 = vsub.s32 %v1334, %v1336
        %v1338 = vrot.slane %v1331, %v1337
        %v1339 = vcombine.low %v1330, %v1338
        %v1341 = vunpack.c.l.s4 1934713408
        %v1342 = vunpack.c.0.s8 %v1341
        %v1343 = vlaneseq
        %v1344 = vshrl.u32 %v1343, 7
        %v1345 = vsub.s32 %v1342, %v1344
        %v1346 = vrot.slane %v1339, %v1345
        %v1347 = vcombine.high %v1346, 0
        %v1350 = vpack.i.b16 %v1346, %v1321
        %v1351 = vshrl.u32 %v1321, 16
        %v1352 = vshrl.u32 %v1346, 16
        %v1353 = vpack.i.b16 %v1352, %v1351
        %v1356 = vpack.i.b16 %v1347, %v1322
        %v1357 = vshrl.u32 %v1322, 16
        %v1358 = vshrl.u32 %v1347, 16
        %v1359 = vpack.i.b16 %v1358, %v1357
        %vm1360 = vcmask 64512
        %v1362 = vsel %vm1360, %v1056, 0
        %v1365 = vsel %vm1360, %v1201, 0
        %1367 = vmatprep.subr.bf16.mxu0 0
        %1368 = vmatpush1.bf16.xpose.msra.mxu0 %v1365
        %1369 = vmatprep.subr.bf16.mxu0 0
        %1370 = vmatpush1.bf16.xpose.msra.mxu0 0
        %1371 = vmatprep.subr.bf16.mxu0 0
        %1372 = vmatpush1.bf16.xpose.msra.mxu0 0
        %1373 = vmatprep.subr.bf16.mxu0 0
        %1374 = vmatpush1.bf16.xpose.msra.mxu0 0
        %1375 = vmatprep.subr.bf16.mxu0 0
        %1376 = vmatpush1.bf16.xpose.msra.mxu0 0
        %1377 = vmatprep.subr.bf16.mxu0 0
        %1378 = vmatpush1.bf16.xpose.msra.mxu0 0
        %1379 = vmatprep.subr.bf16.mxu0 0
        %1380 = vmatpush1.bf16.xpose.msra.mxu0 0
        %1381 = vmatprep.subr.bf16.mxu0 0
        %1382 = vmatpush1.bf16.xpose.msra.mxu0 0
        %1383 = vmatprep.subr.bf16.mxu0 0
        %1384 = vmatpush1.bf16.xpose.msra.mxu0 0
        %1385 = vmatprep.subr.bf16.mxu0 0
        %1386 = vmatpush1.bf16.xpose.msra.mxu0 0
        %1387 = vmatprep.subr.bf16.mxu0 0
        %1388 = vmatpush1.bf16.xpose.msra.mxu0 0
        %1389 = vmatprep.subr.bf16.mxu0 0
        %1390 = vmatpush1.bf16.xpose.msra.mxu0 0
        %1391 = vmatprep.subr.bf16.mxu0 0
        %1392 = vmatpush1.bf16.xpose.msra.mxu0 0
        %1393 = vmatprep.subr.bf16.mxu0 0
        %1394 = vmatpush1.bf16.xpose.msra.mxu0 0
        %1395 = vmatprep.subr.bf16.mxu0 0
        %1396 = vmatpush1.bf16.xpose.msra.mxu0 0
        %1397 = vmatprep.subr.bf16.mxu0 0
        %1398 = vmatpush1.bf16.xpose.msra.mxu0 0
        %1399 = vmatprep.mubr.bf16.mxu0 0
        %1400 = vmatmul.mubr.bf16.gmra.mrb[0].mxu0 %v1362
        %v1401 = vpop.f32.mrb[0].mxu0
        %v1402 = vadd.f32 0.0, %v1401
        %v1403 = vpop.f32.mrb[0].mxu0
        %v1404 = vpop.f32.mrb[0].mxu0
        %v1405 = vpop.f32.mrb[0].mxu0
        %1406 = vdwg.mxu0
        %v1408 = vsel %vm1360, %v1057, 0
        %v1411 = vsel %vm1360, %v1204, 0
        %1413 = vmatprep.subr.bf16.mxu0 0
        %1414 = vmatpush1.bf16.xpose.msra.mxu0 %v1411
        %1415 = vmatprep.subr.bf16.mxu0 0
        %1416 = vmatpush1.bf16.xpose.msra.mxu0 0
        %1417 = vmatprep.subr.bf16.mxu0 0
        %1418 = vmatpush1.bf16.xpose.msra.mxu0 0
        %1419 = vmatprep.subr.bf16.mxu0 0
        %1420 = vmatpush1.bf16.xpose.msra.mxu0 0
        %1421 = vmatprep.subr.bf16.mxu0 0
        %1422 = vmatpush1.bf16.xpose.msra.mxu0 0
        %1423 = vmatprep.subr.bf16.mxu0 0
        %1424 = vmatpush1.bf16.xpose.msra.mxu0 0
        %1425 = vmatprep.subr.bf16.mxu0 0
        %1426 = vmatpush1.bf16.xpose.msra.mxu0 0
        %1427 = vmatprep.subr.bf16.mxu0 0
        %1428 = vmatpush1.bf16.xpose.msra.mxu0 0
        %1429 = vmatprep.subr.bf16.mxu0 0
        %1430 = vmatpush1.bf16.xpose.msra.mxu0 0
        %1431 = vmatprep.subr.bf16.mxu0 0
        %1432 = vmatpush1.bf16.xpose.msra.mxu0 0
        %1433 = vmatprep.subr.bf16.mxu0 0
        %1434 = vmatpush1.bf16.xpose.msra.mxu0 0
        %1435 = vmatprep.subr.bf16.mxu0 0
        %1436 = vmatpush1.bf16.xpose.msra.mxu0 0
        %1437 = vmatprep.subr.bf16.mxu0 0
        %1438 = vmatpush1.bf16.xpose.msra.mxu0 0
        %1439 = vmatprep.subr.bf16.mxu0 0
        %1440 = vmatpush1.bf16.xpose.msra.mxu0 0
        %1441 = vmatprep.subr.bf16.mxu0 0
        %1442 = vmatpush1.bf16.xpose.msra.mxu0 0
        %1443 = vmatprep.subr.bf16.mxu0 0
        %1444 = vmatpush1.bf16.xpose.msra.mxu0 0
        %1445 = vmatprep.mubr.bf16.mxu0 0
        %1446 = vmatmul.mubr.bf16.gmra.mrb[0].mxu0 %v1408
        %v1447 = vpop.f32.mrb[0].mxu0
        %v1448 = vadd.f32 0.0, %v1447
        %v1449 = vpop.f32.mrb[0].mxu0
        %v1450 = vpop.f32.mrb[0].mxu0
        %v1451 = vpop.f32.mrb[0].mxu0
        %1452 = vdwg.mxu0
        %v1454 = vsel %vm1360, %v1058, 0
        %v1457 = vsel %vm1360, %v1207, 0
        %1459 = vmatprep.subr.bf16.mxu0 0
        %1460 = vmatpush1.bf16.xpose.msra.mxu0 %v1457
        %1461 = vmatprep.subr.bf16.mxu0 0
        %1462 = vmatpush1.bf16.xpose.msra.mxu0 0
        %1463 = vmatprep.subr.bf16.mxu0 0
        %1464 = vmatpush1.bf16.xpose.msra.mxu0 0
        %1465 = vmatprep.subr.bf16.mxu0 0
        %1466 = vmatpush1.bf16.xpose.msra.mxu0 0
        %1467 = vmatprep.subr.bf16.mxu0 0
        %1468 = vmatpush1.bf16.xpose.msra.mxu0 0
        %1469 = vmatprep.subr.bf16.mxu0 0
        %1470 = vmatpush1.bf16.xpose.msra.mxu0 0
        %1471 = vmatprep.subr.bf16.mxu0 0
        %1472 = vmatpush1.bf16.xpose.msra.mxu0 0
        %1473 = vmatprep.subr.bf16.mxu0 0
        %1474 = vmatpush1.bf16.xpose.msra.mxu0 0
        %1475 = vmatprep.subr.bf16.mxu0 0
        %1476 = vmatpush1.bf16.xpose.msra.mxu0 0
        %1477 = vmatprep.subr.bf16.mxu0 0
        %1478 = vmatpush1.bf16.xpose.msra.mxu0 0
        %1479 = vmatprep.subr.bf16.mxu0 0
        %1480 = vmatpush1.bf16.xpose.msra.mxu0 0
        %1481 = vmatprep.subr.bf16.mxu0 0
        %1482 = vmatpush1.bf16.xpose.msra.mxu0 0
        %1483 = vmatprep.subr.bf16.mxu0 0
        %1484 = vmatpush1.bf16.xpose.msra.mxu0 0
        %1485 = vmatprep.subr.bf16.mxu0 0
        %1486 = vmatpush1.bf16.xpose.msra.mxu0 0
        %1487 = vmatprep.subr.bf16.mxu0 0
        %1488 = vmatpush1.bf16.xpose.msra.mxu0 0
        %1489 = vmatprep.subr.bf16.mxu0 0
        %1490 = vmatpush1.bf16.xpose.msra.mxu0 0
        %1491 = vmatprep.mubr.bf16.mxu0 0
        %1492 = vmatmul.mubr.bf16.gmra.mrb[0].mxu0 %v1454
        %v1493 = vpop.f32.mrb[0].mxu0
        %v1494 = vadd.f32 0.0, %v1493
        %v1495 = vpop.f32.mrb[0].mxu0
        %v1496 = vpop.f32.mrb[0].mxu0
        %v1497 = vpop.f32.mrb[0].mxu0
        %1498 = vdwg.mxu0
        %v1500 = vsel %vm1360, %v1059, 0
        %v1503 = vsel %vm1360, %v1210, 0
        %1505 = vmatprep.subr.bf16.mxu0 0
        %1506 = vmatpush1.bf16.xpose.msra.mxu0 %v1503
        %1507 = vmatprep.subr.bf16.mxu0 0
        %1508 = vmatpush1.bf16.xpose.msra.mxu0 0
        %1509 = vmatprep.subr.bf16.mxu0 0
        %1510 = vmatpush1.bf16.xpose.msra.mxu0 0
        %1511 = vmatprep.subr.bf16.mxu0 0
        %1512 = vmatpush1.bf16.xpose.msra.mxu0 0
        %1513 = vmatprep.subr.bf16.mxu0 0
        %1514 = vmatpush1.bf16.xpose.msra.mxu0 0
        %1515 = vmatprep.subr.bf16.mxu0 0
        %1516 = vmatpush1.bf16.xpose.msra.mxu0 0
        %1517 = vmatprep.subr.bf16.mxu0 0
        %1518 = vmatpush1.bf16.xpose.msra.mxu0 0
        %1519 = vmatprep.subr.bf16.mxu0 0
        %1520 = vmatpush1.bf16.xpose.msra.mxu0 0
        %1521 = vmatprep.subr.bf16.mxu0 0
        %1522 = vmatpush1.bf16.xpose.msra.mxu0 0
        %1523 = vmatprep.subr.bf16.mxu0 0
        %1524 = vmatpush1.bf16.xpose.msra.mxu0 0
        %1525 = vmatprep.subr.bf16.mxu0 0
        %1526 = vmatpush1.bf16.xpose.msra.mxu0 0
        %1527 = vmatprep.subr.bf16.mxu0 0
        %1528 = vmatpush1.bf16.xpose.msra.mxu0 0
        %1529 = vmatprep.subr.bf16.mxu0 0
        %1530 = vmatpush1.bf16.xpose.msra.mxu0 0
        %1531 = vmatprep.subr.bf16.mxu0 0
        %1532 = vmatpush1.bf16.xpose.msra.mxu0 0
        %1533 = vmatprep.subr.bf16.mxu0 0
        %1534 = vmatpush1.bf16.xpose.msra.mxu0 0
        %1535 = vmatprep.subr.bf16.mxu0 0
        %1536 = vmatpush1.bf16.xpose.msra.mxu0 0
        %1537 = vmatprep.mubr.bf16.mxu0 0
        %1538 = vmatmul.mubr.bf16.gmra.mrb[0].mxu0 %v1500
        %v1539 = vpop.f32.mrb[0].mxu0
        %v1540 = vadd.f32 0.0, %v1539
        %v1541 = vpop.f32.mrb[0].mxu0
        %v1542 = vpop.f32.mrb[0].mxu0
        %v1543 = vpop.f32.mrb[0].mxu0
        %1544 = vdwg.mxu0
        %v1545 = vsel %vm1360, %v1402, -inf
        %1546 = vmax.xlane.f32.xlu0 %v1545
        %v1547 = vpop.xlane.xlu0 %1546
        %v1548 = vsel %vm1360, %v1448, -inf
        %1549 = vmax.xlane.f32.xlu0 %v1548
        %v1550 = vpop.xlane.xlu0 %1549
        %v1551 = vsel %vm1360, %v1494, -inf
        %1552 = vmax.xlane.f32.xlu0 %v1551
        %v1553 = vpop.xlane.xlu0 %1552
        %v1554 = vsel %vm1360, %v1540, -inf
        %1555 = vmax.xlane.f32.xlu0 %v1554
        %v1556 = vpop.xlane.xlu0 %1555
        %v1557 = vsub.f32 -inf, %v1547
        %v1558 = vsub.f32 -inf, %v1550
        %v1559 = vsub.f32 -inf, %v1553
        %v1560 = vsub.f32 -inf, %v1556
        %v1561 = vmul.f32 %v1557, 1.442695
        %v1562 = vpow.pop %v1561
        %v1563 = vmul.f32 %v1558, 1.442695
        %v1564 = vpow.pop %v1563
        %v1565 = vmul.f32 %v1559, 1.442695
        %v1566 = vpow.pop %v1565
        %v1567 = vmul.f32 %v1560, 1.442695
        %v1568 = vpow.pop %v1567
        %v1569 = vsub.f32 %v1402, %v1547
        %v1570 = vsub.f32 %v1448, %v1550
        %v1571 = vsub.f32 %v1494, %v1553
        %v1572 = vsub.f32 %v1540, %v1556
        %v1573 = vmul.f32 %v1569, 1.442695
        %v1574 = vpow.pop %v1573
        %v1575 = vmul.f32 %v1570, 1.442695
        %v1576 = vpow.pop %v1575
        %v1577 = vmul.f32 %v1571, 1.442695
        %v1578 = vpow.pop %v1577
        %v1579 = vmul.f32 %v1572, 1.442695
        %v1580 = vpow.pop %v1579
        %v1581 = vmul.f32 %v1562, 0.0
        %v1582 = vmul.f32 %v1564, 0.0
        %v1583 = vmul.f32 %v1566, 0.0
        %v1584 = vmul.f32 %v1568, 0.0
        %v1585 = vsel %vm1360, %v1574, 0.0
        %1586 = vadd.xlane.f32.xlu0 %v1585
        %v1587 = vpop.xlane.xlu0 %1586
        %v1588 = vsel %vm1360, %v1576, 0.0
        %1589 = vadd.xlane.f32.xlu0 %v1588
        %v1590 = vpop.xlane.xlu0 %1589
        %v1591 = vsel %vm1360, %v1578, 0.0
        %1592 = vadd.xlane.f32.xlu0 %v1591
        %v1593 = vpop.xlane.xlu0 %1592
        %v1594 = vsel %vm1360, %v1580, 0.0
        %1595 = vadd.xlane.f32.xlu0 %v1594
        %v1596 = vpop.xlane.xlu0 %1595
        %v1597 = vadd.f32 %v1581, %v1587
        %v1598 = vadd.f32 %v1582, %v1590
        %v1599 = vadd.f32 %v1583, %v1593
        %v1600 = vadd.f32 %v1584, %v1596
        %v1601 = vpack.c.bf16 %v1574, %v1574
        %v1602 = vpack.c.bf16 %v1576, %v1576
        %v1603 = vpack.c.bf16 %v1578, %v1578
        %v1604 = vpack.c.bf16 %v1580, %v1580
        %v1606 = vsel %vm1360, %v1601, 0
        %vm1608 = vcmask 1043456
        %v1610 = vsel %vm1608, %v1350, 0
        %1612 = vmatprep.subr.bf16.mxu0 0
        %1613 = vmatpush1.bf16.msra.mxu0 %v1610
        %1614 = vmatprep.subr.bf16.mxu0 0
        %1615 = vmatpush1.bf16.msra.mxu0 0
        %1616 = vmatprep.subr.bf16.mxu0 0
        %1617 = vmatpush1.bf16.msra.mxu0 0
        %1618 = vmatprep.subr.bf16.mxu0 0
        %1619 = vmatpush1.bf16.msra.mxu0 0
        %1620 = vmatprep.subr.bf16.mxu0 0
        %1621 = vmatpush1.bf16.msra.mxu0 0
        %1622 = vmatprep.subr.bf16.mxu0 0
        %1623 = vmatpush1.bf16.msra.mxu0 0
        %1624 = vmatprep.subr.bf16.mxu0 0
        %1625 = vmatpush1.bf16.msra.mxu0 0
        %1626 = vmatprep.subr.bf16.mxu0 0
        %1627 = vmatpush1.bf16.msra.mxu0 0
        %1628 = vmatprep.subr.bf16.mxu0 0
        %1629 = vmatpush1.bf16.msra.mxu0 0
        %1630 = vmatprep.subr.bf16.mxu0 0
        %1631 = vmatpush1.bf16.msra.mxu0 0
        %1632 = vmatprep.subr.bf16.mxu0 0
        %1633 = vmatpush1.bf16.msra.mxu0 0
        %1634 = vmatprep.subr.bf16.mxu0 0
        %1635 = vmatpush1.bf16.msra.mxu0 0
        %1636 = vmatprep.subr.bf16.mxu0 0
        %1637 = vmatpush1.bf16.msra.mxu0 0
        %1638 = vmatprep.subr.bf16.mxu0 0
        %1639 = vmatpush1.bf16.msra.mxu0 0
        %1640 = vmatprep.subr.bf16.mxu0 0
        %1641 = vmatpush1.bf16.msra.mxu0 0
        %1642 = vmatprep.subr.bf16.mxu0 0
        %1643 = vmatpush1.bf16.msra.mxu0 0
        %1644 = vmatprep.mubr.bf16.mxu0 0
        %1645 = vmatmul.mubr.bf16.gmra.mrb[0].mxu0 %v1606
        %v1646 = vpop.f32.mrb[0].mxu0
        %v1647 = vadd.f32 0.0, %v1646
        %v1648 = vpop.f32.mrb[0].mxu0
        %v1649 = vpop.f32.mrb[0].mxu0
        %v1650 = vpop.f32.mrb[0].mxu0
        %1651 = vdwg.mxu0
        %v1653 = vsel %vm1360, %v1602, 0
        %v1656 = vsel %vm1608, %v1353, 0
        %1658 = vmatprep.subr.bf16.mxu0 0
        %1659 = vmatpush1.bf16.msra.mxu0 %v1656
        %1660 = vmatprep.subr.bf16.mxu0 0
        %1661 = vmatpush1.bf16.msra.mxu0 0
        %1662 = vmatprep.subr.bf16.mxu0 0
        %1663 = vmatpush1.bf16.msra.mxu0 0
        %1664 = vmatprep.subr.bf16.mxu0 0
        %1665 = vmatpush1.bf16.msra.mxu0 0
        %1666 = vmatprep.subr.bf16.mxu0 0
        %1667 = vmatpush1.bf16.msra.mxu0 0
        %1668 = vmatprep.subr.bf16.mxu0 0
        %1669 = vmatpush1.bf16.msra.mxu0 0
        %1670 = vmatprep.subr.bf16.mxu0 0
        %1671 = vmatpush1.bf16.msra.mxu0 0
        %1672 = vmatprep.subr.bf16.mxu0 0
        %1673 = vmatpush1.bf16.msra.mxu0 0
        %1674 = vmatprep.subr.bf16.mxu0 0
        %1675 = vmatpush1.bf16.msra.mxu0 0
        %1676 = vmatprep.subr.bf16.mxu0 0
        %1677 = vmatpush1.bf16.msra.mxu0 0
        %1678 = vmatprep.subr.bf16.mxu0 0
        %1679 = vmatpush1.bf16.msra.mxu0 0
        %1680 = vmatprep.subr.bf16.mxu0 0
        %1681 = vmatpush1.bf16.msra.mxu0 0
        %1682 = vmatprep.subr.bf16.mxu0 0
        %1683 = vmatpush1.bf16.msra.mxu0 0
        %1684 = vmatprep.subr.bf16.mxu0 0
        %1685 = vmatpush1.bf16.msra.mxu0 0
        %1686 = vmatprep.subr.bf16.mxu0 0
        %1687 = vmatpush1.bf16.msra.mxu0 0
        %1688 = vmatprep.subr.bf16.mxu0 0
        %1689 = vmatpush1.bf16.msra.mxu0 0
        %1690 = vmatprep.mubr.bf16.mxu0 0
        %1691 = vmatmul.mubr.bf16.gmra.mrb[0].mxu0 %v1653
        %v1692 = vpop.f32.mrb[0].mxu0
        %v1693 = vadd.f32 0.0, %v1692
        %v1694 = vpop.f32.mrb[0].mxu0
        %v1695 = vpop.f32.mrb[0].mxu0
        %v1696 = vpop.f32.mrb[0].mxu0
        %1697 = vdwg.mxu0
        %v1699 = vsel %vm1360, %v1603, 0
        %v1702 = vsel %vm1608, %v1356, 0
        %1704 = vmatprep.subr.bf16.mxu0 0
        %1705 = vmatpush1.bf16.msra.mxu0 %v1702
        %1706 = vmatprep.subr.bf16.mxu0 0
        %1707 = vmatpush1.bf16.msra.mxu0 0
        %1708 = vmatprep.subr.bf16.mxu0 0
        %1709 = vmatpush1.bf16.msra.mxu0 0
        %1710 = vmatprep.subr.bf16.mxu0 0
        %1711 = vmatpush1.bf16.msra.mxu0 0
        %1712 = vmatprep.subr.bf16.mxu0 0
        %1713 = vmatpush1.bf16.msra.mxu0 0
        %1714 = vmatprep.subr.bf16.mxu0 0
        %1715 = vmatpush1.bf16.msra.mxu0 0
        %1716 = vmatprep.subr.bf16.mxu0 0
        %1717 = vmatpush1.bf16.msra.mxu0 0
        %1718 = vmatprep.subr.bf16.mxu0 0
        %1719 = vmatpush1.bf16.msra.mxu0 0
        %1720 = vmatprep.subr.bf16.mxu0 0
        %1721 = vmatpush1.bf16.msra.mxu0 0
        %1722 = vmatprep.subr.bf16.mxu0 0
        %1723 = vmatpush1.bf16.msra.mxu0 0
        %1724 = vmatprep.subr.bf16.mxu0 0
        %1725 = vmatpush1.bf16.msra.mxu0 0
        %1726 = vmatprep.subr.bf16.mxu0 0
        %1727 = vmatpush1.bf16.msra.mxu0 0
        %1728 = vmatprep.subr.bf16.mxu0 0
        %1729 = vmatpush1.bf16.msra.mxu0 0
        %1730 = vmatprep.subr.bf16.mxu0 0
        %1731 = vmatpush1.bf16.msra.mxu0 0
        %1732 = vmatprep.subr.bf16.mxu0 0
        %1733 = vmatpush1.bf16.msra.mxu0 0
        %1734 = vmatprep.subr.bf16.mxu0 0
        %1735 = vmatpush1.bf16.msra.mxu0 0
        %1736 = vmatprep.mubr.bf16.mxu0 0
        %1737 = vmatmul.mubr.bf16.gmra.mrb[0].mxu0 %v1699
        %v1738 = vpop.f32.mrb[0].mxu0
        %v1739 = vadd.f32 0.0, %v1738
        %v1740 = vpop.f32.mrb[0].mxu0
        %v1741 = vpop.f32.mrb[0].mxu0
        %v1742 = vpop.f32.mrb[0].mxu0
        %1743 = vdwg.mxu0
        %v1745 = vsel %vm1360, %v1604, 0
        %v1748 = vsel %vm1608, %v1359, 0
        %1750 = vmatprep.subr.bf16.mxu0 0
        %1751 = vmatpush1.bf16.msra.mxu0 %v1748
        %1752 = vmatprep.subr.bf16.mxu0 0
        %1753 = vmatpush1.bf16.msra.mxu0 0
        %1754 = vmatprep.subr.bf16.mxu0 0
        %1755 = vmatpush1.bf16.msra.mxu0 0
        %1756 = vmatprep.subr.bf16.mxu0 0
        %1757 = vmatpush1.bf16.msra.mxu0 0
        %1758 = vmatprep.subr.bf16.mxu0 0
        %1759 = vmatpush1.bf16.msra.mxu0 0
        %1760 = vmatprep.subr.bf16.mxu0 0
        %1761 = vmatpush1.bf16.msra.mxu0 0
        %1762 = vmatprep.subr.bf16.mxu0 0
        %1763 = vmatpush1.bf16.msra.mxu0 0
        %1764 = vmatprep.subr.bf16.mxu0 0
        %1765 = vmatpush1.bf16.msra.mxu0 0
        %1766 = vmatprep.subr.bf16.mxu0 0
        %1767 = vmatpush1.bf16.msra.mxu0 0
        %1768 = vmatprep.subr.bf16.mxu0 0
        %1769 = vmatpush1.bf16.msra.mxu0 0
        %1770 = vmatprep.subr.bf16.mxu0 0
        %1771 = vmatpush1.bf16.msra.mxu0 0
        %1772 = vmatprep.subr.bf16.mxu0 0
        %1773 = vmatpush1.bf16.msra.mxu0 0
        %1774 = vmatprep.subr.bf16.mxu0 0
        %1775 = vmatpush1.bf16.msra.mxu0 0
        %1776 = vmatprep.subr.bf16.mxu0 0
        %1777 = vmatpush1.bf16.msra.mxu0 0
        %1778 = vmatprep.subr.bf16.mxu0 0
        %1779 = vmatpush1.bf16.msra.mxu0 0
        %1780 = vmatprep.subr.bf16.mxu0 0
        %1781 = vmatpush1.bf16.msra.mxu0 0
        %1782 = vmatprep.mubr.bf16.mxu0 0
        %1783 = vmatmul.mubr.bf16.gmra.mrb[0].mxu0 %v1745
        %v1784 = vpop.f32.mrb[0].mxu0
        %v1785 = vadd.f32 0.0, %v1784
        %v1786 = vpop.f32.mrb[0].mxu0
        %v1787 = vpop.f32.mrb[0].mxu0
        %v1788 = vpop.f32.mrb[0].mxu0
        %1789 = vdwg.mxu0
        %v1790 = vadd.f32 %v1581, %v1647
        %v1791 = vadd.f32 %v1582, %v1693
        %v1792 = vadd.f32 %v1583, %v1739
        %v1793 = vadd.f32 %v1584, %v1785
        %v1794 = vrcp.pop %v1597
        %v1795 = vrcp.pop %v1598
        %v1796 = vrcp.pop %v1599
        %v1797 = vrcp.pop %v1600
        %v1798 = vmul.f32 %v1790, %v1794
        %v1799 = vmul.f32 %v1791, %v1795
        %v1800 = vmul.f32 %v1792, %v1796
        %v1801 = vmul.f32 %v1793, %v1797
        %v1802 = vcombine.low %v1798, %v1800
        %v1803 = vcombine.high %v1798, %v1800
        %v1805 = vunpack.c.l.s4 1983009808
        %v1806 = vunpack.c.0.s8 %v1805
        %v1807 = vlaneseq
        %v1808 = vshrl.u32 %v1807, 7
        %v1809 = vsub.s32 %v1806, %v1808
        %v1810 = vrot.slane %v1802, %v1809
        %v1812 = vunpack.c.l.s4 1983009808
        %v1813 = vunpack.c.0.s8 %v1812
        %v1814 = vlaneseq
        %v1815 = vshrl.u32 %v1814, 7
        %v1816 = vsub.s32 %v1813, %v1815
        %v1817 = vrot.slane %v1803, %v1816
        %v1818 = vcombine.low %v1799, %v1801
        %v1819 = vcombine.high %v1799, %v1801
        %v1821 = vunpack.c.l.s4 1983009808
        %v1822 = vunpack.c.0.s8 %v1821
        %v1823 = vlaneseq
        %v1824 = vshrl.u32 %v1823, 7
        %v1825 = vsub.s32 %v1822, %v1824
        %v1826 = vrot.slane %v1818, %v1825
        %v1828 = vunpack.c.l.s4 1983009808
        %v1829 = vunpack.c.0.s8 %v1828
        %v1830 = vlaneseq
        %v1831 = vshrl.u32 %v1830, 7
        %v1832 = vsub.s32 %v1829, %v1831
        %v1833 = vrot.slane %v1819, %v1832
        %v1834 = vcombine.low %v1810, %v1826
        %v1835 = vcombine.high %v1810, %v1826
        %v1837 = vunpack.c.l.s4 1934713408
        %v1838 = vunpack.c.0.s8 %v1837
        %v1839 = vlaneseq
        %v1840 = vshrl.u32 %v1839, 7
        %v1841 = vsub.s32 %v1838, %v1840
        %v1842 = vrot.slane %v1834, %v1841
        %v1844 = vunpack.c.l.s4 1934713408
        %v1845 = vunpack.c.0.s8 %v1844
        %v1846 = vlaneseq
        %v1847 = vshrl.u32 %v1846, 7
        %v1848 = vsub.s32 %v1845, %v1847
        %v1849 = vrot.slane %v1835, %v1848
        %v1850 = vcombine.low %v1817, %v1833
        %v1851 = vcombine.high %v1817, %v1833
        %v1853 = vunpack.c.l.s4 1934713408
        %v1854 = vunpack.c.0.s8 %v1853
        %v1855 = vlaneseq
        %v1856 = vshrl.u32 %v1855, 7
        %v1857 = vsub.s32 %v1854, %v1856
        %v1858 = vrot.slane %v1850, %v1857
        %v1860 = vunpack.c.l.s4 1934713408
        %v1861 = vunpack.c.0.s8 %v1860
        %v1862 = vlaneseq
        %v1863 = vshrl.u32 %v1862, 7
        %v1864 = vsub.s32 %v1861, %v1863
        %v1865 = vrot.slane %v1851, %v1864
        %v1866 = vcombine.high %v1842, 0.0
        %v1867 = vcombine.high %v1849, 0.0
        %v1868 = vcombine.high %v1858, 0.0
        %v1869 = vcombine.high %v1865, 0.0
        %v1870 = vcombine.low %v1842, %v1849
        %v1872 = vunpack.c.l.s4 1983009808
        %v1873 = vunpack.c.0.s8 %v1872
        %v1874 = vlaneseq
        %v1875 = vshrl.u32 %v1874, 7
        %v1876 = vsub.s32 %v1873, %v1875
        %v1877 = vrot.slane %v1870, %v1876
        %v1878 = vcombine.low %v1866, %v1867
        %v1880 = vunpack.c.l.s4 1983009808
        %v1881 = vunpack.c.0.s8 %v1880
        %v1882 = vlaneseq
        %v1883 = vshrl.u32 %v1882, 7
        %v1884 = vsub.s32 %v1881, %v1883
        %v1885 = vrot.slane %v1878, %v1884
        %v1886 = vcombine.low %v1858, %v1865
        %v1888 = vunpack.c.l.s4 1983009808
        %v1889 = vunpack.c.0.s8 %v1888
        %v1890 = vlaneseq
        %v1891 = vshrl.u32 %v1890, 7
        %v1892 = vsub.s32 %v1889, %v1891
        %v1893 = vrot.slane %v1886, %v1892
        %v1894 = vcombine.low %v1868, %v1869
        %v1896 = vunpack.c.l.s4 1983009808
        %v1897 = vunpack.c.0.s8 %v1896
        %v1898 = vlaneseq
        %v1899 = vshrl.u32 %v1898, 7
        %v1900 = vsub.s32 %v1897, %v1899
        %v1901 = vrot.slane %v1894, %v1900
        %v1902 = vcombine.low %v1877, %v1885
        %v1903 = vcombine.high %v1877, %v1885
        %v1905 = vunpack.c.l.s4 1934713408
        %v1906 = vunpack.c.0.s8 %v1905
        %v1907 = vlaneseq
        %v1908 = vshrl.u32 %v1907, 7
        %v1909 = vsub.s32 %v1906, %v1908
        %v1910 = vrot.slane %v1902, %v1909
        %v1912 = vunpack.c.l.s4 1934713408
        %v1913 = vunpack.c.0.s8 %v1912
        %v1914 = vlaneseq
        %v1915 = vshrl.u32 %v1914, 7
        %v1916 = vsub.s32 %v1913, %v1915
        %v1917 = vrot.slane %v1903, %v1916
        %v1918 = vcombine.low %v1893, %v1901
        %v1919 = vcombine.high %v1893, %v1901
        %v1921 = vunpack.c.l.s4 1934713408
        %v1922 = vunpack.c.0.s8 %v1921
        %v1923 = vlaneseq
        %v1924 = vshrl.u32 %v1923, 7
        %v1925 = vsub.s32 %v1922, %v1924
        %v1926 = vrot.slane %v1918, %v1925
        %v1928 = vunpack.c.l.s4 1934713408
        %v1929 = vunpack.c.0.s8 %v1928
        %v1930 = vlaneseq
        %v1931 = vshrl.u32 %v1930, 7
        %v1932 = vsub.s32 %v1929, %v1931
        %v1933 = vrot.slane %v1919, %v1932
        %v1934 = vcombine.low %v1910, %v1926
        %v1935 = vcombine.high %v1910, %v1926
        %v1936 = vcombine.low %v1917, %v1933
        %v1937 = vcombine.high %v1917, %v1933
        %1939 = vrot.lane.b32.xlu0 %v1935, 8
        %v1940 = vpop.permute.xlu0 %1939
        %1943 = vrot.lane.b32.xlu0 %v1936, 16
        %v1944 = vpop.permute.xlu0 %1943
        %1947 = vrot.lane.b32.xlu0 %v1937, 24
        %v1948 = vpop.permute.xlu0 %1947
        %v1950 = vsel %vm1360, %v1934, %v1940
        %vm1951 = vcmask 130048
        %v1952 = vsel %vm1951, %v1950, %v1944
        %vm1953 = vcmask 195584
        %v1954 = vsel %vm1953, %v1952, %v1948
        %v1955 = vpack.c.bf16 %v1954, %v1954
        %v1956 = vld [vmem:[%s9] sm:$0xf]
        %v1957 = vld [vmem:[%s9 + $0x4] sm:$0xf]
        %v1958 = vld [vmem:[%s9 + $0x8] sm:$0xf]
        %v1959 = vld [vmem:[%s9 + $0xc] sm:$0xf]
        %v1960 = vld [vmem:[#allocation14] sm:$0x1]
        %v1962 = vlaneseq
        %v1963 = vshrl.u32 %v1962, 7
        %v1964 = vsub.s32 0, %v1963
        %v1965 = vrot.slane %v1960, %v1964
        %v1971 = vunpack.c.l.b16 %v1956
        %v1972 = vunpack.c.l.b16 %v1957
        %v1973 = vunpack.c.l.b16 %v1958
        %v1974 = vunpack.c.l.b16 %v1959
        %v1975 = vpack.c.b16 %v1972, %v1971
        %v1976 = vpack.c.b16 %v1974, %v1973
        %v1980 = vsel %vm865, %v1955, 0
        %1982 = vmatprep.subr.bf16.mxu0 0
        %1983 = vmatpush1.bf16.msra.mxu0 %v1975
        %1984 = vmatprep.subr.bf16.mxu0 0
        %1985 = vmatpush1.bf16.msra.mxu0 %v1976
        %1986 = vmatprep.subr.bf16.mxu0 0
        %1987 = vmatpush1.bf16.msra.mxu0 0
        %1988 = vmatprep.subr.bf16.mxu0 0
        %1989 = vmatpush1.bf16.msra.mxu0 0
        %1990 = vmatprep.subr.bf16.mxu0 0
        %1991 = vmatpush1.bf16.msra.mxu0 0
        %1992 = vmatprep.subr.bf16.mxu0 0
        %1993 = vmatpush1.bf16.msra.mxu0 0
        %1994 = vmatprep.subr.bf16.mxu0 0
        %1995 = vmatpush1.bf16.msra.mxu0 0
        %1996 = vmatprep.subr.bf16.mxu0 0
        %1997 = vmatpush1.bf16.msra.mxu0 0
        %1998 = vmatprep.subr.bf16.mxu0 0
        %1999 = vmatpush1.bf16.msra.mxu0 0
        %2000 = vmatprep.subr.bf16.mxu0 0
        %2001 = vmatpush1.bf16.msra.mxu0 0
        %2002 = vmatprep.subr.bf16.mxu0 0
        %2003 = vmatpush1.bf16.msra.mxu0 0
        %2004 = vmatprep.subr.bf16.mxu0 0
        %2005 = vmatpush1.bf16.msra.mxu0 0
        %2006 = vmatprep.subr.bf16.mxu0 0
        %2007 = vmatpush1.bf16.msra.mxu0 0
        %2008 = vmatprep.subr.bf16.mxu0 0
        %2009 = vmatpush1.bf16.msra.mxu0 0
        %2010 = vmatprep.subr.bf16.mxu0 0
        %2011 = vmatpush1.bf16.msra.mxu0 0
        %2012 = vmatprep.subr.bf16.mxu0 0
        %2013 = vmatpush1.bf16.msra.mxu0 0
        %2014 = vmatprep.mubr.bf16.mxu0 0
        %2015 = vmatmul.mubr.bf16.gmra.mrb[0].mxu0 %v1980
        %v2016 = vpop.f32.mrb[0].mxu0
        %v2017 = vadd.f32 %v1965, %v2016
        %v2018 = vpop.f32.mrb[0].mxu0
        %v2019 = vpop.f32.mrb[0].mxu0
        %v2020 = vpop.f32.mrb[0].mxu0
        %2021 = vdwg.mxu0
        %v2022 = vadd.f32 %v836, %v2017
        %v2023 = vld [vmem:[#allocation16] sm:$0x1]
        %v2024 = vld [vmem:[#allocation17] sm:$0x1]
        %v2025 = vsel %vm865, %v2022, 0.0
        %2026 = vadd.xlane.f32.xlu0 %v2025
        %v2027 = vpop.xlane.xlu0 %2026
        %v2028 = vrcp.pop 32.0
        %v2029 = vmul.f32 %v2027, %v2028
        %v2030 = vsub.f32 %v2022, %v2029
        %v2031 = vmul.f32 %v2030, %v2030
        %v2032 = vsel %vm865, %v2031, 0.0
        %2033 = vadd.xlane.f32.xlu0 %v2032
        %v2034 = vpop.xlane.xlu0 %2033
        %v2035 = vmul.f32 %v2034, %v2028
        %v2036 = vadd.f32 %v2035, 1e-05
        %v2037 = vrsqrt.pop %v2036
        %v2038 = vmul.f32 %v2030, %v2037
        %v2040 = vlaneseq
        %v2041 = vshrl.u32 %v2040, 7
        %v2042 = vsub.s32 0, %v2041
        %v2043 = vrot.slane %v2023, %v2042
        %v2045 = vmul.f32 %v2038, %v2043
        %v2047 = vlaneseq
        %v2048 = vshrl.u32 %v2047, 7
        %v2049 = vsub.s32 0, %v2048
        %v2050 = vrot.slane %v2024, %v2049
        %v2052 = vadd.f32 %v2045, %v2050
        %v2053 = vpack.c.bf16 %v2052, %v2052
        %v2054 = vld [vmem:[%s13] sm:$0xf]
        %v2055 = vld [vmem:[%s13 + $0x4] sm:$0xf]
        %v2056 = vld [vmem:[%s13 + $0x8] sm:$0xf]
        %v2057 = vld [vmem:[%s13 + $0xc] sm:$0xf]
        %v2058 = vld [vmem:[%s14] sm:$0x1]
        %v2060 = vlaneseq
        %v2061 = vshrl.u32 %v2060, 7
        %v2062 = vsub.s32 0, %v2061
        %v2063 = vrot.slane %v2058, %v2062
        %v2069 = vunpack.c.l.b16 %v2054
        %v2070 = vunpack.c.l.b16 %v2055
        %v2071 = vunpack.c.l.b16 %v2056
        %v2072 = vunpack.c.l.b16 %v2057
        %v2073 = vpack.c.b16 %v2070, %v2069
        %v2074 = vpack.c.b16 %v2072, %v2071
        %v2078 = vsel %vm865, %v2053, 0
        %2080 = vmatprep.subr.bf16.mxu0 0
        %2081 = vmatpush1.bf16.msra.mxu0 %v2073
        %2082 = vmatprep.subr.bf16.mxu0 0
        %2083 = vmatpush1.bf16.msra.mxu0 %v2074
        %2084 = vmatprep.subr.bf16.mxu0 0
        %2085 = vmatpush1.bf16.msra.mxu0 0
        %2086 = vmatprep.subr.bf16.mxu0 0
        %2087 = vmatpush1.bf16.msra.mxu0 0
        %2088 = vmatprep.subr.bf16.mxu0 0
        %2089 = vmatpush1.bf16.msra.mxu0 0
        %2090 = vmatprep.subr.bf16.mxu0 0
        %2091 = vmatpush1.bf16.msra.mxu0 0
        %2092 = vmatprep.subr.bf16.mxu0 0
        %2093 = vmatpush1.bf16.msra.mxu0 0
        %2094 = vmatprep.subr.bf16.mxu0 0
        %2095 = vmatpush1.bf16.msra.mxu0 0
        %2096 = vmatprep.subr.bf16.mxu0 0
        %2097 = vmatpush1.bf16.msra.mxu0 0
        %2098 = vmatprep.subr.bf16.mxu0 0
        %2099 = vmatpush1.bf16.msra.mxu0 0
        %2100 = vmatprep.subr.bf16.mxu0 0
        %2101 = vmatpush1.bf16.msra.mxu0 0
        %2102 = vmatprep.subr.bf16.mxu0 0
        %2103 = vmatpush1.bf16.msra.mxu0 0
        %2104 = vmatprep.subr.bf16.mxu0 0
        %2105 = vmatpush1.bf16.msra.mxu0 0
        %2106 = vmatprep.subr.bf16.mxu0 0
        %2107 = vmatpush1.bf16.msra.mxu0 0
        %2108 = vmatprep.subr.bf16.mxu0 0
        %2109 = vmatpush1.bf16.msra.mxu0 0
        %2110 = vmatprep.subr.bf16.mxu0 0
        %2111 = vmatpush1.bf16.msra.mxu0 0
        %2112 = vmatprep.mubr.bf16.mxu0 0
        %2113 = vmatmul.mubr.bf16.gmra.mrb[0].mxu0 %v2078
        %v2114 = vpop.f32.mrb[0].mxu0
        %v2115 = vadd.f32 %v2063, %v2114
        %v2116 = vpop.f32.mrb[0].mxu0
        %v2117 = vpop.f32.mrb[0].mxu0
        %v2118 = vpop.f32.mrb[0].mxu0
        %2119 = vdwg.mxu0
        %v2120 = vmax.f32 %v2115, 0.0
        %v2121 = vpack.c.bf16 %v2120, %v2120
        %v2122 = vld [vmem:[%s15] sm:$0xf]
        %v2123 = vld [vmem:[%s15 + $0x4] sm:$0xf]
        %v2124 = vld [vmem:[%s15 + $0x8] sm:$0xf]
        %v2125 = vld [vmem:[%s15 + $0xc] sm:$0xf]
        %v2126 = vld [vmem:[%s15 + $0x10] sm:$0xf]
        %v2127 = vld [vmem:[%s15 + $0x14] sm:$0xf]
        %v2128 = vld [vmem:[%s15 + $0x18] sm:$0xf]
        %v2129 = vld [vmem:[%s15 + $0x1c] sm:$0xf]
        %v2130 = vld [vmem:[%s16] sm:$0x1]
        %v2132 = vlaneseq
        %v2133 = vshrl.u32 %v2132, 7
        %v2134 = vsub.s32 0, %v2133
        %v2135 = vrot.slane %v2130, %v2134
        %v2145 = vunpack.c.l.b16 %v2122
        %v2146 = vunpack.c.l.b16 %v2123
        %v2147 = vunpack.c.l.b16 %v2124
        %v2148 = vunpack.c.l.b16 %v2125
        %v2149 = vunpack.c.l.b16 %v2126
        %v2150 = vunpack.c.l.b16 %v2127
        %v2151 = vunpack.c.l.b16 %v2128
        %v2152 = vunpack.c.l.b16 %v2129
        %v2153 = vpack.c.b16 %v2146, %v2145
        %v2154 = vpack.c.b16 %v2148, %v2147
        %v2155 = vpack.c.b16 %v2150, %v2149
        %v2156 = vpack.c.b16 %v2152, %v2151
        %vm2161 = vcmask 523264
        %v2163 = vsel %vm2161, %v2121, 0
        %2165 = vmatprep.subr.bf16.mxu0 0
        %2166 = vmatpush1.bf16.msra.mxu0 %v2153
        %2167 = vmatprep.subr.bf16.mxu0 0
        %2168 = vmatpush1.bf16.msra.mxu0 %v2154
        %2169 = vmatprep.subr.bf16.mxu0 0
        %2170 = vmatpush1.bf16.msra.mxu0 %v2155
        %2171 = vmatprep.subr.bf16.mxu0 0
        %2172 = vmatpush1.bf16.msra.mxu0 %v2156
        %2173 = vmatprep.subr.bf16.mxu0 0
        %2174 = vmatpush1.bf16.msra.mxu0 0
        %2175 = vmatprep.subr.bf16.mxu0 0
        %2176 = vmatpush1.bf16.msra.mxu0 0
        %2177 = vmatprep.subr.bf16.mxu0 0
        %2178 = vmatpush1.bf16.msra.mxu0 0
        %2179 = vmatprep.subr.bf16.mxu0 0
        %2180 = vmatpush1.bf16.msra.mxu0 0
        %2181 = vmatprep.subr.bf16.mxu0 0
        %2182 = vmatpush1.bf16.msra.mxu0 0
        %2183 = vmatprep.subr.bf16.mxu0 0
        %2184 = vmatpush1.bf16.msra.mxu0 0
        %2185 = vmatprep.subr.bf16.mxu0 0
        %2186 = vmatpush1.bf16.msra.mxu0 0
        %2187 = vmatprep.subr.bf16.mxu0 0
        %2188 = vmatpush1.bf16.msra.mxu0 0
        %2189 = vmatprep.subr.bf16.mxu0 0
        %2190 = vmatpush1.bf16.msra.mxu0 0
        %2191 = vmatprep.subr.bf16.mxu0 0
        %2192 = vmatpush1.bf16.msra.mxu0 0
        %2193 = vmatprep.subr.bf16.mxu0 0
        %2194 = vmatpush1.bf16.msra.mxu0 0
        %2195 = vmatprep.subr.bf16.mxu0 0
        %2196 = vmatpush1.bf16.msra.mxu0 0
        %2197 = vmatprep.mubr.bf16.mxu0 0
        %2198 = vmatmul.mubr.bf16.gmra.mrb[0].mxu0 %v2163
        %v2199 = vpop.f32.mrb[0].mxu0
        %v2200 = vadd.f32 %v2135, %v2199
        %v2201 = vpop.f32.mrb[0].mxu0
        %v2202 = vpop.f32.mrb[0].mxu0
        %v2203 = vpop.f32.mrb[0].mxu0
        %2204 = vdwg.mxu0
        %v2205 = vadd.f32 %v2022, %v2200
        %2206 = vst.msk [vmem:[%s656] sm:$0xff] %vm865, %v2205
        %s2207 = sand.u32 %s420, 1
        %s2208 = scalar_lea.sflag [#allocation7], %s2207
        %s2209 = sand.u32 %s420, 1
        %s2210 = smul.addr %s2209, 8
        %s2211 = scalar_lea.vmem [#allocation19], %s2210
        // Predicated region
        $region125: #{tpu_custom_call.1} parent=87 // pred_check
          %p2212 = pneg %p430
        $region126: #{tpu_custom_call.1} parent=87 // pred_check_branch
          %2214 = sbr.rel (%p2212) target = $region128
        $region127: #{tpu_custom_call.1} parent=87 // pred_region
          %s2216 = ssub.s32 128, 128
          %2217 = vsyncadd %s2208, %s2216
          %s2218 = sadd.s32 %s41, %s40
          %s2219 = smul.addr %s2218, 128
          %s2220 = scalar_lea.hbm %s17, %s2219
          %s2222 = sshll.u32 %s2211, 4
          %s2223 = int_to_ptr.vmem [resolvable:$true] %s2222
          %2225 = dma.vmem_to_hbm [thread:$0]  %s2223, 128, %s2220, %s2208
        $region128: #{tpu_custom_call.1} parent=87 // pred_fallthru
          _
      $region88: #{tpu_custom_call.1} parent=5 // pred_fallthru
        _
      %p2226 = scmp.le.s32.totalorder 2, %s31
      // Predicated region
      $region129: #{tpu_custom_call.1} parent=5 // pred_check
        %p2227 = pneg %p2226
      $region130: #{tpu_custom_call.1} parent=5 // pred_check_branch
        %2229 = sbr.rel (%p2227) target = $region132
      $region131: #{tpu_custom_call.1} parent=5 // pred_region
        %s2230 = ssub.s32 %s31, 2
        // Predicated region
        $region133: #{tpu_custom_call.1} parent=131 // pred_check
          %p2231 = pneg %p436
        $region134: #{tpu_custom_call.1} parent=131 // pred_check_branch
          %2233 = sbr.rel (%p2231) target = $region136
        $region135: #{tpu_custom_call.1} parent=131 // pred_region
          %s2234 = sand.u32 %s421, 1
          %s2235 = scalar_lea.sflag [#allocation7], %s2234
          %s2236 = sand.u32 %s421, 1
          %s2237 = smul.addr %s2236, 8
          %s2238 = scalar_lea.vmem [#allocation19], %s2237
          %2239 = dma.done %s2235, 128
        $region136: #{tpu_custom_call.1} parent=131 // pred_fallthru
          _
      $region132: #{tpu_custom_call.1} parent=5 // pred_fallthru
        _
    $region6: #{tpu_custom_call.1} parent=1 // loop_footer
      %s35 = sadd.s32 1, %s31
    $region7: #{tpu_custom_call.1} parent=1 // loop_footer_branch
      %30 = sbr.rel target = $region3
    $region8: #{tpu_custom_call.1} parent=1 // loop_exit
      _
    %2240 = vsyncpa [#allocation6], 1
    %s2241 = scalar_lea.sflag [#allocation6], 1
    %2242 = vsyncpa %s2241, 1
    %2243 = vsyncpa [#allocation9], 1
    %2244 = vsyncpa [#allocation12], 1
    %2245 = vsyncpa [#allocation15], 1
    %2246 = vsyncpa [#allocation18], 1
    %2247 = vsyncpa [#allocation7], 1
    %s2248 = scalar_lea.sflag [#allocation7], 1
    %2249 = vsyncpa %s2248, 1

</llo_original>
